<compile_context>
chip_gen: v5e
topology: v5e:2x2
jax: 0.10.0
libtpu: 0.0.40
codegen_flags: <defaults>
</compile_context>

<pallas_src>
import functools

import jax
import jax.numpy as jnp
import numpy as np
from jax.experimental import pallas as pl
from jax.experimental.pallas import tpu as pltpu

LANE = 128
EPS = 1e-5


def _round_up(x, m):
    return (x + m - 1) // m * m


def _fold_bn(w, bn, eps=EPS):
    """Fold eval-mode BatchNorm into conv weight (last dim = Cout) + bias."""
    scale = bn["gamma"] / jnp.sqrt(bn["var"] + eps)
    return w * scale, bn["beta"] - bn["mean"] * scale


# ---------------------------------------------------------------------------
# Fused BasicBlock kernel: conv1+BN1+ReLU -> conv2+BN2 -> (+shortcut) -> ReLU
# ---------------------------------------------------------------------------
def _basic_block_kernel(xrp_ref, w1_ref, b1_ref, w2_ref, o_ref, *,
                        stride, hout, wout, k1p, cmid_p, cout_p):
    """One grid step == one image.  All accumulation is in register values."""
    f32 = jnp.float32
    hw = hout * wout
    k2 = 3 * cmid_p

    # ---- conv1 (+BN1) and the fused shortcut matmul: ONE MXU dot.
    # xrp_ref[p, j, x, dx*Cin + c] == xpad[stride*j + p, stride*x + dx, c];
    # tap (dy, dx) lives in row-phase p = dy % stride at row offset dy//stride.
    slabs = []
    for dy in range(3):
        p, o = dy % stride, dy // stride
        slabs.append(xrp_ref[p, o:o + hout, :, :].reshape(hw, k1p))
    xcat = jnp.concatenate(slabs, axis=-1)                     # (hw, 3*k1p)
    acc1 = jnp.dot(xcat, w1_ref[...],
                   preferred_element_type=f32) + b1_ref[...]   # (hw, nw)

    h = jnp.maximum(acc1[:, :cmid_p], 0.0)     # ReLU(BN1(conv1(x)))
    sc = acc1[:, cmid_p:]                      # shortcut(x) + folded BN2 bias

    # ---- conv2 (+BN2 scale; bias already inside `sc`): 3x3, stride 1, pad 1.
    # Column (dx) shifts built once from values (2 sublane repacks total);
    # row (dy) shifts are free leading-dim slices; 3-dot chain accumulates.
    h3 = h.reshape(hout, wout, cmid_p)
    zcol = jnp.zeros((hout, 1, cmid_p), f32)
    left = jnp.concatenate([zcol, h3[:, :wout - 1, :]], axis=1)   # h[y, x-1]
    right = jnp.concatenate([h3[:, 1:, :], zcol], axis=1)         # h[y, x+1]
    hcat = jnp.concatenate([left, h3, right], axis=-1)            # (hout, wout, 3*cmid_p)
    zrow = jnp.zeros((1, wout, k2), f32)
    hcat = jnp.concatenate([zrow, hcat, zrow], axis=0)            # (hout+2, wout, k2)

    acc2 = sc
    for dy in range(3):
        acc2 = acc2 + jnp.dot(hcat[dy:dy + hout].reshape(hw, k2), w2_ref[dy],
                              preferred_element_type=f32)

    out = jnp.maximum(acc2, 0.0)
    o_ref[...] = out.reshape(hout, wout, cout_p).astype(o_ref.dtype)


# ---------------------------------------------------------------------------
# Wrapper-side data prep (XLA glue, runs once per call)
# ---------------------------------------------------------------------------
def _build_xrp(x_nhwc, stride, k1p):
    """Row-phase + column(dx)-concatenated view of the spatially padded input.

    xrp[n, p, j, x, dx*Cin + c] = xpad[n, s*j + p, s*x + dx, c]  (zero outside),
    so every conv1 tap is a static, aligned leading-dim slice in the kernel.
    """
    n, h, w, cin = x_nhwc.shape
    s = stride
    hout = (h - 1) // s + 1
    wout = (w - 1) // s + 1
    xpad = jnp.pad(x_nhwc, ((0, 0), (1, 1), (1, 1), (0, 0)))

    need_cols = s * (wout - 1) + 3
    if need_cols > w + 2:
        xpad = jnp.pad(xpad, ((0, 0), (0, 0), (0, need_cols - (w + 2)), (0, 0)))
    cols = [xpad[:, :, dx::s, :][:, :, :wout, :] for dx in range(3)]
    xcols = jnp.concatenate(cols, axis=-1)                    # (n, h+2, wout, 3*cin)
    xcols = jnp.pad(xcols, ((0, 0), (0, 0), (0, 0), (0, k1p - 3 * cin)))

    hq = hout + 2 // s                                        # rows per phase
    need_rows = s * hq
    if need_rows > xcols.shape[1]:
        xcols = jnp.pad(xcols, ((0, 0), (0, need_rows - xcols.shape[1]),
                                (0, 0), (0, 0)))
    xrp = jnp.stack([xcols[:, p::s, :, :][:, :hq, :, :] for p in range(s)],
                    axis=1)                                    # (n, s, hq, wout, k1p)
    return xrp, hout, wout, hq


def _prep_weights(params, cin):
    """Fold BN, concatenate 3x3 taps along K, and fold the shortcut
    (identity or 1x1-proj+BN) plus BN2's bias into extra conv1 output columns."""
    planes = params["conv1_w"].shape[-1]
    cmid_p = _round_up(planes, LANE)
    cout_p = cmid_p
    k1p = _round_up(3 * cin, LANE)
    nw = cmid_p + cout_p

    w1f, b1f = _fold_bn(params["conv1_w"], params["bn1"])      # (3,3,cin,planes)
    w2f, b2f = _fold_bn(params["conv2_w"], params["bn2"])      # (3,3,planes,planes)
    if "sc_w" in params:
        scw, scb = _fold_bn(params["sc_w"], params["sc_bn"])   # (cin, planes)
    else:
        assert cin == planes
        scw = jnp.eye(planes, dtype=jnp.float32)               # identity shortcut
        scb = jnp.zeros((planes,), jnp.float32)

    w1ext = jnp.zeros((3, k1p, nw), jnp.float32)
    w1ext = w1ext.at[:, :3 * cin, :planes].set(
        w1f.reshape(3, 3 * cin, planes).astype(jnp.float32))
    # Shortcut == a "1x1 conv" reading tap (dy=1, dx=1) == x[s*y, s*x, :].
    w1ext = w1ext.at[1, cin:2 * cin, cmid_p:cmid_p + planes].set(
        scw.astype(jnp.float32))
    w1ext = w1ext.reshape(3 * k1p, nw)

    b1ext = jnp.zeros((1, nw), jnp.float32)
    b1ext = b1ext.at[0, :planes].set(b1f)
    b1ext = b1ext.at[0, cmid_p:cmid_p + planes].set(scb + b2f)  # BN2 bias here

    w2cat = jnp.zeros((3, 3 * cmid_p, cout_p), jnp.float32)
    for dx in range(3):
        w2cat = w2cat.at[:, dx * cmid_p:dx * cmid_p + planes, :planes].set(
            w2f[:, dx].astype(jnp.float32))
    return w1ext, b1ext, w2cat, cmid_p, cout_p, k1p


def basic_block_fused_nhwc(x_nhwc, params):
    """x_nhwc: (N, H, W, Cin) f32 -> (N, Hout, Wout, Cout_p) f32, where the
    real `planes` channels sit in the first lanes and the padding is zero."""
    n, h, w, cin = x_nhwc.shape
    stride = params["stride"]
    w1ext, b1ext, w2cat, cmid_p, cout_p, k1p = _prep_weights(params, cin)
    xrp, hout, wout, hq = _build_xrp(x_nhwc.astype(jnp.float32), stride, k1p)
    n_phase = stride
    nw = w1ext.shape[-1]
    k2 = w2cat.shape[1]

    kernel = functools.partial(
        _basic_block_kernel, stride=stride, hout=hout, wout=wout,
        k1p=k1p, cmid_p=cmid_p, cout_p=cout_p)

    hw = hout * wout
    flops = 2 * n * hw * (3 * k1p * nw + 3 * k2 * cout_p)
    bytes_accessed = 4 * (xrp.size + w1ext.size + b1ext.size + w2cat.size
                          + n * hw * cout_p)

    return pl.pallas_call(
        kernel,
        out_shape=jax.ShapeDtypeStruct((n, hout, wout, cout_p), jnp.float32),
        grid=(n,),
        in_specs=[
            pl.BlockSpec((None, n_phase, hq, wout, k1p),
                         lambda i: (i, 0, 0, 0, 0)),
            pl.BlockSpec((3 * k1p, nw), lambda i: (0, 0)),      # grid-invariant
            pl.BlockSpec((1, nw), lambda i: (0, 0)),            # grid-invariant
            pl.BlockSpec((3, k2, cout_p), lambda i: (0, 0, 0)),  # grid-invariant
        ],
        out_specs=pl.BlockSpec((None, hout, wout, cout_p),
                               lambda i: (i, 0, 0, 0)),
        compiler_params=pltpu.CompilerParams(
            dimension_semantics=("parallel",)),
        cost_estimate=pl.CostEstimate(flops=flops, transcendentals=0,
                                      bytes_accessed=bytes_accessed),
    )(xrp, w1ext, b1ext, w2cat)


# ---------------------------------------------------------------------------
# BasicBlock forward (matches the PyTorch module's (out, output_list) API)
# ---------------------------------------------------------------------------
def basic_block_forward(x, params):
    if isinstance(x, tuple):
        x, output_list = x
    else:
        output_list = []
    planes = params["conv1_w"].shape[-1]
    x_nhwc = jnp.transpose(x, (0, 2, 3, 1)).astype(jnp.float32)   # NCHW->NHWC
    out_p = basic_block_fused_nhwc(x_nhwc, params)                # one pallas_call
    out = jnp.transpose(out_p[..., :planes], (0, 3, 1, 2))        # NHWC->NCHW
    output_list.append(out)
    return out, output_list


# ---------------------------------------------------------------------------
# Pure-JAX reference (XLA convs, highest precision) for numerical sanity
# ---------------------------------------------------------------------------
def basic_block_ref(x_nchw, params):
    def conv(x, w, s, pad):
        return jax.lax.conv_general_dilated(
            x, w, (s, s), ((pad, pad), (pad, pad)),
            dimension_numbers=("NHWC", "HWIO", "NHWC"),
            precision=jax.lax.Precision.HIGHEST)

    def bn(x, p):
        sc = p["gamma"] / jnp.sqrt(p["var"] + EPS)
        return x * sc + (p["beta"] - p["mean"] * sc)

    x = jnp.transpose(x_nchw, (0, 2, 3, 1))
    h = jax.nn.relu(bn(conv(x, params["conv1_w"], params["stride"], 1),
                       params["bn1"]))
    o = bn(conv(h, params["conv2_w"], 1, 1), params["bn2"])
    if "sc_w" in params:
        sc = bn(conv(x, params["sc_w"][None, None], params["stride"], 0),
                params["sc_bn"])
    else:
        sc = x
    return jnp.transpose(jax.nn.relu(o + sc), (0, 3, 1, 2))


# ---------------------------------------------------------------------------
# Deterministic parameter init (shapes follow BasicBlock.__init__)
# ---------------------------------------------------------------------------
def init_basic_block_params(key, in_planes, planes, stride):
    def bn_init(k, c):
        k1, k2, k3, k4 = jax.random.split(k, 4)
        return dict(gamma=jax.random.uniform(k1, (c,), jnp.float32, 0.5, 1.5),
                    beta=jax.random.uniform(k2, (c,), jnp.float32, -0.1, 0.1),
                    mean=jax.random.uniform(k3, (c,), jnp.float32, -0.1, 0.1),
                    var=jax.random.uniform(k4, (c,), jnp.float32, 0.5, 1.5))

    ks = jax.random.split(key, 6)
    s1 = 1.0 / (3.0 * float(np.sqrt(in_planes)))
    s2 = 1.0 / (3.0 * float(np.sqrt(planes)))
    p = dict(
        stride=stride,
        conv1_w=jax.random.uniform(ks[0], (3, 3, in_planes, planes),
                                   jnp.float32, -s1, s1),
        bn1=bn_init(ks[1], planes),
        conv2_w=jax.random.uniform(ks[2], (3, 3, planes, planes),
                                   jnp.float32, -s2, s2),
        bn2=bn_init(ks[3], planes),
    )
    if stride != 1 or in_planes != planes:
        s3 = 1.0 / float(np.sqrt(in_planes))
        p["sc_w"] = jax.random.uniform(ks[4], (in_planes, planes),
                                       jnp.float32, -s3, s3)
        p["sc_bn"] = bn_init(ks[5], planes)
    return p


if __name__ == "__main__":
    key = jax.random.PRNGKey(0)
    kx, k1, k2 = jax.random.split(key, 3)
    N, C, H, W = 2, 16, 16, 16
    x = jax.random.normal(kx, (N, C, H, W), jnp.float32)

    params1 = init_basic_block_params(k1, in_planes=C, planes=C, stride=1)      # identity shortcut
    params2 = init_basic_block_params(k2, in_planes=C, planes=2 * C, stride=2)  # 1x1-proj shortcut

    @jax.jit
    def run(x):
        y1, outs = basic_block_forward(x, params1)
        y2, outs = basic_block_forward((y1, outs), params2)
        return y2, outs

    y2, outs = run(x)
    jax.block_until_ready((y2, outs))

    assert y2.shape == (N, 2 * C, H // 2, W // 2), y2.shape
    assert len(outs) == 2 and outs[0].shape == (N, C, H, W)
    assert bool(jnp.all(jnp.isfinite(y2)))

    r1 = basic_block_ref(x, params1)
    r2 = basic_block_ref(r1, params2)
    # All-f32 path against a highest-precision XLA reference; tolerance kept
    # with a small margin for MXU pass/summation-order differences.
    np.testing.assert_allclose(np.asarray(outs[0]), np.asarray(r1),
                               rtol=2e-3, atol=2e-3)
    np.testing.assert_allclose(np.asarray(y2), np.asarray(r2),
                               rtol=2e-3, atol=2e-3)

    print("KERNEL_OK")
</pallas_src>

<mosaic_0001>
module attributes {stable_mosaic.version = 11 : i64} {
  func.func @_basic_block_kernel(%arg0: i32, %arg1: memref<1x1x18x16x128xf32, #tpu.memory_space<vmem>>, %arg2: memref<384x256xf32, #tpu.memory_space<vmem>>, %arg3: memref<1x256xf32, #tpu.memory_space<vmem>>, %arg4: memref<3x384x128xf32, #tpu.memory_space<vmem>>, %arg5: memref<1x16x16x128xf32, #tpu.memory_space<vmem>>) attributes {dimension_semantics = [#tpu.dimension_semantics<parallel>], iteration_bounds = array<i64: 2>, scalar_prefetch = 0 : i64, scratch_operands = 0 : i64, tpu.core_type = #tpu.core_type<tc>, window_params = [{transform_indices = @transform_0, window_bounds = array<i64: 1, 1, 18, 16, 128>}, {pipeline_mode = #tpu.pipeline_mode<synchronous>, transform_indices = @transform_1, window_bounds = array<i64: 384, 256>}, {pipeline_mode = #tpu.pipeline_mode<synchronous>, transform_indices = @transform_2, window_bounds = array<i64: 1, 256>}, {pipeline_mode = #tpu.pipeline_mode<synchronous>, transform_indices = @transform_3, window_bounds = array<i64: 3, 384, 128>}, {transform_indices = @transform_4, window_bounds = array<i64: 1, 16, 16, 128>}]} {
    %c0 = arith.constant 0 : index
    %c0_0 = arith.constant 0 : index
    %c0_1 = arith.constant 0 : index
    %c0_2 = arith.constant 0 : index
    %c0_3 = arith.constant 0 : index
    %0 = vector.load %arg1[%c0, %c0_0, %c0_1, %c0_2, %c0_3] : memref<1x1x18x16x128xf32, #tpu.memory_space<vmem>>, vector<1x1x16x16x128xf32>
    %1 = vector.shape_cast %0 : vector<1x1x16x16x128xf32> to vector<16x16x128xf32>
    %2 = vector.shape_cast %1 : vector<16x16x128xf32> to vector<256x128xf32>
    %c0_4 = arith.constant 0 : index
    %c0_5 = arith.constant 0 : index
    %c1 = arith.constant 1 : index
    %c0_6 = arith.constant 0 : index
    %c0_7 = arith.constant 0 : index
    %3 = vector.load %arg1[%c0_4, %c0_5, %c1, %c0_6, %c0_7] : memref<1x1x18x16x128xf32, #tpu.memory_space<vmem>>, vector<1x1x16x16x128xf32>
    %4 = vector.shape_cast %3 : vector<1x1x16x16x128xf32> to vector<16x16x128xf32>
    %5 = vector.shape_cast %4 : vector<16x16x128xf32> to vector<256x128xf32>
    %c0_8 = arith.constant 0 : index
    %c0_9 = arith.constant 0 : index
    %c2 = arith.constant 2 : index
    %c0_10 = arith.constant 0 : index
    %c0_11 = arith.constant 0 : index
    %6 = vector.load %arg1[%c0_8, %c0_9, %c2, %c0_10, %c0_11] : memref<1x1x18x16x128xf32, #tpu.memory_space<vmem>>, vector<1x1x16x16x128xf32>
    %7 = vector.shape_cast %6 : vector<1x1x16x16x128xf32> to vector<16x16x128xf32>
    %8 = vector.shape_cast %7 : vector<16x16x128xf32> to vector<256x128xf32>
    %9 = tpu.concatenate %2, %5, %8 in 1 : vector<256x128xf32>, vector<256x128xf32>, vector<256x128xf32> -> vector<256x384xf32>
    %c0_12 = arith.constant 0 : index
    %c0_13 = arith.constant 0 : index
    %10 = vector.load %arg2[%c0_12, %c0_13] : memref<384x256xf32, #tpu.memory_space<vmem>>, vector<384x256xf32>
    %cst = arith.constant dense<0.000000e+00> : vector<256x256xf32>
    %11 = tpu.matmul %9, %10, %cst {dimension_numbers = #tpu.dot_dimension_numbers<[1], [0], [0], [1], [0, 0, 1, 1], [], []>} : vector<256x384xf32>, vector<384x256xf32>, vector<256x256xf32> -> vector<256x256xf32>
    %c0_14 = arith.constant 0 : index
    %c0_15 = arith.constant 0 : index
    %12 = vector.load %arg3[%c0_14, %c0_15] : memref<1x256xf32, #tpu.memory_space<vmem>>, vector<1x256xf32>
    %13 = vector.broadcast %12 : vector<1x256xf32> to vector<256x256xf32>
    %14 = arith.addf %11, %13 : vector<256x256xf32>
    %15 = vector.extract_strided_slice %14 {offsets = [0, 0], sizes = [256, 128], strides = [1, 1]} : vector<256x256xf32> to vector<256x128xf32>
    %cst_16 = arith.constant 0.000000e+00 : f32
    %16 = vector.broadcast %cst_16 : f32 to vector<256x128xf32>
    %17 = arith.maximumf %15, %16 : vector<256x128xf32>
    %18 = vector.extract_strided_slice %14 {offsets = [0, 128], sizes = [256, 128], strides = [1, 1]} : vector<256x256xf32> to vector<256x128xf32>
    %19 = vector.shape_cast %17 : vector<256x128xf32> to vector<16x16x128xf32>
    %cst_17 = arith.constant 0.000000e+00 : f32
    %20 = vector.broadcast %cst_17 : f32 to vector<16x1x128xf32>
    %21 = vector.extract_strided_slice %19 {offsets = [0, 0, 0], sizes = [16, 15, 128], strides = [1, 1, 1]} : vector<16x16x128xf32> to vector<16x15x128xf32>
    %22 = tpu.concatenate %20, %21 in 1 : vector<16x1x128xf32>, vector<16x15x128xf32> -> vector<16x16x128xf32>
    %23 = vector.extract_strided_slice %19 {offsets = [0, 1, 0], sizes = [16, 15, 128], strides = [1, 1, 1]} : vector<16x16x128xf32> to vector<16x15x128xf32>
    %24 = tpu.concatenate %23, %20 in 1 : vector<16x15x128xf32>, vector<16x1x128xf32> -> vector<16x16x128xf32>
    %25 = tpu.concatenate %22, %19, %24 in 2 : vector<16x16x128xf32>, vector<16x16x128xf32>, vector<16x16x128xf32> -> vector<16x16x384xf32>
    %cst_18 = arith.constant 0.000000e+00 : f32
    %26 = vector.broadcast %cst_18 : f32 to vector<1x16x384xf32>
    %27 = tpu.concatenate %26, %25, %26 in 0 : vector<1x16x384xf32>, vector<16x16x384xf32>, vector<1x16x384xf32> -> vector<18x16x384xf32>
    %28 = vector.extract_strided_slice %27 {offsets = [0, 0, 0], sizes = [16, 16, 384], strides = [1, 1, 1]} : vector<18x16x384xf32> to vector<16x16x384xf32>
    %29 = vector.shape_cast %28 : vector<16x16x384xf32> to vector<256x384xf32>
    %c0_19 = arith.constant 0 : index
    %c0_20 = arith.constant 0 : index
    %c0_21 = arith.constant 0 : index
    %30 = vector.load %arg4[%c0_19, %c0_20, %c0_21] : memref<3x384x128xf32, #tpu.memory_space<vmem>>, vector<1x384x128xf32>
    %31 = vector.shape_cast %30 : vector<1x384x128xf32> to vector<384x128xf32>
    %cst_22 = arith.constant dense<0.000000e+00> : vector<256x128xf32>
    %32 = tpu.matmul %29, %31, %cst_22 {dimension_numbers = #tpu.dot_dimension_numbers<[1], [0], [0], [1], [0, 0, 1, 1], [], []>} : vector<256x384xf32>, vector<384x128xf32>, vector<256x128xf32> -> vector<256x128xf32>
    %33 = arith.addf %18, %32 : vector<256x128xf32>
    %34 = vector.extract_strided_slice %27 {offsets = [1, 0, 0], sizes = [16, 16, 384], strides = [1, 1, 1]} : vector<18x16x384xf32> to vector<16x16x384xf32>
    %35 = vector.shape_cast %34 : vector<16x16x384xf32> to vector<256x384xf32>
    %c1_23 = arith.constant 1 : index
    %c0_24 = arith.constant 0 : index
    %c0_25 = arith.constant 0 : index
    %36 = vector.load %arg4[%c1_23, %c0_24, %c0_25] : memref<3x384x128xf32, #tpu.memory_space<vmem>>, vector<1x384x128xf32>
    %37 = vector.shape_cast %36 : vector<1x384x128xf32> to vector<384x128xf32>
    %cst_26 = arith.constant dense<0.000000e+00> : vector<256x128xf32>
    %38 = tpu.matmul %35, %37, %cst_26 {dimension_numbers = #tpu.dot_dimension_numbers<[1], [0], [0], [1], [0, 0, 1, 1], [], []>} : vector<256x384xf32>, vector<384x128xf32>, vector<256x128xf32> -> vector<256x128xf32>
    %39 = arith.addf %33, %38 : vector<256x128xf32>
    %40 = vector.extract_strided_slice %27 {offsets = [2, 0, 0], sizes = [16, 16, 384], strides = [1, 1, 1]} : vector<18x16x384xf32> to vector<16x16x384xf32>
    %41 = vector.shape_cast %40 : vector<16x16x384xf32> to vector<256x384xf32>
    %c2_27 = arith.constant 2 : index
    %c0_28 = arith.constant 0 : index
    %c0_29 = arith.constant 0 : index
    %42 = vector.load %arg4[%c2_27, %c0_28, %c0_29] : memref<3x384x128xf32, #tpu.memory_space<vmem>>, vector<1x384x128xf32>
    %43 = vector.shape_cast %42 : vector<1x384x128xf32> to vector<384x128xf32>
    %cst_30 = arith.constant dense<0.000000e+00> : vector<256x128xf32>
    %44 = tpu.matmul %41, %43, %cst_30 {dimension_numbers = #tpu.dot_dimension_numbers<[1], [0], [0], [1], [0, 0, 1, 1], [], []>} : vector<256x384xf32>, vector<384x128xf32>, vector<256x128xf32> -> vector<256x128xf32>
    %45 = arith.addf %39, %44 : vector<256x128xf32>
    %cst_31 = arith.constant 0.000000e+00 : f32
    %46 = vector.broadcast %cst_31 : f32 to vector<256x128xf32>
    %47 = arith.maximumf %45, %46 : vector<256x128xf32>
    %48 = vector.shape_cast %47 : vector<256x128xf32> to vector<16x16x128xf32>
    %c0_32 = arith.constant 0 : index
    %c0_33 = arith.constant 0 : index
    %c0_34 = arith.constant 0 : index
    %c0_35 = arith.constant 0 : index
    %49 = vector.load %arg5[%c0_32, %c0_33, %c0_34, %c0_35] : memref<1x16x16x128xf32, #tpu.memory_space<vmem>>, vector<1x16x16x128xf32>
    %50 = vector.shape_cast %49 : vector<1x16x16x128xf32> to vector<16x16x128xf32>
    %51 = vector.shape_cast %48 : vector<16x16x128xf32> to vector<1x16x16x128xf32>
    tpu.vector_store %arg5[%c0_32, %c0_33, %c0_34, %c0_35], %51 {strides = array<i32>} : memref<1x16x16x128xf32, #tpu.memory_space<vmem>>, vector<1x16x16x128xf32>,
    return
  }
  func.func @transform_0(%arg0: i32) -> (i32, i32, i32, i32, i32) {
    %c0_i32 = arith.constant 0 : i32
    %c0_i32_0 = arith.constant 0 : i32
    %c0_i32_1 = arith.constant 0 : i32
    %c0_i32_2 = arith.constant 0 : i32
    %c0_i32_3 = arith.constant 0 : i32
    return %arg0, %c0_i32, %c0_i32_0, %c0_i32_1, %c0_i32_2 : i32, i32, i32, i32, i32
  }
  func.func @transform_1(%arg0: i32) -> (i32, i32) {
    %c0_i32 = arith.constant 0 : i32
    %c0_i32_0 = arith.constant 0 : i32
    %c0_i32_1 = arith.constant 0 : i32
    return %c0_i32, %c0_i32_0 : i32, i32
  }
  func.func @transform_2(%arg0: i32) -> (i32, i32) {
    %c0_i32 = arith.constant 0 : i32
    %c0_i32_0 = arith.constant 0 : i32
    %c0_i32_1 = arith.constant 0 : i32
    return %c0_i32, %c0_i32_0 : i32, i32
  }
  func.func @transform_3(%arg0: i32) -> (i32, i32, i32) {
    %c0_i32 = arith.constant 0 : i32
    %c0_i32_0 = arith.constant 0 : i32
    %c0_i32_1 = arith.constant 0 : i32
    %c0_i32_2 = arith.constant 0 : i32
    return %c0_i32, %c0_i32_0, %c0_i32_1 : i32, i32, i32
  }
  func.func @transform_4(%arg0: i32) -> (i32, i32, i32, i32) {
    %c0_i32 = arith.constant 0 : i32
    %c0_i32_0 = arith.constant 0 : i32
    %c0_i32_1 = arith.constant 0 : i32
    %c0_i32_2 = arith.constant 0 : i32
    return %arg0, %c0_i32, %c0_i32_0, %c0_i32_1 : i32, i32, i32, i32
  }
}

module attributes {stable_mosaic.version = 11 : i64} {
  func.func @_basic_block_kernel(%arg0: i32, %arg1: memref<1x2x9x8x128xf32, #tpu.memory_space<vmem>>, %arg2: memref<384x256xf32, #tpu.memory_space<vmem>>, %arg3: memref<1x256xf32, #tpu.memory_space<vmem>>, %arg4: memref<3x384x128xf32, #tpu.memory_space<vmem>>, %arg5: memref<1x8x8x128xf32, #tpu.memory_space<vmem>>) attributes {dimension_semantics = [#tpu.dimension_semantics<parallel>], iteration_bounds = array<i64: 2>, scalar_prefetch = 0 : i64, scratch_operands = 0 : i64, tpu.core_type = #tpu.core_type<tc>, window_params = [{transform_indices = @transform_0, window_bounds = array<i64: 1, 2, 9, 8, 128>}, {pipeline_mode = #tpu.pipeline_mode<synchronous>, transform_indices = @transform_1, window_bounds = array<i64: 384, 256>}, {pipeline_mode = #tpu.pipeline_mode<synchronous>, transform_indices = @transform_2, window_bounds = array<i64: 1, 256>}, {pipeline_mode = #tpu.pipeline_mode<synchronous>, transform_indices = @transform_3, window_bounds = array<i64: 3, 384, 128>}, {transform_indices = @transform_4, window_bounds = array<i64: 1, 8, 8, 128>}]} {
    %c0 = arith.constant 0 : index
    %c0_0 = arith.constant 0 : index
    %c0_1 = arith.constant 0 : index
    %c0_2 = arith.constant 0 : index
    %c0_3 = arith.constant 0 : index
    %0 = vector.load %arg1[%c0, %c0_0, %c0_1, %c0_2, %c0_3] : memref<1x2x9x8x128xf32, #tpu.memory_space<vmem>>, vector<1x1x8x8x128xf32>
    %1 = vector.shape_cast %0 : vector<1x1x8x8x128xf32> to vector<8x8x128xf32>
    %2 = vector.shape_cast %1 : vector<8x8x128xf32> to vector<64x128xf32>
    %c0_4 = arith.constant 0 : index
    %c1 = arith.constant 1 : index
    %c0_5 = arith.constant 0 : index
    %c0_6 = arith.constant 0 : index
    %c0_7 = arith.constant 0 : index
    %3 = vector.load %arg1[%c0_4, %c1, %c0_5, %c0_6, %c0_7] : memref<1x2x9x8x128xf32, #tpu.memory_space<vmem>>, vector<1x1x8x8x128xf32>
    %4 = vector.shape_cast %3 : vector<1x1x8x8x128xf32> to vector<8x8x128xf32>
    %5 = vector.shape_cast %4 : vector<8x8x128xf32> to vector<64x128xf32>
    %c0_8 = arith.constant 0 : index
    %c0_9 = arith.constant 0 : index
    %c1_10 = arith.constant 1 : index
    %c0_11 = arith.constant 0 : index
    %c0_12 = arith.constant 0 : index
    %6 = vector.load %arg1[%c0_8, %c0_9, %c1_10, %c0_11, %c0_12] : memref<1x2x9x8x128xf32, #tpu.memory_space<vmem>>, vector<1x1x8x8x128xf32>
    %7 = vector.shape_cast %6 : vector<1x1x8x8x128xf32> to vector<8x8x128xf32>
    %8 = vector.shape_cast %7 : vector<8x8x128xf32> to vector<64x128xf32>
    %9 = tpu.concatenate %2, %5, %8 in 1 : vector<64x128xf32>, vector<64x128xf32>, vector<64x128xf32> -> vector<64x384xf32>
    %c0_13 = arith.constant 0 : index
    %c0_14 = arith.constant 0 : index
    %10 = vector.load %arg2[%c0_13, %c0_14] : memref<384x256xf32, #tpu.memory_space<vmem>>, vector<384x256xf32>
    %cst = arith.constant dense<0.000000e+00> : vector<64x256xf32>
    %11 = tpu.matmul %9, %10, %cst {dimension_numbers = #tpu.dot_dimension_numbers<[1], [0], [0], [1], [0, 0, 1, 1], [], []>} : vector<64x384xf32>, vector<384x256xf32>, vector<64x256xf32> -> vector<64x256xf32>
    %c0_15 = arith.constant 0 : index
    %c0_16 = arith.constant 0 : index
    %12 = vector.load %arg3[%c0_15, %c0_16] : memref<1x256xf32, #tpu.memory_space<vmem>>, vector<1x256xf32>
    %13 = vector.broadcast %12 : vector<1x256xf32> to vector<64x256xf32>
    %14 = arith.addf %11, %13 : vector<64x256xf32>
    %15 = vector.extract_strided_slice %14 {offsets = [0, 0], sizes = [64, 128], strides = [1, 1]} : vector<64x256xf32> to vector<64x128xf32>
    %cst_17 = arith.constant 0.000000e+00 : f32
    %16 = vector.broadcast %cst_17 : f32 to vector<64x128xf32>
    %17 = arith.maximumf %15, %16 : vector<64x128xf32>
    %18 = vector.extract_strided_slice %14 {offsets = [0, 128], sizes = [64, 128], strides = [1, 1]} : vector<64x256xf32> to vector<64x128xf32>
    %19 = vector.shape_cast %17 : vector<64x128xf32> to vector<8x8x128xf32>
    %cst_18 = arith.constant 0.000000e+00 : f32
    %20 = vector.broadcast %cst_18 : f32 to vector<8x1x128xf32>
    %21 = vector.extract_strided_slice %19 {offsets = [0, 0, 0], sizes = [8, 7, 128], strides = [1, 1, 1]} : vector<8x8x128xf32> to vector<8x7x128xf32>
    %22 = tpu.concatenate %20, %21 in 1 : vector<8x1x128xf32>, vector<8x7x128xf32> -> vector<8x8x128xf32>
    %23 = vector.extract_strided_slice %19 {offsets = [0, 1, 0], sizes = [8, 7, 128], strides = [1, 1, 1]} : vector<8x8x128xf32> to vector<8x7x128xf32>
    %24 = tpu.concatenate %23, %20 in 1 : vector<8x7x128xf32>, vector<8x1x128xf32> -> vector<8x8x128xf32>
    %25 = tpu.concatenate %22, %19, %24 in 2 : vector<8x8x128xf32>, vector<8x8x128xf32>, vector<8x8x128xf32> -> vector<8x8x384xf32>
    %cst_19 = arith.constant 0.000000e+00 : f32
    %26 = vector.broadcast %cst_19 : f32 to vector<1x8x384xf32>
    %27 = tpu.concatenate %26, %25, %26 in 0 : vector<1x8x384xf32>, vector<8x8x384xf32>, vector<1x8x384xf32> -> vector<10x8x384xf32>
    %28 = vector.extract_strided_slice %27 {offsets = [0, 0, 0], sizes = [8, 8, 384], strides = [1, 1, 1]} : vector<10x8x384xf32> to vector<8x8x384xf32>
    %29 = vector.shape_cast %28 : vector<8x8x384xf32> to vector<64x384xf32>
    %c0_20 = arith.constant 0 : index
    %c0_21 = arith.constant 0 : index
    %c0_22 = arith.constant 0 : index
    %30 = vector.load %arg4[%c0_20, %c0_21, %c0_22] : memref<3x384x128xf32, #tpu.memory_space<vmem>>, vector<1x384x128xf32>
    %31 = vector.shape_cast %30 : vector<1x384x128xf32> to vector<384x128xf32>
    %cst_23 = arith.constant dense<0.000000e+00> : vector<64x128xf32>
    %32 = tpu.matmul %29, %31, %cst_23 {dimension_numbers = #tpu.dot_dimension_numbers<[1], [0], [0], [1], [0, 0, 1, 1], [], []>} : vector<64x384xf32>, vector<384x128xf32>, vector<64x128xf32> -> vector<64x128xf32>
    %33 = arith.addf %18, %32 : vector<64x128xf32>
    %34 = vector.extract_strided_slice %27 {offsets = [1, 0, 0], sizes = [8, 8, 384], strides = [1, 1, 1]} : vector<10x8x384xf32> to vector<8x8x384xf32>
    %35 = vector.shape_cast %34 : vector<8x8x384xf32> to vector<64x384xf32>
    %c1_24 = arith.constant 1 : index
    %c0_25 = arith.constant 0 : index
    %c0_26 = arith.constant 0 : index
    %36 = vector.load %arg4[%c1_24, %c0_25, %c0_26] : memref<3x384x128xf32, #tpu.memory_space<vmem>>, vector<1x384x128xf32>
    %37 = vector.shape_cast %36 : vector<1x384x128xf32> to vector<384x128xf32>
    %cst_27 = arith.constant dense<0.000000e+00> : vector<64x128xf32>
    %38 = tpu.matmul %35, %37, %cst_27 {dimension_numbers = #tpu.dot_dimension_numbers<[1], [0], [0], [1], [0, 0, 1, 1], [], []>} : vector<64x384xf32>, vector<384x128xf32>, vector<64x128xf32> -> vector<64x128xf32>
    %39 = arith.addf %33, %38 : vector<64x128xf32>
    %40 = vector.extract_strided_slice %27 {offsets = [2, 0, 0], sizes = [8, 8, 384], strides = [1, 1, 1]} : vector<10x8x384xf32> to vector<8x8x384xf32>
    %41 = vector.shape_cast %40 : vector<8x8x384xf32> to vector<64x384xf32>
    %c2 = arith.constant 2 : index
    %c0_28 = arith.constant 0 : index
    %c0_29 = arith.constant 0 : index
    %42 = vector.load %arg4[%c2, %c0_28, %c0_29] : memref<3x384x128xf32, #tpu.memory_space<vmem>>, vector<1x384x128xf32>
    %43 = vector.shape_cast %42 : vector<1x384x128xf32> to vector<384x128xf32>
    %cst_30 = arith.constant dense<0.000000e+00> : vector<64x128xf32>
    %44 = tpu.matmul %41, %43, %cst_30 {dimension_numbers = #tpu.dot_dimension_numbers<[1], [0], [0], [1], [0, 0, 1, 1], [], []>} : vector<64x384xf32>, vector<384x128xf32>, vector<64x128xf32> -> vector<64x128xf32>
    %45 = arith.addf %39, %44 : vector<64x128xf32>
    %cst_31 = arith.constant 0.000000e+00 : f32
    %46 = vector.broadcast %cst_31 : f32 to vector<64x128xf32>
    %47 = arith.maximumf %45, %46 : vector<64x128xf32>
    %48 = vector.shape_cast %47 : vector<64x128xf32> to vector<8x8x128xf32>
    %c0_32 = arith.constant 0 : index
    %c0_33 = arith.constant 0 : index
    %c0_34 = arith.constant 0 : index
    %c0_35 = arith.constant 0 : index
    %49 = vector.load %arg5[%c0_32, %c0_33, %c0_34, %c0_35] : memref<1x8x8x128xf32, #tpu.memory_space<vmem>>, vector<1x8x8x128xf32>
    %50 = vector.shape_cast %49 : vector<1x8x8x128xf32> to vector<8x8x128xf32>
    %51 = vector.shape_cast %48 : vector<8x8x128xf32> to vector<1x8x8x128xf32>
    tpu.vector_store %arg5[%c0_32, %c0_33, %c0_34, %c0_35], %51 {strides = array<i32>} : memref<1x8x8x128xf32, #tpu.memory_space<vmem>>, vector<1x8x8x128xf32>,
    return
  }
  func.func @transform_0(%arg0: i32) -> (i32, i32, i32, i32, i32) {
    %c0_i32 = arith.constant 0 : i32
    %c0_i32_0 = arith.constant 0 : i32
    %c0_i32_1 = arith.constant 0 : i32
    %c0_i32_2 = arith.constant 0 : i32
    %c0_i32_3 = arith.constant 0 : i32
    return %arg0, %c0_i32, %c0_i32_0, %c0_i32_1, %c0_i32_2 : i32, i32, i32, i32, i32
  }
  func.func @transform_1(%arg0: i32) -> (i32, i32) {
    %c0_i32 = arith.constant 0 : i32
    %c0_i32_0 = arith.constant 0 : i32
    %c0_i32_1 = arith.constant 0 : i32
    return %c0_i32, %c0_i32_0 : i32, i32
  }
  func.func @transform_2(%arg0: i32) -> (i32, i32) {
    %c0_i32 = arith.constant 0 : i32
    %c0_i32_0 = arith.constant 0 : i32
    %c0_i32_1 = arith.constant 0 : i32
    return %c0_i32, %c0_i32_0 : i32, i32
  }
  func.func @transform_3(%arg0: i32) -> (i32, i32, i32) {
    %c0_i32 = arith.constant 0 : i32
    %c0_i32_0 = arith.constant 0 : i32
    %c0_i32_1 = arith.constant 0 : i32
    %c0_i32_2 = arith.constant 0 : i32
    return %c0_i32, %c0_i32_0, %c0_i32_1 : i32, i32, i32
  }
  func.func @transform_4(%arg0: i32) -> (i32, i32, i32, i32) {
    %c0_i32 = arith.constant 0 : i32
    %c0_i32_0 = arith.constant 0 : i32
    %c0_i32_1 = arith.constant 0 : i32
    %c0_i32_2 = arith.constant 0 : i32
    return %arg0, %c0_i32, %c0_i32_0, %c0_i32_1 : i32, i32, i32, i32
  }
}

</mosaic_0001>

<llo_original>
// kernel: run.2
$region0: #{run.2}
  #allocation0 [shape = 'u32[]', space=smem, size = 0x4, offset = 0x4, fixed_abs, tag = 'smem constant byte address 0x4 - core index']
  #allocation1 [shape = 'u32[72,128]{1,0:T(1,128)}', space=vmem, size = 0x9000, scoped, tag = 'internal scratch']
  %s0 = inlined_call_operand.vmem [shape: f32[2,1,18,16,128], index: 0, kind: input, shape index: {}]
  %s1 = inlined_call_operand.vmem [shape: f32[384,256], index: 1, kind: input, shape index: {}]
  %s2 = inlined_call_operand.vmem [shape: f32[1,256], index: 2, kind: input, shape index: {}]
  %s3 = inlined_call_operand.vmem [shape: f32[3,384,128], index: 3, kind: input, shape index: {}]
  %s4 = inlined_call_operand.vmem [shape: f32[2,16,16,128], index: 4, kind: output, shape index: {}]
  %s5 = sld [smem:[#allocation0]]
  $region49: #{run.2} parent=0
    _
  %s7 = ssub.s32 1, %s5
  %s8 = scalar_select 0, %s7, %s5
  loop: start=0, step=1, limit=4
  $region2: #{run.2} parent=0 // loop_pre_header
    _
  $region3: #{run.2} parent=0 // loop_header
    %s10 = sphi 0, %s14
    %p11 = scmp.ge.s32.totalorder %s10, 4
    %s20 = sphi 0, %s22
    %s23 = sphi 0, %s20
    %s24 = sphi 0, %s23
    %s40 = sphi 0, %s24
    %s44 = sphi 0, %s44
    %s46 = sphi 0, %s44
    %s47 = sphi 0, %s46
    %s61 = sphi 0, %s47
    %s65 = sphi 0, %s65
    %s67 = sphi 0, %s65
    %s68 = sphi 0, %s67
    %s82 = sphi 0, %s68
    %s86 = sphi 0, %s86
    %s88 = sphi 0, %s86
    %s89 = sphi 0, %s88
    %s103 = sphi 0, %s89
    %s109 = sphi 0, %s111
    %s112 = sphi 0, %s109
    %s113 = sphi 0, %s112
    %s129 = sphi 0, %s113
  $region4: #{run.2} parent=0 // loop_header_branch
    %13 = sbr.rel (%p11) target = $region8
  $region5: #{run.2} parent=0 // loop_body
    %s15 = ssub.s32 %s10, 1
    %s16 = ssub.s32 %s10, 2
    %s17 = sadd.s32 %s10, 1
    %s18 = ssub.s32 %s10, %s17
    %p19 = scmp.eq.s32.totalorder %s18, 0
    %s21 = sadd.s32 %s20, 1
    %s22 = scalar_select %p19, %s20, %s21
    %p25 = pneg %p19
    %p26 = scmp.eq.s32.totalorder %s10, 1
    %p27 = por %p25, %p26
    %p28 = scmp.ne.s32.totalorder %s20, %s23
    %p29 = scmp.eq.s32.totalorder %s10, 0
    %p30 = por %p28, %p29
    %p31 = scmp.ne.s32.totalorder %s20, %s23
    %p32 = scmp.eq.s32.totalorder %s15, 1
    %p33 = por %p31, %p32
    %p34 = scmp.ne.s32.totalorder %s23, %s24
    %p35 = scmp.eq.s32.totalorder %s15, 0
    %p36 = por %p34, %p35
    %p37 = scmp.ne.s32.totalorder %s23, %s24
    %p38 = scmp.eq.s32.totalorder %s16, 1
    %p39 = por %p37, %p38
    %p41 = scmp.ne.s32.totalorder %s24, %s40
    %p42 = scmp.eq.s32.totalorder %s16, 0
    %p43 = por %p41, %p42
    %s45 = sadd.s32 %s44, 1
    %p48 = scmp.eq.s32.totalorder %s10, 1
    %p49 = scmp.ne.s32.totalorder %s44, %s46
    %p50 = scmp.eq.s32.totalorder %s10, 0
    %p51 = por %p49, %p50
    %p52 = scmp.ne.s32.totalorder %s44, %s46
    %p53 = scmp.eq.s32.totalorder %s15, 1
    %p54 = por %p52, %p53
    %p55 = scmp.ne.s32.totalorder %s46, %s47
    %p56 = scmp.eq.s32.totalorder %s15, 0
    %p57 = por %p55, %p56
    %p58 = scmp.ne.s32.totalorder %s46, %s47
    %p59 = scmp.eq.s32.totalorder %s16, 1
    %p60 = por %p58, %p59
    %p62 = scmp.ne.s32.totalorder %s47, %s61
    %p63 = scmp.eq.s32.totalorder %s16, 0
    %p64 = por %p62, %p63
    %s66 = sadd.s32 %s65, 1
    %p69 = scmp.eq.s32.totalorder %s10, 1
    %p70 = scmp.ne.s32.totalorder %s65, %s67
    %p71 = scmp.eq.s32.totalorder %s10, 0
    %p72 = por %p70, %p71
    %p73 = scmp.ne.s32.totalorder %s65, %s67
    %p74 = scmp.eq.s32.totalorder %s15, 1
    %p75 = por %p73, %p74
    %p76 = scmp.ne.s32.totalorder %s67, %s68
    %p77 = scmp.eq.s32.totalorder %s15, 0
    %p78 = por %p76, %p77
    %p79 = scmp.ne.s32.totalorder %s67, %s68
    %p80 = scmp.eq.s32.totalorder %s16, 1
    %p81 = por %p79, %p80
    %p83 = scmp.ne.s32.totalorder %s68, %s82
    %p84 = scmp.eq.s32.totalorder %s16, 0
    %p85 = por %p83, %p84
    %s87 = sadd.s32 %s86, 1
    %p90 = scmp.eq.s32.totalorder %s10, 1
    %p91 = scmp.ne.s32.totalorder %s86, %s88
    %p92 = scmp.eq.s32.totalorder %s10, 0
    %p93 = por %p91, %p92
    %p94 = scmp.ne.s32.totalorder %s86, %s88
    %p95 = scmp.eq.s32.totalorder %s15, 1
    %p96 = por %p94, %p95
    %p97 = scmp.ne.s32.totalorder %s88, %s89
    %p98 = scmp.eq.s32.totalorder %s15, 0
    %p99 = por %p97, %p98
    %p100 = scmp.ne.s32.totalorder %s88, %s89
    %p101 = scmp.eq.s32.totalorder %s16, 1
    %p102 = por %p100, %p101
    %p104 = scmp.ne.s32.totalorder %s89, %s103
    %p105 = scmp.eq.s32.totalorder %s16, 0
    %p106 = por %p104, %p105
    %s107 = ssub.s32 %s10, %s17
    %p108 = scmp.eq.s32.totalorder %s107, 0
    %s110 = sadd.s32 %s109, 1
    %s111 = scalar_select %p108, %s109, %s110
    %p114 = pneg %p108
    %p115 = scmp.eq.s32.totalorder %s10, 1
    %p116 = por %p114, %p115
    %p117 = scmp.ne.s32.totalorder %s109, %s112
    %p118 = scmp.eq.s32.totalorder %s10, 0
    %p119 = por %p117, %p118
    %p120 = scmp.ne.s32.totalorder %s109, %s112
    %p121 = scmp.eq.s32.totalorder %s15, 1
    %p122 = por %p120, %p121
    %p123 = scmp.ne.s32.totalorder %s112, %s113
    %p124 = scmp.eq.s32.totalorder %s15, 0
    %p125 = por %p123, %p124
    %p126 = scmp.ne.s32.totalorder %s112, %s113
    %p127 = scmp.eq.s32.totalorder %s16, 1
    %p128 = por %p126, %p127
    %p130 = scmp.ne.s32.totalorder %s113, %s129
    %p131 = scmp.eq.s32.totalorder %s16, 0
    %p132 = por %p130, %p131
    %p133 = scmp.le.s32.totalorder 1, %s10
    %p134 = scmp.lt.s32.totalorder %s10, 3
    %p135 = pnand %p133, %p134
    %p136 = pneg %p135
    // Predicated region
    $region9: #{run.2} parent=5 // pred_check
      _
    $region10: #{run.2} parent=5 // pred_check_branch
      %138 = sbr.rel (%p135) target = $region12
    $region11: #{run.2} parent=5 // pred_region
      %s139 = ssub.s32 %s10, 1
      // Predicated region
      $region13: #{run.2} parent=11 // pred_check
        %p140 = pneg %p57
      $region14: #{run.2} parent=11 // pred_check_branch
        %142 = sbr.rel (%p140) target = $region16
      $region15: #{run.2} parent=11 // pred_region
        _
      $region16: #{run.2} parent=11 // pred_fallthru
        _
      // Predicated region
      $region17: #{run.2} parent=11 // pred_check
        %p143 = pneg %p78
      $region18: #{run.2} parent=11 // pred_check_branch
        %145 = sbr.rel (%p143) target = $region20
      $region19: #{run.2} parent=11 // pred_region
        _
      $region20: #{run.2} parent=11 // pred_fallthru
        _
      // Predicated region
      $region21: #{run.2} parent=11 // pred_check
        %p146 = pneg %p99
      $region22: #{run.2} parent=11 // pred_check_branch
        %148 = sbr.rel (%p146) target = $region24
      $region23: #{run.2} parent=11 // pred_region
        _
      $region24: #{run.2} parent=11 // pred_fallthru
        _
    $region12: #{run.2} parent=5 // pred_fallthru
      _
    %p149 = scmp.lt.s32.totalorder %s10, 2
    // Predicated region
    $region25: #{run.2} parent=5 // pred_check
      %p150 = pneg %p149
    $region26: #{run.2} parent=5 // pred_check_branch
      %152 = sbr.rel (%p150) target = $region28
    $region27: #{run.2} parent=5 // pred_region
      // Predicated region
      $region29: #{run.2} parent=27 // pred_check
        %p153 = pneg %p30
      $region30: #{run.2} parent=27 // pred_check_branch
        %155 = sbr.rel (%p153) target = $region32
      $region31: #{run.2} parent=27 // pred_region
        %p156 = scmp.lt.s32.totalorder %s10, 1
        %s157 = scalar_select %p156, %s10, 1
        %s158 = smul.addr %s157, 36
        %s159 = smul.addr %s158, 8
        %s160 = scalar_lea.vmem %s0, %s159
      $region32: #{run.2} parent=27 // pred_fallthru
        _
    $region28: #{run.2} parent=5 // pred_fallthru
      _
    %p161 = scmp.le.s32.totalorder 1, %s10
    %p162 = scmp.lt.s32.totalorder %s10, 3
    %p163 = pnand %p161, %p162
    %p164 = pneg %p163
    // Predicated region
    $region33: #{run.2} parent=5 // pred_check
      _
    $region34: #{run.2} parent=5 // pred_check_branch
      %166 = sbr.rel (%p163) target = $region36
    $region35: #{run.2} parent=5 // pred_region
      %s167 = ssub.s32 %s10, 1
      %p168 = scmp.lt.s32.totalorder %s15, 1
      %s169 = scalar_select %p168, %s15, 1
      %s170 = smul.addr %s169, 36
      %s171 = smul.addr %s170, 8
      %s172 = scalar_lea.vmem %s0, %s171
      %p173 = pneg %p36
      %p174 = pneg %p33
      %p175 = pneg %p57
      %p176 = pneg %p54
      %p177 = pneg %p78
      %p178 = pneg %p75
      %p179 = pneg %p99
      %p180 = pneg %p96
      %p181 = pneg %p125
      %p182 = pneg %p122
      %p183 = scmp.lt.s32.totalorder %s15, 1
      %s184 = scalar_select %p183, %s15, 1
      %s185 = smul.addr %s184, 32
      %s186 = smul.addr %s185, 8
      %s187 = scalar_lea.vmem %s4, %s186
      %p188 = scmp.lt.s32.totalorder %s15, 1
      %s189 = scalar_select %p188, %s15, 1
      %s190 = smul.addr %s189, 36
      %s191 = smul.addr %s190, 8
      %s192 = scalar_lea.vmem %s0, %s191
      %p193 = scmp.lt.s32.totalorder %s15, 1
      %s194 = scalar_select %p193, %s15, 1
      %s195 = smul.addr %s194, 32
      %s196 = smul.addr %s195, 8
      %s197 = scalar_lea.vmem %s4, %s196
      %v198 = vld [vmem:[%s192] sm:$0xff]
      %v199 = vld [vmem:[%s192 + $0x8] sm:$0xff]
      %v200 = vld [vmem:[%s192 + $0x10] sm:$0xff]
      %v201 = vld [vmem:[%s192 + $0x18] sm:$0xff]
      %v202 = vld [vmem:[%s192 + $0x20] sm:$0xff]
      %v203 = vld [vmem:[%s192 + $0x28] sm:$0xff]
      %v204 = vld [vmem:[%s192 + $0x30] sm:$0xff]
      %v205 = vld [vmem:[%s192 + $0x38] sm:$0xff]
      %v206 = vld [vmem:[%s192 + $0x40] sm:$0xff]
      %v207 = vld [vmem:[%s192 + $0x48] sm:$0xff]
      %v208 = vld [vmem:[%s192 + $0x50] sm:$0xff]
      %v209 = vld [vmem:[%s192 + $0x58] sm:$0xff]
      %v210 = vld [vmem:[%s192 + $0x60] sm:$0xff]
      %v211 = vld [vmem:[%s192 + $0x68] sm:$0xff]
      %v212 = vld [vmem:[%s192 + $0x70] sm:$0xff]
      %v213 = vld [vmem:[%s192 + $0x78] sm:$0xff]
      %v214 = vld [vmem:[%s192 + $0x80] sm:$0xff]
      %v215 = vld [vmem:[%s192 + $0x88] sm:$0xff]
      %v216 = vld [vmem:[%s192 + $0x90] sm:$0xff]
      %v217 = vld [vmem:[%s192 + $0x98] sm:$0xff]
      %v218 = vld [vmem:[%s192 + $0xa0] sm:$0xff]
      %v219 = vld [vmem:[%s192 + $0xa8] sm:$0xff]
      %v220 = vld [vmem:[%s192 + $0xb0] sm:$0xff]
      %v221 = vld [vmem:[%s192 + $0xb8] sm:$0xff]
      %v222 = vld [vmem:[%s192 + $0xc0] sm:$0xff]
      %v223 = vld [vmem:[%s192 + $0xc8] sm:$0xff]
      %v224 = vld [vmem:[%s192 + $0xd0] sm:$0xff]
      %v225 = vld [vmem:[%s192 + $0xd8] sm:$0xff]
      %v226 = vld [vmem:[%s192 + $0xe0] sm:$0xff]
      %v227 = vld [vmem:[%s192 + $0xe8] sm:$0xff]
      %v228 = vld [vmem:[%s192 + $0xf0] sm:$0xff]
      %v229 = vld [vmem:[%s192 + $0xf8] sm:$0xff]
      %s230 = scalar_lea.vmem %s192, 16
      %v231 = vld [vmem:[%s230] sm:$0xff]
      %v232 = vld [vmem:[%s230 + $0x8] sm:$0xff]
      %v233 = vld [vmem:[%s230 + $0x10] sm:$0xff]
      %v234 = vld [vmem:[%s230 + $0x18] sm:$0xff]
      %v235 = vld [vmem:[%s230 + $0x20] sm:$0xff]
      %v236 = vld [vmem:[%s230 + $0x28] sm:$0xff]
      %v237 = vld [vmem:[%s230 + $0x30] sm:$0xff]
      %v238 = vld [vmem:[%s230 + $0x38] sm:$0xff]
      %v239 = vld [vmem:[%s230 + $0x40] sm:$0xff]
      %v240 = vld [vmem:[%s230 + $0x48] sm:$0xff]
      %v241 = vld [vmem:[%s230 + $0x50] sm:$0xff]
      %v242 = vld [vmem:[%s230 + $0x58] sm:$0xff]
      %v243 = vld [vmem:[%s230 + $0x60] sm:$0xff]
      %v244 = vld [vmem:[%s230 + $0x68] sm:$0xff]
      %v245 = vld [vmem:[%s230 + $0x70] sm:$0xff]
      %v246 = vld [vmem:[%s230 + $0x78] sm:$0xff]
      %v247 = vld [vmem:[%s230 + $0x80] sm:$0xff]
      %v248 = vld [vmem:[%s230 + $0x88] sm:$0xff]
      %v249 = vld [vmem:[%s230 + $0x90] sm:$0xff]
      %v250 = vld [vmem:[%s230 + $0x98] sm:$0xff]
      %v251 = vld [vmem:[%s230 + $0xa0] sm:$0xff]
      %v252 = vld [vmem:[%s230 + $0xa8] sm:$0xff]
      %v253 = vld [vmem:[%s230 + $0xb0] sm:$0xff]
      %v254 = vld [vmem:[%s230 + $0xb8] sm:$0xff]
      %v255 = vld [vmem:[%s230 + $0xc0] sm:$0xff]
      %v256 = vld [vmem:[%s230 + $0xc8] sm:$0xff]
      %v257 = vld [vmem:[%s230 + $0xd0] sm:$0xff]
      %v258 = vld [vmem:[%s230 + $0xd8] sm:$0xff]
      %v259 = vld [vmem:[%s230 + $0xe0] sm:$0xff]
      %v260 = vld [vmem:[%s230 + $0xe8] sm:$0xff]
      %v261 = vld [vmem:[%s230 + $0xf0] sm:$0xff]
      %v262 = vld [vmem:[%s230 + $0xf8] sm:$0xff]
      %s263 = scalar_lea.vmem %s192, 32
      %v264 = vld [vmem:[%s263] sm:$0xff]
      %v265 = vld [vmem:[%s263 + $0x8] sm:$0xff]
      %v266 = vld [vmem:[%s263 + $0x10] sm:$0xff]
      %v267 = vld [vmem:[%s263 + $0x18] sm:$0xff]
      %v268 = vld [vmem:[%s263 + $0x20] sm:$0xff]
      %v269 = vld [vmem:[%s263 + $0x28] sm:$0xff]
      %v270 = vld [vmem:[%s263 + $0x30] sm:$0xff]
      %v271 = vld [vmem:[%s263 + $0x38] sm:$0xff]
      %v272 = vld [vmem:[%s263 + $0x40] sm:$0xff]
      %v273 = vld [vmem:[%s263 + $0x48] sm:$0xff]
      %v274 = vld [vmem:[%s263 + $0x50] sm:$0xff]
      %v275 = vld [vmem:[%s263 + $0x58] sm:$0xff]
      %v276 = vld [vmem:[%s263 + $0x60] sm:$0xff]
      %v277 = vld [vmem:[%s263 + $0x68] sm:$0xff]
      %v278 = vld [vmem:[%s263 + $0x70] sm:$0xff]
      %v279 = vld [vmem:[%s263 + $0x78] sm:$0xff]
      %v280 = vld [vmem:[%s263 + $0x80] sm:$0xff]
      %v281 = vld [vmem:[%s263 + $0x88] sm:$0xff]
      %v282 = vld [vmem:[%s263 + $0x90] sm:$0xff]
      %v283 = vld [vmem:[%s263 + $0x98] sm:$0xff]
      %v284 = vld [vmem:[%s263 + $0xa0] sm:$0xff]
      %v285 = vld [vmem:[%s263 + $0xa8] sm:$0xff]
      %v286 = vld [vmem:[%s263 + $0xb0] sm:$0xff]
      %v287 = vld [vmem:[%s263 + $0xb8] sm:$0xff]
      %v288 = vld [vmem:[%s263 + $0xc0] sm:$0xff]
      %v289 = vld [vmem:[%s263 + $0xc8] sm:$0xff]
      %v290 = vld [vmem:[%s263 + $0xd0] sm:$0xff]
      %v291 = vld [vmem:[%s263 + $0xd8] sm:$0xff]
      %v292 = vld [vmem:[%s263 + $0xe0] sm:$0xff]
      %v293 = vld [vmem:[%s263 + $0xe8] sm:$0xff]
      %v294 = vld [vmem:[%s263 + $0xf0] sm:$0xff]
      %v295 = vld [vmem:[%s263 + $0xf8] sm:$0xff]
      %v296 = vld [vmem:[%s1] sm:$0xff]
      %v297 = vld [vmem:[%s1 + $0x8] sm:$0xff]
      %v298 = vld [vmem:[%s1 + $0x10] sm:$0xff]
      %v299 = vld [vmem:[%s1 + $0x18] sm:$0xff]
      %v300 = vld [vmem:[%s1 + $0x20] sm:$0xff]
      %v301 = vld [vmem:[%s1 + $0x28] sm:$0xff]
      %v302 = vld [vmem:[%s1 + $0x30] sm:$0xff]
      %v303 = vld [vmem:[%s1 + $0x38] sm:$0xff]
      %v304 = vld [vmem:[%s1 + $0x40] sm:$0xff]
      %v305 = vld [vmem:[%s1 + $0x48] sm:$0xff]
      %v306 = vld [vmem:[%s1 + $0x50] sm:$0xff]
      %v307 = vld [vmem:[%s1 + $0x58] sm:$0xff]
      %v308 = vld [vmem:[%s1 + $0x60] sm:$0xff]
      %v309 = vld [vmem:[%s1 + $0x68] sm:$0xff]
      %v310 = vld [vmem:[%s1 + $0x70] sm:$0xff]
      %v311 = vld [vmem:[%s1 + $0x78] sm:$0xff]
      %v312 = vld [vmem:[%s1 + $0x80] sm:$0xff]
      %v313 = vld [vmem:[%s1 + $0x88] sm:$0xff]
      %v314 = vld [vmem:[%s1 + $0x90] sm:$0xff]
      %v315 = vld [vmem:[%s1 + $0x98] sm:$0xff]
      %v316 = vld [vmem:[%s1 + $0xa0] sm:$0xff]
      %v317 = vld [vmem:[%s1 + $0xa8] sm:$0xff]
      %v318 = vld [vmem:[%s1 + $0xb0] sm:$0xff]
      %v319 = vld [vmem:[%s1 + $0xb8] sm:$0xff]
      %v320 = vld [vmem:[%s1 + $0xc0] sm:$0xff]
      %v321 = vld [vmem:[%s1 + $0xc8] sm:$0xff]
      %v322 = vld [vmem:[%s1 + $0xd0] sm:$0xff]
      %v323 = vld [vmem:[%s1 + $0xd8] sm:$0xff]
      %v324 = vld [vmem:[%s1 + $0xe0] sm:$0xff]
      %v325 = vld [vmem:[%s1 + $0xe8] sm:$0xff]
      %v326 = vld [vmem:[%s1 + $0xf0] sm:$0xff]
      %v327 = vld [vmem:[%s1 + $0xf8] sm:$0xff]
      %v328 = vld [vmem:[%s1 + $0x100] sm:$0xff]
      %v329 = vld [vmem:[%s1 + $0x108] sm:$0xff]
      %v330 = vld [vmem:[%s1 + $0x110] sm:$0xff]
      %v331 = vld [vmem:[%s1 + $0x118] sm:$0xff]
      %v332 = vld [vmem:[%s1 + $0x120] sm:$0xff]
      %v333 = vld [vmem:[%s1 + $0x128] sm:$0xff]
      %v334 = vld [vmem:[%s1 + $0x130] sm:$0xff]
      %v335 = vld [vmem:[%s1 + $0x138] sm:$0xff]
      %v336 = vld [vmem:[%s1 + $0x140] sm:$0xff]
      %v337 = vld [vmem:[%s1 + $0x148] sm:$0xff]
      %v338 = vld [vmem:[%s1 + $0x150] sm:$0xff]
      %v339 = vld [vmem:[%s1 + $0x158] sm:$0xff]
      %v340 = vld [vmem:[%s1 + $0x160] sm:$0xff]
      %v341 = vld [vmem:[%s1 + $0x168] sm:$0xff]
      %v342 = vld [vmem:[%s1 + $0x170] sm:$0xff]
      %v343 = vld [vmem:[%s1 + $0x178] sm:$0xff]
      %v344 = vld [vmem:[%s1 + $0x180] sm:$0xff]
      %v345 = vld [vmem:[%s1 + $0x188] sm:$0xff]
      %v346 = vld [vmem:[%s1 + $0x190] sm:$0xff]
      %v347 = vld [vmem:[%s1 + $0x198] sm:$0xff]
      %v348 = vld [vmem:[%s1 + $0x1a0] sm:$0xff]
      %v349 = vld [vmem:[%s1 + $0x1a8] sm:$0xff]
      %v350 = vld [vmem:[%s1 + $0x1b0] sm:$0xff]
      %v351 = vld [vmem:[%s1 + $0x1b8] sm:$0xff]
      %v352 = vld [vmem:[%s1 + $0x1c0] sm:$0xff]
      %v353 = vld [vmem:[%s1 + $0x1c8] sm:$0xff]
      %v354 = vld [vmem:[%s1 + $0x1d0] sm:$0xff]
      %v355 = vld [vmem:[%s1 + $0x1d8] sm:$0xff]
      %v356 = vld [vmem:[%s1 + $0x1e0] sm:$0xff]
      %v357 = vld [vmem:[%s1 + $0x1e8] sm:$0xff]
      %v358 = vld [vmem:[%s1 + $0x1f0] sm:$0xff]
      %v359 = vld [vmem:[%s1 + $0x1f8] sm:$0xff]
      %v360 = vld [vmem:[%s1 + $0x200] sm:$0xff]
      %v361 = vld [vmem:[%s1 + $0x208] sm:$0xff]
      %v362 = vld [vmem:[%s1 + $0x210] sm:$0xff]
      %v363 = vld [vmem:[%s1 + $0x218] sm:$0xff]
      %v364 = vld [vmem:[%s1 + $0x220] sm:$0xff]
      %v365 = vld [vmem:[%s1 + $0x228] sm:$0xff]
      %v366 = vld [vmem:[%s1 + $0x230] sm:$0xff]
      %v367 = vld [vmem:[%s1 + $0x238] sm:$0xff]
      %v368 = vld [vmem:[%s1 + $0x240] sm:$0xff]
      %v369 = vld [vmem:[%s1 + $0x248] sm:$0xff]
      %v370 = vld [vmem:[%s1 + $0x250] sm:$0xff]
      %v371 = vld [vmem:[%s1 + $0x258] sm:$0xff]
      %v372 = vld [vmem:[%s1 + $0x260] sm:$0xff]
      %v373 = vld [vmem:[%s1 + $0x268] sm:$0xff]
      %v374 = vld [vmem:[%s1 + $0x270] sm:$0xff]
      %v375 = vld [vmem:[%s1 + $0x278] sm:$0xff]
      %v376 = vld [vmem:[%s1 + $0x280] sm:$0xff]
      %v377 = vld [vmem:[%s1 + $0x288] sm:$0xff]
      %v378 = vld [vmem:[%s1 + $0x290] sm:$0xff]
      %v379 = vld [vmem:[%s1 + $0x298] sm:$0xff]
      %v380 = vld [vmem:[%s1 + $0x2a0] sm:$0xff]
      %v381 = vld [vmem:[%s1 + $0x2a8] sm:$0xff]
      %v382 = vld [vmem:[%s1 + $0x2b0] sm:$0xff]
      %v383 = vld [vmem:[%s1 + $0x2b8] sm:$0xff]
      %v384 = vld [vmem:[%s1 + $0x2c0] sm:$0xff]
      %v385 = vld [vmem:[%s1 + $0x2c8] sm:$0xff]
      %v386 = vld [vmem:[%s1 + $0x2d0] sm:$0xff]
      %v387 = vld [vmem:[%s1 + $0x2d8] sm:$0xff]
      %v388 = vld [vmem:[%s1 + $0x2e0] sm:$0xff]
      %v389 = vld [vmem:[%s1 + $0x2e8] sm:$0xff]
      %v390 = vld [vmem:[%s1 + $0x2f0] sm:$0xff]
      %v391 = vld [vmem:[%s1 + $0x2f8] sm:$0xff]
      %v392 = vld [vmem:[%s2] sm:$0x3]
      %v394 = vperm.slane %v392, 0
      %v395 = vperm.slane %v392, 1
      %398 = vmatpush.msra.mxu0 %v326
      %399 = vmatpush.msra.mxu0 %v324
      %400 = vmatpush.msra.mxu0 %v322
      %401 = vmatpush.msra.mxu0 %v320
      %402 = vmatpush.msra.mxu0 %v318
      %403 = vmatpush.msra.mxu0 %v316
      %404 = vmatpush.msra.mxu0 %v314
      %405 = vmatpush.msra.mxu0 %v312
      %406 = vmatpush.msra.mxu0 %v310
      %407 = vmatpush.msra.mxu0 %v308
      %408 = vmatpush.msra.mxu0 %v306
      %409 = vmatpush.msra.mxu0 %v304
      %410 = vmatpush.msra.mxu0 %v302
      %411 = vmatpush.msra.mxu0 %v300
      %412 = vmatpush.msra.mxu0 %v298
      %413 = vmatpush.msra.mxu0 %v296
      %414 = vmatmul.f32.gmra.mxu0 %v198
      %v415 = vpop.f32.mrf.mxu0
      %v416 = vadd.f32 %v394, %v415
      %417 = vmatmul.f32.gmra.mxu0 %v199
      %v418 = vpop.f32.mrf.mxu0
      %v419 = vadd.f32 %v394, %v418
      %420 = vmatmul.f32.gmra.mxu0 %v200
      %v421 = vpop.f32.mrf.mxu0
      %v422 = vadd.f32 %v394, %v421
      %423 = vmatmul.f32.gmra.mxu0 %v201
      %v424 = vpop.f32.mrf.mxu0
      %v425 = vadd.f32 %v394, %v424
      %426 = vmatmul.f32.gmra.mxu0 %v202
      %v427 = vpop.f32.mrf.mxu0
      %v428 = vadd.f32 %v394, %v427
      %429 = vmatmul.f32.gmra.mxu0 %v203
      %v430 = vpop.f32.mrf.mxu0
      %v431 = vadd.f32 %v394, %v430
      %432 = vmatmul.f32.gmra.mxu0 %v204
      %v433 = vpop.f32.mrf.mxu0
      %v434 = vadd.f32 %v394, %v433
      %435 = vmatmul.f32.gmra.mxu0 %v205
      %v436 = vpop.f32.mrf.mxu0
      %v437 = vadd.f32 %v394, %v436
      %438 = vmatmul.f32.gmra.mxu0 %v206
      %v439 = vpop.f32.mrf.mxu0
      %v440 = vadd.f32 %v394, %v439
      %441 = vmatmul.f32.gmra.mxu0 %v207
      %v442 = vpop.f32.mrf.mxu0
      %v443 = vadd.f32 %v394, %v442
      %444 = vmatmul.f32.gmra.mxu0 %v208
      %v445 = vpop.f32.mrf.mxu0
      %v446 = vadd.f32 %v394, %v445
      %447 = vmatmul.f32.gmra.mxu0 %v209
      %v448 = vpop.f32.mrf.mxu0
      %v449 = vadd.f32 %v394, %v448
      %450 = vmatmul.f32.gmra.mxu0 %v210
      %v451 = vpop.f32.mrf.mxu0
      %v452 = vadd.f32 %v394, %v451
      %453 = vmatmul.f32.gmra.mxu0 %v211
      %v454 = vpop.f32.mrf.mxu0
      %v455 = vadd.f32 %v394, %v454
      %456 = vmatmul.f32.gmra.mxu0 %v212
      %v457 = vpop.f32.mrf.mxu0
      %v458 = vadd.f32 %v394, %v457
      %459 = vmatmul.f32.gmra.mxu0 %v213
      %v460 = vpop.f32.mrf.mxu0
      %v461 = vadd.f32 %v394, %v460
      %462 = vmatmul.f32.gmra.mxu0 %v214
      %v463 = vpop.f32.mrf.mxu0
      %v464 = vadd.f32 %v394, %v463
      %465 = vmatmul.f32.gmra.mxu0 %v215
      %v466 = vpop.f32.mrf.mxu0
      %v467 = vadd.f32 %v394, %v466
      %468 = vmatmul.f32.gmra.mxu0 %v216
      %v469 = vpop.f32.mrf.mxu0
      %v470 = vadd.f32 %v394, %v469
      %471 = vmatmul.f32.gmra.mxu0 %v217
      %v472 = vpop.f32.mrf.mxu0
      %v473 = vadd.f32 %v394, %v472
      %474 = vmatmul.f32.gmra.mxu0 %v218
      %v475 = vpop.f32.mrf.mxu0
      %v476 = vadd.f32 %v394, %v475
      %477 = vmatmul.f32.gmra.mxu0 %v219
      %v478 = vpop.f32.mrf.mxu0
      %v479 = vadd.f32 %v394, %v478
      %480 = vmatmul.f32.gmra.mxu0 %v220
      %v481 = vpop.f32.mrf.mxu0
      %v482 = vadd.f32 %v394, %v481
      %483 = vmatmul.f32.gmra.mxu0 %v221
      %v484 = vpop.f32.mrf.mxu0
      %v485 = vadd.f32 %v394, %v484
      %486 = vmatmul.f32.gmra.mxu0 %v222
      %v487 = vpop.f32.mrf.mxu0
      %v488 = vadd.f32 %v394, %v487
      %489 = vmatmul.f32.gmra.mxu0 %v223
      %v490 = vpop.f32.mrf.mxu0
      %v491 = vadd.f32 %v394, %v490
      %492 = vmatmul.f32.gmra.mxu0 %v224
      %v493 = vpop.f32.mrf.mxu0
      %v494 = vadd.f32 %v394, %v493
      %495 = vmatmul.f32.gmra.mxu0 %v225
      %v496 = vpop.f32.mrf.mxu0
      %v497 = vadd.f32 %v394, %v496
      %498 = vmatmul.f32.gmra.mxu0 %v226
      %v499 = vpop.f32.mrf.mxu0
      %v500 = vadd.f32 %v394, %v499
      %501 = vmatmul.f32.gmra.mxu0 %v227
      %v502 = vpop.f32.mrf.mxu0
      %v503 = vadd.f32 %v394, %v502
      %504 = vmatmul.f32.gmra.mxu0 %v228
      %v505 = vpop.f32.mrf.mxu0
      %v506 = vadd.f32 %v394, %v505
      %507 = vmatmul.f32.gmra.mxu0 %v229
      %v508 = vpop.f32.mrf.mxu0
      %v509 = vadd.f32 %v394, %v508
      %510 = vdwg.mxu0
      %511 = vmatpush.msra.mxu0 %v358
      %512 = vmatpush.msra.mxu0 %v356
      %513 = vmatpush.msra.mxu0 %v354
      %514 = vmatpush.msra.mxu0 %v352
      %515 = vmatpush.msra.mxu0 %v350
      %516 = vmatpush.msra.mxu0 %v348
      %517 = vmatpush.msra.mxu0 %v346
      %518 = vmatpush.msra.mxu0 %v344
      %519 = vmatpush.msra.mxu0 %v342
      %520 = vmatpush.msra.mxu0 %v340
      %521 = vmatpush.msra.mxu0 %v338
      %522 = vmatpush.msra.mxu0 %v336
      %523 = vmatpush.msra.mxu0 %v334
      %524 = vmatpush.msra.mxu0 %v332
      %525 = vmatpush.msra.mxu0 %v330
      %526 = vmatpush.msra.mxu0 %v328
      %527 = vmatmul.f32.gmra.mxu0 %v231
      %v528 = vpop.f32.mrf.mxu0
      %v529 = vadd.f32 %v416, %v528
      %530 = vmatmul.f32.gmra.mxu0 %v232
      %v531 = vpop.f32.mrf.mxu0
      %v532 = vadd.f32 %v419, %v531
      %533 = vmatmul.f32.gmra.mxu0 %v233
      %v534 = vpop.f32.mrf.mxu0
      %v535 = vadd.f32 %v422, %v534
      %536 = vmatmul.f32.gmra.mxu0 %v234
      %v537 = vpop.f32.mrf.mxu0
      %v538 = vadd.f32 %v425, %v537
      %539 = vmatmul.f32.gmra.mxu0 %v235
      %v540 = vpop.f32.mrf.mxu0
      %v541 = vadd.f32 %v428, %v540
      %542 = vmatmul.f32.gmra.mxu0 %v236
      %v543 = vpop.f32.mrf.mxu0
      %v544 = vadd.f32 %v431, %v543
      %545 = vmatmul.f32.gmra.mxu0 %v237
      %v546 = vpop.f32.mrf.mxu0
      %v547 = vadd.f32 %v434, %v546
      %548 = vmatmul.f32.gmra.mxu0 %v238
      %v549 = vpop.f32.mrf.mxu0
      %v550 = vadd.f32 %v437, %v549
      %551 = vmatmul.f32.gmra.mxu0 %v239
      %v552 = vpop.f32.mrf.mxu0
      %v553 = vadd.f32 %v440, %v552
      %554 = vmatmul.f32.gmra.mxu0 %v240
      %v555 = vpop.f32.mrf.mxu0
      %v556 = vadd.f32 %v443, %v555
      %557 = vmatmul.f32.gmra.mxu0 %v241
      %v558 = vpop.f32.mrf.mxu0
      %v559 = vadd.f32 %v446, %v558
      %560 = vmatmul.f32.gmra.mxu0 %v242
      %v561 = vpop.f32.mrf.mxu0
      %v562 = vadd.f32 %v449, %v561
      %563 = vmatmul.f32.gmra.mxu0 %v243
      %v564 = vpop.f32.mrf.mxu0
      %v565 = vadd.f32 %v452, %v564
      %566 = vmatmul.f32.gmra.mxu0 %v244
      %v567 = vpop.f32.mrf.mxu0
      %v568 = vadd.f32 %v455, %v567
      %569 = vmatmul.f32.gmra.mxu0 %v245
      %v570 = vpop.f32.mrf.mxu0
      %v571 = vadd.f32 %v458, %v570
      %572 = vmatmul.f32.gmra.mxu0 %v246
      %v573 = vpop.f32.mrf.mxu0
      %v574 = vadd.f32 %v461, %v573
      %575 = vmatmul.f32.gmra.mxu0 %v247
      %v576 = vpop.f32.mrf.mxu0
      %v577 = vadd.f32 %v464, %v576
      %578 = vmatmul.f32.gmra.mxu0 %v248
      %v579 = vpop.f32.mrf.mxu0
      %v580 = vadd.f32 %v467, %v579
      %581 = vmatmul.f32.gmra.mxu0 %v249
      %v582 = vpop.f32.mrf.mxu0
      %v583 = vadd.f32 %v470, %v582
      %584 = vmatmul.f32.gmra.mxu0 %v250
      %v585 = vpop.f32.mrf.mxu0
      %v586 = vadd.f32 %v473, %v585
      %587 = vmatmul.f32.gmra.mxu0 %v251
      %v588 = vpop.f32.mrf.mxu0
      %v589 = vadd.f32 %v476, %v588
      %590 = vmatmul.f32.gmra.mxu0 %v252
      %v591 = vpop.f32.mrf.mxu0
      %v592 = vadd.f32 %v479, %v591
      %593 = vmatmul.f32.gmra.mxu0 %v253
      %v594 = vpop.f32.mrf.mxu0
      %v595 = vadd.f32 %v482, %v594
      %596 = vmatmul.f32.gmra.mxu0 %v254
      %v597 = vpop.f32.mrf.mxu0
      %v598 = vadd.f32 %v485, %v597
      %599 = vmatmul.f32.gmra.mxu0 %v255
      %v600 = vpop.f32.mrf.mxu0
      %v601 = vadd.f32 %v488, %v600
      %602 = vmatmul.f32.gmra.mxu0 %v256
      %v603 = vpop.f32.mrf.mxu0
      %v604 = vadd.f32 %v491, %v603
      %605 = vmatmul.f32.gmra.mxu0 %v257
      %v606 = vpop.f32.mrf.mxu0
      %v607 = vadd.f32 %v494, %v606
      %608 = vmatmul.f32.gmra.mxu0 %v258
      %v609 = vpop.f32.mrf.mxu0
      %v610 = vadd.f32 %v497, %v609
      %611 = vmatmul.f32.gmra.mxu0 %v259
      %v612 = vpop.f32.mrf.mxu0
      %v613 = vadd.f32 %v500, %v612
      %614 = vmatmul.f32.gmra.mxu0 %v260
      %v615 = vpop.f32.mrf.mxu0
      %v616 = vadd.f32 %v503, %v615
      %617 = vmatmul.f32.gmra.mxu0 %v261
      %v618 = vpop.f32.mrf.mxu0
      %v619 = vadd.f32 %v506, %v618
      %620 = vmatmul.f32.gmra.mxu0 %v262
      %v621 = vpop.f32.mrf.mxu0
      %v622 = vadd.f32 %v509, %v621
      %623 = vdwg.mxu0
      %624 = vmatpush.msra.mxu0 %v390
      %625 = vmatpush.msra.mxu0 %v388
      %626 = vmatpush.msra.mxu0 %v386
      %627 = vmatpush.msra.mxu0 %v384
      %628 = vmatpush.msra.mxu0 %v382
      %629 = vmatpush.msra.mxu0 %v380
      %630 = vmatpush.msra.mxu0 %v378
      %631 = vmatpush.msra.mxu0 %v376
      %632 = vmatpush.msra.mxu0 %v374
      %633 = vmatpush.msra.mxu0 %v372
      %634 = vmatpush.msra.mxu0 %v370
      %635 = vmatpush.msra.mxu0 %v368
      %636 = vmatpush.msra.mxu0 %v366
      %637 = vmatpush.msra.mxu0 %v364
      %638 = vmatpush.msra.mxu0 %v362
      %639 = vmatpush.msra.mxu0 %v360
      %640 = vmatmul.f32.gmra.mxu0 %v264
      %v641 = vpop.f32.mrf.mxu0
      %v642 = vadd.f32 %v529, %v641
      %643 = vmatmul.f32.gmra.mxu0 %v265
      %v644 = vpop.f32.mrf.mxu0
      %v645 = vadd.f32 %v532, %v644
      %646 = vmatmul.f32.gmra.mxu0 %v266
      %v647 = vpop.f32.mrf.mxu0
      %v648 = vadd.f32 %v535, %v647
      %649 = vmatmul.f32.gmra.mxu0 %v267
      %v650 = vpop.f32.mrf.mxu0
      %v651 = vadd.f32 %v538, %v650
      %652 = vmatmul.f32.gmra.mxu0 %v268
      %v653 = vpop.f32.mrf.mxu0
      %v654 = vadd.f32 %v541, %v653
      %655 = vmatmul.f32.gmra.mxu0 %v269
      %v656 = vpop.f32.mrf.mxu0
      %v657 = vadd.f32 %v544, %v656
      %658 = vmatmul.f32.gmra.mxu0 %v270
      %v659 = vpop.f32.mrf.mxu0
      %v660 = vadd.f32 %v547, %v659
      %661 = vmatmul.f32.gmra.mxu0 %v271
      %v662 = vpop.f32.mrf.mxu0
      %v663 = vadd.f32 %v550, %v662
      %664 = vmatmul.f32.gmra.mxu0 %v272
      %v665 = vpop.f32.mrf.mxu0
      %v666 = vadd.f32 %v553, %v665
      %667 = vmatmul.f32.gmra.mxu0 %v273
      %v668 = vpop.f32.mrf.mxu0
      %v669 = vadd.f32 %v556, %v668
      %670 = vmatmul.f32.gmra.mxu0 %v274
      %v671 = vpop.f32.mrf.mxu0
      %v672 = vadd.f32 %v559, %v671
      %673 = vmatmul.f32.gmra.mxu0 %v275
      %v674 = vpop.f32.mrf.mxu0
      %v675 = vadd.f32 %v562, %v674
      %676 = vmatmul.f32.gmra.mxu0 %v276
      %v677 = vpop.f32.mrf.mxu0
      %v678 = vadd.f32 %v565, %v677
      %679 = vmatmul.f32.gmra.mxu0 %v277
      %v680 = vpop.f32.mrf.mxu0
      %v681 = vadd.f32 %v568, %v680
      %682 = vmatmul.f32.gmra.mxu0 %v278
      %v683 = vpop.f32.mrf.mxu0
      %v684 = vadd.f32 %v571, %v683
      %685 = vmatmul.f32.gmra.mxu0 %v279
      %v686 = vpop.f32.mrf.mxu0
      %v687 = vadd.f32 %v574, %v686
      %688 = vmatmul.f32.gmra.mxu0 %v280
      %v689 = vpop.f32.mrf.mxu0
      %v690 = vadd.f32 %v577, %v689
      %691 = vmatmul.f32.gmra.mxu0 %v281
      %v692 = vpop.f32.mrf.mxu0
      %v693 = vadd.f32 %v580, %v692
      %694 = vmatmul.f32.gmra.mxu0 %v282
      %v695 = vpop.f32.mrf.mxu0
      %v696 = vadd.f32 %v583, %v695
      %697 = vmatmul.f32.gmra.mxu0 %v283
      %v698 = vpop.f32.mrf.mxu0
      %v699 = vadd.f32 %v586, %v698
      %700 = vmatmul.f32.gmra.mxu0 %v284
      %v701 = vpop.f32.mrf.mxu0
      %v702 = vadd.f32 %v589, %v701
      %703 = vmatmul.f32.gmra.mxu0 %v285
      %v704 = vpop.f32.mrf.mxu0
      %v705 = vadd.f32 %v592, %v704
      %706 = vmatmul.f32.gmra.mxu0 %v286
      %v707 = vpop.f32.mrf.mxu0
      %v708 = vadd.f32 %v595, %v707
      %709 = vmatmul.f32.gmra.mxu0 %v287
      %v710 = vpop.f32.mrf.mxu0
      %v711 = vadd.f32 %v598, %v710
      %712 = vmatmul.f32.gmra.mxu0 %v288
      %v713 = vpop.f32.mrf.mxu0
      %v714 = vadd.f32 %v601, %v713
      %715 = vmatmul.f32.gmra.mxu0 %v289
      %v716 = vpop.f32.mrf.mxu0
      %v717 = vadd.f32 %v604, %v716
      %718 = vmatmul.f32.gmra.mxu0 %v290
      %v719 = vpop.f32.mrf.mxu0
      %v720 = vadd.f32 %v607, %v719
      %721 = vmatmul.f32.gmra.mxu0 %v291
      %v722 = vpop.f32.mrf.mxu0
      %v723 = vadd.f32 %v610, %v722
      %724 = vmatmul.f32.gmra.mxu0 %v292
      %v725 = vpop.f32.mrf.mxu0
      %v726 = vadd.f32 %v613, %v725
      %727 = vmatmul.f32.gmra.mxu0 %v293
      %v728 = vpop.f32.mrf.mxu0
      %v729 = vadd.f32 %v616, %v728
      %730 = vmatmul.f32.gmra.mxu0 %v294
      %v731 = vpop.f32.mrf.mxu0
      %v732 = vadd.f32 %v619, %v731
      %733 = vmatmul.f32.gmra.mxu0 %v295
      %v734 = vpop.f32.mrf.mxu0
      %v735 = vadd.f32 %v622, %v734
      %736 = vdwg.mxu0
      %737 = vmatpush.msra.mxu0 %v327
      %738 = vmatpush.msra.mxu0 %v325
      %739 = vmatpush.msra.mxu0 %v323
      %740 = vmatpush.msra.mxu0 %v321
      %741 = vmatpush.msra.mxu0 %v319
      %742 = vmatpush.msra.mxu0 %v317
      %743 = vmatpush.msra.mxu0 %v315
      %744 = vmatpush.msra.mxu0 %v313
      %745 = vmatpush.msra.mxu0 %v311
      %746 = vmatpush.msra.mxu0 %v309
      %747 = vmatpush.msra.mxu0 %v307
      %748 = vmatpush.msra.mxu0 %v305
      %749 = vmatpush.msra.mxu0 %v303
      %750 = vmatpush.msra.mxu0 %v301
      %751 = vmatpush.msra.mxu0 %v299
      %752 = vmatpush.msra.mxu0 %v297
      %753 = vmatmul.f32.gmra.mxu0 %v198
      %v754 = vpop.f32.mrf.mxu0
      %v755 = vadd.f32 %v395, %v754
      %756 = vmatmul.f32.gmra.mxu0 %v199
      %v757 = vpop.f32.mrf.mxu0
      %v758 = vadd.f32 %v395, %v757
      %759 = vmatmul.f32.gmra.mxu0 %v200
      %v760 = vpop.f32.mrf.mxu0
      %v761 = vadd.f32 %v395, %v760
      %762 = vmatmul.f32.gmra.mxu0 %v201
      %v763 = vpop.f32.mrf.mxu0
      %v764 = vadd.f32 %v395, %v763
      %765 = vmatmul.f32.gmra.mxu0 %v202
      %v766 = vpop.f32.mrf.mxu0
      %v767 = vadd.f32 %v395, %v766
      %768 = vmatmul.f32.gmra.mxu0 %v203
      %v769 = vpop.f32.mrf.mxu0
      %v770 = vadd.f32 %v395, %v769
      %771 = vmatmul.f32.gmra.mxu0 %v204
      %v772 = vpop.f32.mrf.mxu0
      %v773 = vadd.f32 %v395, %v772
      %774 = vmatmul.f32.gmra.mxu0 %v205
      %v775 = vpop.f32.mrf.mxu0
      %v776 = vadd.f32 %v395, %v775
      %777 = vmatmul.f32.gmra.mxu0 %v206
      %v778 = vpop.f32.mrf.mxu0
      %v779 = vadd.f32 %v395, %v778
      %780 = vmatmul.f32.gmra.mxu0 %v207
      %v781 = vpop.f32.mrf.mxu0
      %v782 = vadd.f32 %v395, %v781
      %783 = vmatmul.f32.gmra.mxu0 %v208
      %v784 = vpop.f32.mrf.mxu0
      %v785 = vadd.f32 %v395, %v784
      %786 = vmatmul.f32.gmra.mxu0 %v209
      %v787 = vpop.f32.mrf.mxu0
      %v788 = vadd.f32 %v395, %v787
      %789 = vmatmul.f32.gmra.mxu0 %v210
      %v790 = vpop.f32.mrf.mxu0
      %v791 = vadd.f32 %v395, %v790
      %792 = vmatmul.f32.gmra.mxu0 %v211
      %v793 = vpop.f32.mrf.mxu0
      %v794 = vadd.f32 %v395, %v793
      %795 = vmatmul.f32.gmra.mxu0 %v212
      %v796 = vpop.f32.mrf.mxu0
      %v797 = vadd.f32 %v395, %v796
      %798 = vmatmul.f32.gmra.mxu0 %v213
      %v799 = vpop.f32.mrf.mxu0
      %v800 = vadd.f32 %v395, %v799
      %801 = vmatmul.f32.gmra.mxu0 %v214
      %v802 = vpop.f32.mrf.mxu0
      %v803 = vadd.f32 %v395, %v802
      %804 = vmatmul.f32.gmra.mxu0 %v215
      %v805 = vpop.f32.mrf.mxu0
      %v806 = vadd.f32 %v395, %v805
      %807 = vmatmul.f32.gmra.mxu0 %v216
      %v808 = vpop.f32.mrf.mxu0
      %v809 = vadd.f32 %v395, %v808
      %810 = vmatmul.f32.gmra.mxu0 %v217
      %v811 = vpop.f32.mrf.mxu0
      %v812 = vadd.f32 %v395, %v811
      %813 = vmatmul.f32.gmra.mxu0 %v218
      %v814 = vpop.f32.mrf.mxu0
      %v815 = vadd.f32 %v395, %v814
      %816 = vmatmul.f32.gmra.mxu0 %v219
      %v817 = vpop.f32.mrf.mxu0
      %v818 = vadd.f32 %v395, %v817
      %819 = vmatmul.f32.gmra.mxu0 %v220
      %v820 = vpop.f32.mrf.mxu0
      %v821 = vadd.f32 %v395, %v820
      %822 = vmatmul.f32.gmra.mxu0 %v221
      %v823 = vpop.f32.mrf.mxu0
      %v824 = vadd.f32 %v395, %v823
      %825 = vmatmul.f32.gmra.mxu0 %v222
      %v826 = vpop.f32.mrf.mxu0
      %v827 = vadd.f32 %v395, %v826
      %828 = vmatmul.f32.gmra.mxu0 %v223
      %v829 = vpop.f32.mrf.mxu0
      %v830 = vadd.f32 %v395, %v829
      %831 = vmatmul.f32.gmra.mxu0 %v224
      %v832 = vpop.f32.mrf.mxu0
      %v833 = vadd.f32 %v395, %v832
      %834 = vmatmul.f32.gmra.mxu0 %v225
      %v835 = vpop.f32.mrf.mxu0
      %v836 = vadd.f32 %v395, %v835
      %837 = vmatmul.f32.gmra.mxu0 %v226
      %v838 = vpop.f32.mrf.mxu0
      %v839 = vadd.f32 %v395, %v838
      %840 = vmatmul.f32.gmra.mxu0 %v227
      %v841 = vpop.f32.mrf.mxu0
      %v842 = vadd.f32 %v395, %v841
      %843 = vmatmul.f32.gmra.mxu0 %v228
      %v844 = vpop.f32.mrf.mxu0
      %v845 = vadd.f32 %v395, %v844
      %846 = vmatmul.f32.gmra.mxu0 %v229
      %v847 = vpop.f32.mrf.mxu0
      %v848 = vadd.f32 %v395, %v847
      %849 = vdwg.mxu0
      %850 = vmatpush.msra.mxu0 %v359
      %851 = vmatpush.msra.mxu0 %v357
      %852 = vmatpush.msra.mxu0 %v355
      %853 = vmatpush.msra.mxu0 %v353
      %854 = vmatpush.msra.mxu0 %v351
      %855 = vmatpush.msra.mxu0 %v349
      %856 = vmatpush.msra.mxu0 %v347
      %857 = vmatpush.msra.mxu0 %v345
      %858 = vmatpush.msra.mxu0 %v343
      %859 = vmatpush.msra.mxu0 %v341
      %860 = vmatpush.msra.mxu0 %v339
      %861 = vmatpush.msra.mxu0 %v337
      %862 = vmatpush.msra.mxu0 %v335
      %863 = vmatpush.msra.mxu0 %v333
      %864 = vmatpush.msra.mxu0 %v331
      %865 = vmatpush.msra.mxu0 %v329
      %866 = vmatmul.f32.gmra.mxu0 %v231
      %v867 = vpop.f32.mrf.mxu0
      %v868 = vadd.f32 %v755, %v867
      %869 = vmatmul.f32.gmra.mxu0 %v232
      %v870 = vpop.f32.mrf.mxu0
      %v871 = vadd.f32 %v758, %v870
      %872 = vmatmul.f32.gmra.mxu0 %v233
      %v873 = vpop.f32.mrf.mxu0
      %v874 = vadd.f32 %v761, %v873
      %875 = vmatmul.f32.gmra.mxu0 %v234
      %v876 = vpop.f32.mrf.mxu0
      %v877 = vadd.f32 %v764, %v876
      %878 = vmatmul.f32.gmra.mxu0 %v235
      %v879 = vpop.f32.mrf.mxu0
      %v880 = vadd.f32 %v767, %v879
      %881 = vmatmul.f32.gmra.mxu0 %v236
      %v882 = vpop.f32.mrf.mxu0
      %v883 = vadd.f32 %v770, %v882
      %884 = vmatmul.f32.gmra.mxu0 %v237
      %v885 = vpop.f32.mrf.mxu0
      %v886 = vadd.f32 %v773, %v885
      %887 = vmatmul.f32.gmra.mxu0 %v238
      %v888 = vpop.f32.mrf.mxu0
      %v889 = vadd.f32 %v776, %v888
      %890 = vmatmul.f32.gmra.mxu0 %v239
      %v891 = vpop.f32.mrf.mxu0
      %v892 = vadd.f32 %v779, %v891
      %893 = vmatmul.f32.gmra.mxu0 %v240
      %v894 = vpop.f32.mrf.mxu0
      %v895 = vadd.f32 %v782, %v894
      %896 = vmatmul.f32.gmra.mxu0 %v241
      %v897 = vpop.f32.mrf.mxu0
      %v898 = vadd.f32 %v785, %v897
      %899 = vmatmul.f32.gmra.mxu0 %v242
      %v900 = vpop.f32.mrf.mxu0
      %v901 = vadd.f32 %v788, %v900
      %902 = vmatmul.f32.gmra.mxu0 %v243
      %v903 = vpop.f32.mrf.mxu0
      %v904 = vadd.f32 %v791, %v903
      %905 = vmatmul.f32.gmra.mxu0 %v244
      %v906 = vpop.f32.mrf.mxu0
      %v907 = vadd.f32 %v794, %v906
      %908 = vmatmul.f32.gmra.mxu0 %v245
      %v909 = vpop.f32.mrf.mxu0
      %v910 = vadd.f32 %v797, %v909
      %911 = vmatmul.f32.gmra.mxu0 %v246
      %v912 = vpop.f32.mrf.mxu0
      %v913 = vadd.f32 %v800, %v912
      %914 = vmatmul.f32.gmra.mxu0 %v247
      %v915 = vpop.f32.mrf.mxu0
      %v916 = vadd.f32 %v803, %v915
      %917 = vmatmul.f32.gmra.mxu0 %v248
      %v918 = vpop.f32.mrf.mxu0
      %v919 = vadd.f32 %v806, %v918
      %920 = vmatmul.f32.gmra.mxu0 %v249
      %v921 = vpop.f32.mrf.mxu0
      %v922 = vadd.f32 %v809, %v921
      %923 = vmatmul.f32.gmra.mxu0 %v250
      %v924 = vpop.f32.mrf.mxu0
      %v925 = vadd.f32 %v812, %v924
      %926 = vmatmul.f32.gmra.mxu0 %v251
      %v927 = vpop.f32.mrf.mxu0
      %v928 = vadd.f32 %v815, %v927
      %929 = vmatmul.f32.gmra.mxu0 %v252
      %v930 = vpop.f32.mrf.mxu0
      %v931 = vadd.f32 %v818, %v930
      %932 = vmatmul.f32.gmra.mxu0 %v253
      %v933 = vpop.f32.mrf.mxu0
      %v934 = vadd.f32 %v821, %v933
      %935 = vmatmul.f32.gmra.mxu0 %v254
      %v936 = vpop.f32.mrf.mxu0
      %v937 = vadd.f32 %v824, %v936
      %938 = vmatmul.f32.gmra.mxu0 %v255
      %v939 = vpop.f32.mrf.mxu0
      %v940 = vadd.f32 %v827, %v939
      %941 = vmatmul.f32.gmra.mxu0 %v256
      %v942 = vpop.f32.mrf.mxu0
      %v943 = vadd.f32 %v830, %v942
      %944 = vmatmul.f32.gmra.mxu0 %v257
      %v945 = vpop.f32.mrf.mxu0
      %v946 = vadd.f32 %v833, %v945
      %947 = vmatmul.f32.gmra.mxu0 %v258
      %v948 = vpop.f32.mrf.mxu0
      %v949 = vadd.f32 %v836, %v948
      %950 = vmatmul.f32.gmra.mxu0 %v259
      %v951 = vpop.f32.mrf.mxu0
      %v952 = vadd.f32 %v839, %v951
      %953 = vmatmul.f32.gmra.mxu0 %v260
      %v954 = vpop.f32.mrf.mxu0
      %v955 = vadd.f32 %v842, %v954
      %956 = vmatmul.f32.gmra.mxu0 %v261
      %v957 = vpop.f32.mrf.mxu0
      %v958 = vadd.f32 %v845, %v957
      %959 = vmatmul.f32.gmra.mxu0 %v262
      %v960 = vpop.f32.mrf.mxu0
      %v961 = vadd.f32 %v848, %v960
      %962 = vdwg.mxu0
      %963 = vmatpush.msra.mxu0 %v391
      %964 = vmatpush.msra.mxu0 %v389
      %965 = vmatpush.msra.mxu0 %v387
      %966 = vmatpush.msra.mxu0 %v385
      %967 = vmatpush.msra.mxu0 %v383
      %968 = vmatpush.msra.mxu0 %v381
      %969 = vmatpush.msra.mxu0 %v379
      %970 = vmatpush.msra.mxu0 %v377
      %971 = vmatpush.msra.mxu0 %v375
      %972 = vmatpush.msra.mxu0 %v373
      %973 = vmatpush.msra.mxu0 %v371
      %974 = vmatpush.msra.mxu0 %v369
      %975 = vmatpush.msra.mxu0 %v367
      %976 = vmatpush.msra.mxu0 %v365
      %977 = vmatpush.msra.mxu0 %v363
      %978 = vmatpush.msra.mxu0 %v361
      %979 = vmatmul.f32.gmra.mxu0 %v264
      %v980 = vpop.f32.mrf.mxu0
      %v981 = vadd.f32 %v868, %v980
      %982 = vmatmul.f32.gmra.mxu0 %v265
      %v983 = vpop.f32.mrf.mxu0
      %v984 = vadd.f32 %v871, %v983
      %985 = vmatmul.f32.gmra.mxu0 %v266
      %v986 = vpop.f32.mrf.mxu0
      %v987 = vadd.f32 %v874, %v986
      %988 = vmatmul.f32.gmra.mxu0 %v267
      %v989 = vpop.f32.mrf.mxu0
      %v990 = vadd.f32 %v877, %v989
      %991 = vmatmul.f32.gmra.mxu0 %v268
      %v992 = vpop.f32.mrf.mxu0
      %v993 = vadd.f32 %v880, %v992
      %994 = vmatmul.f32.gmra.mxu0 %v269
      %v995 = vpop.f32.mrf.mxu0
      %v996 = vadd.f32 %v883, %v995
      %997 = vmatmul.f32.gmra.mxu0 %v270
      %v998 = vpop.f32.mrf.mxu0
      %v999 = vadd.f32 %v886, %v998
      %1000 = vmatmul.f32.gmra.mxu0 %v271
      %v1001 = vpop.f32.mrf.mxu0
      %v1002 = vadd.f32 %v889, %v1001
      %1003 = vmatmul.f32.gmra.mxu0 %v272
      %v1004 = vpop.f32.mrf.mxu0
      %v1005 = vadd.f32 %v892, %v1004
      %1006 = vmatmul.f32.gmra.mxu0 %v273
      %v1007 = vpop.f32.mrf.mxu0
      %v1008 = vadd.f32 %v895, %v1007
      %1009 = vmatmul.f32.gmra.mxu0 %v274
      %v1010 = vpop.f32.mrf.mxu0
      %v1011 = vadd.f32 %v898, %v1010
      %1012 = vmatmul.f32.gmra.mxu0 %v275
      %v1013 = vpop.f32.mrf.mxu0
      %v1014 = vadd.f32 %v901, %v1013
      %1015 = vmatmul.f32.gmra.mxu0 %v276
      %v1016 = vpop.f32.mrf.mxu0
      %v1017 = vadd.f32 %v904, %v1016
      %1018 = vmatmul.f32.gmra.mxu0 %v277
      %v1019 = vpop.f32.mrf.mxu0
      %v1020 = vadd.f32 %v907, %v1019
      %1021 = vmatmul.f32.gmra.mxu0 %v278
      %v1022 = vpop.f32.mrf.mxu0
      %v1023 = vadd.f32 %v910, %v1022
      %1024 = vmatmul.f32.gmra.mxu0 %v279
      %v1025 = vpop.f32.mrf.mxu0
      %v1026 = vadd.f32 %v913, %v1025
      %1027 = vmatmul.f32.gmra.mxu0 %v280
      %v1028 = vpop.f32.mrf.mxu0
      %v1029 = vadd.f32 %v916, %v1028
      %1030 = vmatmul.f32.gmra.mxu0 %v281
      %v1031 = vpop.f32.mrf.mxu0
      %v1032 = vadd.f32 %v919, %v1031
      %1033 = vmatmul.f32.gmra.mxu0 %v282
      %v1034 = vpop.f32.mrf.mxu0
      %v1035 = vadd.f32 %v922, %v1034
      %1036 = vmatmul.f32.gmra.mxu0 %v283
      %v1037 = vpop.f32.mrf.mxu0
      %v1038 = vadd.f32 %v925, %v1037
      %1039 = vmatmul.f32.gmra.mxu0 %v284
      %v1040 = vpop.f32.mrf.mxu0
      %v1041 = vadd.f32 %v928, %v1040
      %1042 = vmatmul.f32.gmra.mxu0 %v285
      %v1043 = vpop.f32.mrf.mxu0
      %v1044 = vadd.f32 %v931, %v1043
      %1045 = vmatmul.f32.gmra.mxu0 %v286
      %v1046 = vpop.f32.mrf.mxu0
      %v1047 = vadd.f32 %v934, %v1046
      %1048 = vmatmul.f32.gmra.mxu0 %v287
      %v1049 = vpop.f32.mrf.mxu0
      %v1050 = vadd.f32 %v937, %v1049
      %1051 = vmatmul.f32.gmra.mxu0 %v288
      %v1052 = vpop.f32.mrf.mxu0
      %v1053 = vadd.f32 %v940, %v1052
      %1054 = vmatmul.f32.gmra.mxu0 %v289
      %v1055 = vpop.f32.mrf.mxu0
      %v1056 = vadd.f32 %v943, %v1055
      %1057 = vmatmul.f32.gmra.mxu0 %v290
      %v1058 = vpop.f32.mrf.mxu0
      %v1059 = vadd.f32 %v946, %v1058
      %1060 = vmatmul.f32.gmra.mxu0 %v291
      %v1061 = vpop.f32.mrf.mxu0
      %v1062 = vadd.f32 %v949, %v1061
      %1063 = vmatmul.f32.gmra.mxu0 %v292
      %v1064 = vpop.f32.mrf.mxu0
      %v1065 = vadd.f32 %v952, %v1064
      %1066 = vmatmul.f32.gmra.mxu0 %v293
      %v1067 = vpop.f32.mrf.mxu0
      %v1068 = vadd.f32 %v955, %v1067
      %1069 = vmatmul.f32.gmra.mxu0 %v294
      %v1070 = vpop.f32.mrf.mxu0
      %v1071 = vadd.f32 %v958, %v1070
      %1072 = vmatmul.f32.gmra.mxu0 %v295
      %v1073 = vpop.f32.mrf.mxu0
      %v1074 = vadd.f32 %v961, %v1073
      %1075 = vdwg.mxu0
      %v1076 = vmax.f32 %v642, 0.0
      %v1077 = vmax.f32 %v645, 0.0
      %v1078 = vmax.f32 %v648, 0.0
      %v1079 = vmax.f32 %v651, 0.0
      %v1080 = vmax.f32 %v654, 0.0
      %v1081 = vmax.f32 %v657, 0.0
      %v1082 = vmax.f32 %v660, 0.0
      %v1083 = vmax.f32 %v663, 0.0
      %v1084 = vmax.f32 %v666, 0.0
      %v1085 = vmax.f32 %v669, 0.0
      %v1086 = vmax.f32 %v672, 0.0
      %v1087 = vmax.f32 %v675, 0.0
      %v1088 = vmax.f32 %v678, 0.0
      %v1089 = vmax.f32 %v681, 0.0
      %v1090 = vmax.f32 %v684, 0.0
      %v1091 = vmax.f32 %v687, 0.0
      %v1092 = vmax.f32 %v690, 0.0
      %v1093 = vmax.f32 %v693, 0.0
      %v1094 = vmax.f32 %v696, 0.0
      %v1095 = vmax.f32 %v699, 0.0
      %v1096 = vmax.f32 %v702, 0.0
      %v1097 = vmax.f32 %v705, 0.0
      %v1098 = vmax.f32 %v708, 0.0
      %v1099 = vmax.f32 %v711, 0.0
      %v1100 = vmax.f32 %v714, 0.0
      %v1101 = vmax.f32 %v717, 0.0
      %v1102 = vmax.f32 %v720, 0.0
      %v1103 = vmax.f32 %v723, 0.0
      %v1104 = vmax.f32 %v726, 0.0
      %v1105 = vmax.f32 %v729, 0.0
      %v1106 = vmax.f32 %v732, 0.0
      %v1107 = vmax.f32 %v735, 0.0
      %vm1140 = vcmask 1040384
      %v1141 = vrot.slane %v1076, 7
      %v1142 = vrot.slane %v1077, 7
      %v1143 = vsel %vm1140, %v1141, %v1142
      %v1144 = vrot.slane %v1078, 7
      %v1145 = vrot.slane %v1079, 7
      %v1146 = vsel %vm1140, %v1144, %v1145
      %v1147 = vrot.slane %v1080, 7
      %v1148 = vrot.slane %v1081, 7
      %v1149 = vsel %vm1140, %v1147, %v1148
      %v1150 = vrot.slane %v1082, 7
      %v1151 = vrot.slane %v1083, 7
      %v1152 = vsel %vm1140, %v1150, %v1151
      %v1153 = vrot.slane %v1084, 7
      %v1154 = vrot.slane %v1085, 7
      %v1155 = vsel %vm1140, %v1153, %v1154
      %v1156 = vrot.slane %v1086, 7
      %v1157 = vrot.slane %v1087, 7
      %v1158 = vsel %vm1140, %v1156, %v1157
      %v1159 = vrot.slane %v1088, 7
      %v1160 = vrot.slane %v1089, 7
      %v1161 = vsel %vm1140, %v1159, %v1160
      %v1162 = vrot.slane %v1090, 7
      %v1163 = vrot.slane %v1091, 7
      %v1164 = vsel %vm1140, %v1162, %v1163
      %v1165 = vrot.slane %v1092, 7
      %v1166 = vrot.slane %v1093, 7
      %v1167 = vsel %vm1140, %v1165, %v1166
      %v1168 = vrot.slane %v1094, 7
      %v1169 = vrot.slane %v1095, 7
      %v1170 = vsel %vm1140, %v1168, %v1169
      %v1171 = vrot.slane %v1096, 7
      %v1172 = vrot.slane %v1097, 7
      %v1173 = vsel %vm1140, %v1171, %v1172
      %v1174 = vrot.slane %v1098, 7
      %v1175 = vrot.slane %v1099, 7
      %v1176 = vsel %vm1140, %v1174, %v1175
      %v1177 = vrot.slane %v1100, 7
      %v1178 = vrot.slane %v1101, 7
      %v1179 = vsel %vm1140, %v1177, %v1178
      %v1180 = vrot.slane %v1102, 7
      %v1181 = vrot.slane %v1103, 7
      %v1182 = vsel %vm1140, %v1180, %v1181
      %v1183 = vrot.slane %v1104, 7
      %v1184 = vrot.slane %v1105, 7
      %v1185 = vsel %vm1140, %v1183, %v1184
      %v1186 = vrot.slane %v1106, 7
      %v1187 = vrot.slane %v1107, 7
      %v1188 = vsel %vm1140, %v1186, %v1187
      %v1221 = vsel %vm1140, 0.0, %v1141
      %v1222 = vsel %vm1140, 0.0, %v1144
      %v1223 = vsel %vm1140, 0.0, %v1147
      %v1224 = vsel %vm1140, 0.0, %v1150
      %v1225 = vsel %vm1140, 0.0, %v1153
      %v1226 = vsel %vm1140, 0.0, %v1156
      %v1227 = vsel %vm1140, 0.0, %v1159
      %v1228 = vsel %vm1140, 0.0, %v1162
      %v1229 = vsel %vm1140, 0.0, %v1165
      %v1230 = vsel %vm1140, 0.0, %v1168
      %v1231 = vsel %vm1140, 0.0, %v1171
      %v1232 = vsel %vm1140, 0.0, %v1174
      %v1233 = vsel %vm1140, 0.0, %v1177
      %v1234 = vsel %vm1140, 0.0, %v1180
      %v1235 = vsel %vm1140, 0.0, %v1183
      %v1236 = vsel %vm1140, 0.0, %v1186
      %vm1237 = vcmask 1046528
      %v1238 = vrot.slane %v1076, 1
      %v1239 = vrot.slane %v1077, 1
      %v1240 = vsel %vm1237, %v1238, %v1239
      %v1241 = vrot.slane %v1078, 1
      %v1242 = vrot.slane %v1079, 1
      %v1243 = vsel %vm1237, %v1241, %v1242
      %v1244 = vrot.slane %v1080, 1
      %v1245 = vrot.slane %v1081, 1
      %v1246 = vsel %vm1237, %v1244, %v1245
      %v1247 = vrot.slane %v1082, 1
      %v1248 = vrot.slane %v1083, 1
      %v1249 = vsel %vm1237, %v1247, %v1248
      %v1250 = vrot.slane %v1084, 1
      %v1251 = vrot.slane %v1085, 1
      %v1252 = vsel %vm1237, %v1250, %v1251
      %v1253 = vrot.slane %v1086, 1
      %v1254 = vrot.slane %v1087, 1
      %v1255 = vsel %vm1237, %v1253, %v1254
      %v1256 = vrot.slane %v1088, 1
      %v1257 = vrot.slane %v1089, 1
      %v1258 = vsel %vm1237, %v1256, %v1257
      %v1259 = vrot.slane %v1090, 1
      %v1260 = vrot.slane %v1091, 1
      %v1261 = vsel %vm1237, %v1259, %v1260
      %v1262 = vrot.slane %v1092, 1
      %v1263 = vrot.slane %v1093, 1
      %v1264 = vsel %vm1237, %v1262, %v1263
      %v1265 = vrot.slane %v1094, 1
      %v1266 = vrot.slane %v1095, 1
      %v1267 = vsel %vm1237, %v1265, %v1266
      %v1268 = vrot.slane %v1096, 1
      %v1269 = vrot.slane %v1097, 1
      %v1270 = vsel %vm1237, %v1268, %v1269
      %v1271 = vrot.slane %v1098, 1
      %v1272 = vrot.slane %v1099, 1
      %v1273 = vsel %vm1237, %v1271, %v1272
      %v1274 = vrot.slane %v1100, 1
      %v1275 = vrot.slane %v1101, 1
      %v1276 = vsel %vm1237, %v1274, %v1275
      %v1277 = vrot.slane %v1102, 1
      %v1278 = vrot.slane %v1103, 1
      %v1279 = vsel %vm1237, %v1277, %v1278
      %v1280 = vrot.slane %v1104, 1
      %v1281 = vrot.slane %v1105, 1
      %v1282 = vsel %vm1237, %v1280, %v1281
      %v1283 = vrot.slane %v1106, 1
      %v1284 = vrot.slane %v1107, 1
      %v1285 = vsel %vm1237, %v1283, %v1284
      %v1318 = vsel %vm1237, %v1239, 0.0
      %v1319 = vsel %vm1237, %v1242, 0.0
      %v1320 = vsel %vm1237, %v1245, 0.0
      %v1321 = vsel %vm1237, %v1248, 0.0
      %v1322 = vsel %vm1237, %v1251, 0.0
      %v1323 = vsel %vm1237, %v1254, 0.0
      %v1324 = vsel %vm1237, %v1257, 0.0
      %v1325 = vsel %vm1237, %v1260, 0.0
      %v1326 = vsel %vm1237, %v1263, 0.0
      %v1327 = vsel %vm1237, %v1266, 0.0
      %v1328 = vsel %vm1237, %v1269, 0.0
      %v1329 = vsel %vm1237, %v1272, 0.0
      %v1330 = vsel %vm1237, %v1275, 0.0
      %v1331 = vsel %vm1237, %v1278, 0.0
      %v1332 = vsel %vm1237, %v1281, 0.0
      %v1333 = vsel %vm1237, %v1284, 0.0
      %v1334 = vld [vmem:[%s3] sm:$0xff]
      %v1335 = vld [vmem:[%s3 + $0x8] sm:$0xff]
      %v1336 = vld [vmem:[%s3 + $0x10] sm:$0xff]
      %v1337 = vld [vmem:[%s3 + $0x18] sm:$0xff]
      %v1338 = vld [vmem:[%s3 + $0x20] sm:$0xff]
      %v1339 = vld [vmem:[%s3 + $0x28] sm:$0xff]
      %v1340 = vld [vmem:[%s3 + $0x30] sm:$0xff]
      %v1341 = vld [vmem:[%s3 + $0x38] sm:$0xff]
      %v1342 = vld [vmem:[%s3 + $0x40] sm:$0xff]
      %v1343 = vld [vmem:[%s3 + $0x48] sm:$0xff]
      %v1344 = vld [vmem:[%s3 + $0x50] sm:$0xff]
      %v1345 = vld [vmem:[%s3 + $0x58] sm:$0xff]
      %v1346 = vld [vmem:[%s3 + $0x60] sm:$0xff]
      %v1347 = vld [vmem:[%s3 + $0x68] sm:$0xff]
      %v1348 = vld [vmem:[%s3 + $0x70] sm:$0xff]
      %v1349 = vld [vmem:[%s3 + $0x78] sm:$0xff]
      %v1350 = vld [vmem:[%s3 + $0x80] sm:$0xff]
      %v1351 = vld [vmem:[%s3 + $0x88] sm:$0xff]
      %v1352 = vld [vmem:[%s3 + $0x90] sm:$0xff]
      %v1353 = vld [vmem:[%s3 + $0x98] sm:$0xff]
      %v1354 = vld [vmem:[%s3 + $0xa0] sm:$0xff]
      %v1355 = vld [vmem:[%s3 + $0xa8] sm:$0xff]
      %v1356 = vld [vmem:[%s3 + $0xb0] sm:$0xff]
      %v1357 = vld [vmem:[%s3 + $0xb8] sm:$0xff]
      %v1358 = vld [vmem:[%s3 + $0xc0] sm:$0xff]
      %v1359 = vld [vmem:[%s3 + $0xc8] sm:$0xff]
      %v1360 = vld [vmem:[%s3 + $0xd0] sm:$0xff]
      %v1361 = vld [vmem:[%s3 + $0xd8] sm:$0xff]
      %v1362 = vld [vmem:[%s3 + $0xe0] sm:$0xff]
      %v1363 = vld [vmem:[%s3 + $0xe8] sm:$0xff]
      %v1364 = vld [vmem:[%s3 + $0xf0] sm:$0xff]
      %v1365 = vld [vmem:[%s3 + $0xf8] sm:$0xff]
      %v1366 = vld [vmem:[%s3 + $0x100] sm:$0xff]
      %v1367 = vld [vmem:[%s3 + $0x108] sm:$0xff]
      %v1368 = vld [vmem:[%s3 + $0x110] sm:$0xff]
      %v1369 = vld [vmem:[%s3 + $0x118] sm:$0xff]
      %v1370 = vld [vmem:[%s3 + $0x120] sm:$0xff]
      %v1371 = vld [vmem:[%s3 + $0x128] sm:$0xff]
      %v1372 = vld [vmem:[%s3 + $0x130] sm:$0xff]
      %v1373 = vld [vmem:[%s3 + $0x138] sm:$0xff]
      %v1374 = vld [vmem:[%s3 + $0x140] sm:$0xff]
      %v1375 = vld [vmem:[%s3 + $0x148] sm:$0xff]
      %v1376 = vld [vmem:[%s3 + $0x150] sm:$0xff]
      %v1377 = vld [vmem:[%s3 + $0x158] sm:$0xff]
      %v1378 = vld [vmem:[%s3 + $0x160] sm:$0xff]
      %v1379 = vld [vmem:[%s3 + $0x168] sm:$0xff]
      %v1380 = vld [vmem:[%s3 + $0x170] sm:$0xff]
      %v1381 = vld [vmem:[%s3 + $0x178] sm:$0xff]
      %1382 = vmatpush.msra.mxu0 %v1349
      %1383 = vmatpush.msra.mxu0 %v1348
      %1384 = vmatpush.msra.mxu0 %v1347
      %1385 = vmatpush.msra.mxu0 %v1346
      %1386 = vmatpush.msra.mxu0 %v1345
      %1387 = vmatpush.msra.mxu0 %v1344
      %1388 = vmatpush.msra.mxu0 %v1343
      %1389 = vmatpush.msra.mxu0 %v1342
      %1390 = vmatpush.msra.mxu0 %v1341
      %1391 = vmatpush.msra.mxu0 %v1340
      %1392 = vmatpush.msra.mxu0 %v1339
      %1393 = vmatpush.msra.mxu0 %v1338
      %1394 = vmatpush.msra.mxu0 %v1337
      %1395 = vmatpush.msra.mxu0 %v1336
      %1396 = vmatpush.msra.mxu0 %v1335
      %1397 = vmatpush.msra.mxu0 %v1334
      %1398 = vmatmul.f32.gmra.mxu0 0.0
      %v1399 = vpop.f32.mrf.mxu0
      %v1400 = vadd.f32 0.0, %v1399
      %1401 = vmatmul.f32.gmra.mxu0 0.0
      %v1402 = vpop.f32.mrf.mxu0
      %v1403 = vadd.f32 0.0, %v1402
      %1404 = vmatmul.f32.gmra.mxu0 %v1221
      %v1405 = vpop.f32.mrf.mxu0
      %v1406 = vadd.f32 0.0, %v1405
      %1407 = vmatmul.f32.gmra.mxu0 %v1143
      %v1408 = vpop.f32.mrf.mxu0
      %v1409 = vadd.f32 0.0, %v1408
      %1410 = vmatmul.f32.gmra.mxu0 %v1222
      %v1411 = vpop.f32.mrf.mxu0
      %v1412 = vadd.f32 0.0, %v1411
      %1413 = vmatmul.f32.gmra.mxu0 %v1146
      %v1414 = vpop.f32.mrf.mxu0
      %v1415 = vadd.f32 0.0, %v1414
      %1416 = vmatmul.f32.gmra.mxu0 %v1223
      %v1417 = vpop.f32.mrf.mxu0
      %v1418 = vadd.f32 0.0, %v1417
      %1419 = vmatmul.f32.gmra.mxu0 %v1149
      %v1420 = vpop.f32.mrf.mxu0
      %v1421 = vadd.f32 0.0, %v1420
      %1422 = vmatmul.f32.gmra.mxu0 %v1224
      %v1423 = vpop.f32.mrf.mxu0
      %v1424 = vadd.f32 0.0, %v1423
      %1425 = vmatmul.f32.gmra.mxu0 %v1152
      %v1426 = vpop.f32.mrf.mxu0
      %v1427 = vadd.f32 0.0, %v1426
      %1428 = vmatmul.f32.gmra.mxu0 %v1225
      %v1429 = vpop.f32.mrf.mxu0
      %v1430 = vadd.f32 0.0, %v1429
      %1431 = vmatmul.f32.gmra.mxu0 %v1155
      %v1432 = vpop.f32.mrf.mxu0
      %v1433 = vadd.f32 0.0, %v1432
      %1434 = vmatmul.f32.gmra.mxu0 %v1226
      %v1435 = vpop.f32.mrf.mxu0
      %v1436 = vadd.f32 0.0, %v1435
      %1437 = vmatmul.f32.gmra.mxu0 %v1158
      %v1438 = vpop.f32.mrf.mxu0
      %v1439 = vadd.f32 0.0, %v1438
      %1440 = vmatmul.f32.gmra.mxu0 %v1227
      %v1441 = vpop.f32.mrf.mxu0
      %v1442 = vadd.f32 0.0, %v1441
      %1443 = vmatmul.f32.gmra.mxu0 %v1161
      %v1444 = vpop.f32.mrf.mxu0
      %v1445 = vadd.f32 0.0, %v1444
      %1446 = vmatmul.f32.gmra.mxu0 %v1228
      %v1447 = vpop.f32.mrf.mxu0
      %v1448 = vadd.f32 0.0, %v1447
      %1449 = vmatmul.f32.gmra.mxu0 %v1164
      %v1450 = vpop.f32.mrf.mxu0
      %v1451 = vadd.f32 0.0, %v1450
      %1452 = vmatmul.f32.gmra.mxu0 %v1229
      %v1453 = vpop.f32.mrf.mxu0
      %v1454 = vadd.f32 0.0, %v1453
      %1455 = vmatmul.f32.gmra.mxu0 %v1167
      %v1456 = vpop.f32.mrf.mxu0
      %v1457 = vadd.f32 0.0, %v1456
      %1458 = vmatmul.f32.gmra.mxu0 %v1230
      %v1459 = vpop.f32.mrf.mxu0
      %v1460 = vadd.f32 0.0, %v1459
      %1461 = vmatmul.f32.gmra.mxu0 %v1170
      %v1462 = vpop.f32.mrf.mxu0
      %v1463 = vadd.f32 0.0, %v1462
      %1464 = vmatmul.f32.gmra.mxu0 %v1231
      %v1465 = vpop.f32.mrf.mxu0
      %v1466 = vadd.f32 0.0, %v1465
      %1467 = vmatmul.f32.gmra.mxu0 %v1173
      %v1468 = vpop.f32.mrf.mxu0
      %v1469 = vadd.f32 0.0, %v1468
      %1470 = vmatmul.f32.gmra.mxu0 %v1232
      %v1471 = vpop.f32.mrf.mxu0
      %v1472 = vadd.f32 0.0, %v1471
      %1473 = vmatmul.f32.gmra.mxu0 %v1176
      %v1474 = vpop.f32.mrf.mxu0
      %v1475 = vadd.f32 0.0, %v1474
      %1476 = vmatmul.f32.gmra.mxu0 %v1233
      %v1477 = vpop.f32.mrf.mxu0
      %v1478 = vadd.f32 0.0, %v1477
      %1479 = vmatmul.f32.gmra.mxu0 %v1179
      %v1480 = vpop.f32.mrf.mxu0
      %v1481 = vadd.f32 0.0, %v1480
      %1482 = vmatmul.f32.gmra.mxu0 %v1234
      %v1483 = vpop.f32.mrf.mxu0
      %v1484 = vadd.f32 0.0, %v1483
      %1485 = vmatmul.f32.gmra.mxu0 %v1182
      %v1486 = vpop.f32.mrf.mxu0
      %v1487 = vadd.f32 0.0, %v1486
      %1488 = vmatmul.f32.gmra.mxu0 %v1235
      %v1489 = vpop.f32.mrf.mxu0
      %v1490 = vadd.f32 0.0, %v1489
      %1491 = vmatmul.f32.gmra.mxu0 %v1185
      %v1492 = vpop.f32.mrf.mxu0
      %v1493 = vadd.f32 0.0, %v1492
      %1494 = vdwg.mxu0
      %1495 = vmatpush.msra.mxu0 %v1365
      %1496 = vmatpush.msra.mxu0 %v1364
      %1497 = vmatpush.msra.mxu0 %v1363
      %1498 = vmatpush.msra.mxu0 %v1362
      %1499 = vmatpush.msra.mxu0 %v1361
      %1500 = vmatpush.msra.mxu0 %v1360
      %1501 = vmatpush.msra.mxu0 %v1359
      %1502 = vmatpush.msra.mxu0 %v1358
      %1503 = vmatpush.msra.mxu0 %v1357
      %1504 = vmatpush.msra.mxu0 %v1356
      %1505 = vmatpush.msra.mxu0 %v1355
      %1506 = vmatpush.msra.mxu0 %v1354
      %1507 = vmatpush.msra.mxu0 %v1353
      %1508 = vmatpush.msra.mxu0 %v1352
      %1509 = vmatpush.msra.mxu0 %v1351
      %1510 = vmatpush.msra.mxu0 %v1350
      %1511 = vmatmul.f32.gmra.mxu0 0.0
      %v1512 = vpop.f32.mrf.mxu0
      %v1513 = vadd.f32 %v1400, %v1512
      %1514 = vmatmul.f32.gmra.mxu0 0.0
      %v1515 = vpop.f32.mrf.mxu0
      %v1516 = vadd.f32 %v1403, %v1515
      %1517 = vmatmul.f32.gmra.mxu0 %v1076
      %v1518 = vpop.f32.mrf.mxu0
      %v1519 = vadd.f32 %v1406, %v1518
      %1520 = vmatmul.f32.gmra.mxu0 %v1077
      %v1521 = vpop.f32.mrf.mxu0
      %v1522 = vadd.f32 %v1409, %v1521
      %1523 = vmatmul.f32.gmra.mxu0 %v1078
      %v1524 = vpop.f32.mrf.mxu0
      %v1525 = vadd.f32 %v1412, %v1524
      %1526 = vmatmul.f32.gmra.mxu0 %v1079
      %v1527 = vpop.f32.mrf.mxu0
      %v1528 = vadd.f32 %v1415, %v1527
      %1529 = vmatmul.f32.gmra.mxu0 %v1080
      %v1530 = vpop.f32.mrf.mxu0
      %v1531 = vadd.f32 %v1418, %v1530
      %1532 = vmatmul.f32.gmra.mxu0 %v1081
      %v1533 = vpop.f32.mrf.mxu0
      %v1534 = vadd.f32 %v1421, %v1533
      %1535 = vmatmul.f32.gmra.mxu0 %v1082
      %v1536 = vpop.f32.mrf.mxu0
      %v1537 = vadd.f32 %v1424, %v1536
      %1538 = vmatmul.f32.gmra.mxu0 %v1083
      %v1539 = vpop.f32.mrf.mxu0
      %v1540 = vadd.f32 %v1427, %v1539
      %1541 = vmatmul.f32.gmra.mxu0 %v1084
      %v1542 = vpop.f32.mrf.mxu0
      %v1543 = vadd.f32 %v1430, %v1542
      %1544 = vmatmul.f32.gmra.mxu0 %v1085
      %v1545 = vpop.f32.mrf.mxu0
      %v1546 = vadd.f32 %v1433, %v1545
      %1547 = vmatmul.f32.gmra.mxu0 %v1086
      %v1548 = vpop.f32.mrf.mxu0
      %v1549 = vadd.f32 %v1436, %v1548
      %1550 = vmatmul.f32.gmra.mxu0 %v1087
      %v1551 = vpop.f32.mrf.mxu0
      %v1552 = vadd.f32 %v1439, %v1551
      %1553 = vmatmul.f32.gmra.mxu0 %v1088
      %v1554 = vpop.f32.mrf.mxu0
      %v1555 = vadd.f32 %v1442, %v1554
      %1556 = vmatmul.f32.gmra.mxu0 %v1089
      %v1557 = vpop.f32.mrf.mxu0
      %v1558 = vadd.f32 %v1445, %v1557
      %1559 = vmatmul.f32.gmra.mxu0 %v1090
      %v1560 = vpop.f32.mrf.mxu0
      %v1561 = vadd.f32 %v1448, %v1560
      %1562 = vmatmul.f32.gmra.mxu0 %v1091
      %v1563 = vpop.f32.mrf.mxu0
      %v1564 = vadd.f32 %v1451, %v1563
      %1565 = vmatmul.f32.gmra.mxu0 %v1092
      %v1566 = vpop.f32.mrf.mxu0
      %v1567 = vadd.f32 %v1454, %v1566
      %1568 = vmatmul.f32.gmra.mxu0 %v1093
      %v1569 = vpop.f32.mrf.mxu0
      %v1570 = vadd.f32 %v1457, %v1569
      %1571 = vmatmul.f32.gmra.mxu0 %v1094
      %v1572 = vpop.f32.mrf.mxu0
      %v1573 = vadd.f32 %v1460, %v1572
      %1574 = vmatmul.f32.gmra.mxu0 %v1095
      %v1575 = vpop.f32.mrf.mxu0
      %v1576 = vadd.f32 %v1463, %v1575
      %1577 = vmatmul.f32.gmra.mxu0 %v1096
      %v1578 = vpop.f32.mrf.mxu0
      %v1579 = vadd.f32 %v1466, %v1578
      %1580 = vmatmul.f32.gmra.mxu0 %v1097
      %v1581 = vpop.f32.mrf.mxu0
      %v1582 = vadd.f32 %v1469, %v1581
      %1583 = vmatmul.f32.gmra.mxu0 %v1098
      %v1584 = vpop.f32.mrf.mxu0
      %v1585 = vadd.f32 %v1472, %v1584
      %1586 = vmatmul.f32.gmra.mxu0 %v1099
      %v1587 = vpop.f32.mrf.mxu0
      %v1588 = vadd.f32 %v1475, %v1587
      %1589 = vmatmul.f32.gmra.mxu0 %v1100
      %v1590 = vpop.f32.mrf.mxu0
      %v1591 = vadd.f32 %v1478, %v1590
      %1592 = vmatmul.f32.gmra.mxu0 %v1101
      %v1593 = vpop.f32.mrf.mxu0
      %v1594 = vadd.f32 %v1481, %v1593
      %1595 = vmatmul.f32.gmra.mxu0 %v1102
      %v1596 = vpop.f32.mrf.mxu0
      %v1597 = vadd.f32 %v1484, %v1596
      %1598 = vmatmul.f32.gmra.mxu0 %v1103
      %v1599 = vpop.f32.mrf.mxu0
      %v1600 = vadd.f32 %v1487, %v1599
      %1601 = vmatmul.f32.gmra.mxu0 %v1104
      %v1602 = vpop.f32.mrf.mxu0
      %v1603 = vadd.f32 %v1490, %v1602
      %1604 = vmatmul.f32.gmra.mxu0 %v1105
      %v1605 = vpop.f32.mrf.mxu0
      %v1606 = vadd.f32 %v1493, %v1605
      %1607 = vdwg.mxu0
      %1608 = vmatpush.msra.mxu0 %v1381
      %1609 = vmatpush.msra.mxu0 %v1380
      %1610 = vmatpush.msra.mxu0 %v1379
      %1611 = vmatpush.msra.mxu0 %v1378
      %1612 = vmatpush.msra.mxu0 %v1377
      %1613 = vmatpush.msra.mxu0 %v1376
      %1614 = vmatpush.msra.mxu0 %v1375
      %1615 = vmatpush.msra.mxu0 %v1374
      %1616 = vmatpush.msra.mxu0 %v1373
      %1617 = vmatpush.msra.mxu0 %v1372
      %1618 = vmatpush.msra.mxu0 %v1371
      %1619 = vmatpush.msra.mxu0 %v1370
      %1620 = vmatpush.msra.mxu0 %v1369
      %1621 = vmatpush.msra.mxu0 %v1368
      %1622 = vmatpush.msra.mxu0 %v1367
      %1623 = vmatpush.msra.mxu0 %v1366
      %1624 = vmatmul.f32.gmra.mxu0 0.0
      %v1625 = vpop.f32.mrf.mxu0
      %v1626 = vadd.f32 %v1513, %v1625
      %1627 = vmatmul.f32.gmra.mxu0 0.0
      %v1628 = vpop.f32.mrf.mxu0
      %v1629 = vadd.f32 %v1516, %v1628
      %1630 = vmatmul.f32.gmra.mxu0 %v1240
      %v1631 = vpop.f32.mrf.mxu0
      %v1632 = vadd.f32 %v1519, %v1631
      %1633 = vmatmul.f32.gmra.mxu0 %v1318
      %v1634 = vpop.f32.mrf.mxu0
      %v1635 = vadd.f32 %v1522, %v1634
      %1636 = vmatmul.f32.gmra.mxu0 %v1243
      %v1637 = vpop.f32.mrf.mxu0
      %v1638 = vadd.f32 %v1525, %v1637
      %1639 = vmatmul.f32.gmra.mxu0 %v1319
      %v1640 = vpop.f32.mrf.mxu0
      %v1641 = vadd.f32 %v1528, %v1640
      %1642 = vmatmul.f32.gmra.mxu0 %v1246
      %v1643 = vpop.f32.mrf.mxu0
      %v1644 = vadd.f32 %v1531, %v1643
      %1645 = vmatmul.f32.gmra.mxu0 %v1320
      %v1646 = vpop.f32.mrf.mxu0
      %v1647 = vadd.f32 %v1534, %v1646
      %1648 = vmatmul.f32.gmra.mxu0 %v1249
      %v1649 = vpop.f32.mrf.mxu0
      %v1650 = vadd.f32 %v1537, %v1649
      %1651 = vmatmul.f32.gmra.mxu0 %v1321
      %v1652 = vpop.f32.mrf.mxu0
      %v1653 = vadd.f32 %v1540, %v1652
      %1654 = vmatmul.f32.gmra.mxu0 %v1252
      %v1655 = vpop.f32.mrf.mxu0
      %v1656 = vadd.f32 %v1543, %v1655
      %1657 = vmatmul.f32.gmra.mxu0 %v1322
      %v1658 = vpop.f32.mrf.mxu0
      %v1659 = vadd.f32 %v1546, %v1658
      %1660 = vmatmul.f32.gmra.mxu0 %v1255
      %v1661 = vpop.f32.mrf.mxu0
      %v1662 = vadd.f32 %v1549, %v1661
      %1663 = vmatmul.f32.gmra.mxu0 %v1323
      %v1664 = vpop.f32.mrf.mxu0
      %v1665 = vadd.f32 %v1552, %v1664
      %1666 = vmatmul.f32.gmra.mxu0 %v1258
      %v1667 = vpop.f32.mrf.mxu0
      %v1668 = vadd.f32 %v1555, %v1667
      %1669 = vmatmul.f32.gmra.mxu0 %v1324
      %v1670 = vpop.f32.mrf.mxu0
      %v1671 = vadd.f32 %v1558, %v1670
      %1672 = vmatmul.f32.gmra.mxu0 %v1261
      %v1673 = vpop.f32.mrf.mxu0
      %v1674 = vadd.f32 %v1561, %v1673
      %1675 = vmatmul.f32.gmra.mxu0 %v1325
      %v1676 = vpop.f32.mrf.mxu0
      %v1677 = vadd.f32 %v1564, %v1676
      %1678 = vmatmul.f32.gmra.mxu0 %v1264
      %v1679 = vpop.f32.mrf.mxu0
      %v1680 = vadd.f32 %v1567, %v1679
      %1681 = vmatmul.f32.gmra.mxu0 %v1326
      %v1682 = vpop.f32.mrf.mxu0
      %v1683 = vadd.f32 %v1570, %v1682
      %1684 = vmatmul.f32.gmra.mxu0 %v1267
      %v1685 = vpop.f32.mrf.mxu0
      %v1686 = vadd.f32 %v1573, %v1685
      %1687 = vmatmul.f32.gmra.mxu0 %v1327
      %v1688 = vpop.f32.mrf.mxu0
      %v1689 = vadd.f32 %v1576, %v1688
      %1690 = vmatmul.f32.gmra.mxu0 %v1270
      %v1691 = vpop.f32.mrf.mxu0
      %v1692 = vadd.f32 %v1579, %v1691
      %1693 = vmatmul.f32.gmra.mxu0 %v1328
      %v1694 = vpop.f32.mrf.mxu0
      %v1695 = vadd.f32 %v1582, %v1694
      %1696 = vmatmul.f32.gmra.mxu0 %v1273
      %v1697 = vpop.f32.mrf.mxu0
      %v1698 = vadd.f32 %v1585, %v1697
      %1699 = vmatmul.f32.gmra.mxu0 %v1329
      %v1700 = vpop.f32.mrf.mxu0
      %v1701 = vadd.f32 %v1588, %v1700
      %1702 = vmatmul.f32.gmra.mxu0 %v1276
      %v1703 = vpop.f32.mrf.mxu0
      %v1704 = vadd.f32 %v1591, %v1703
      %1705 = vmatmul.f32.gmra.mxu0 %v1330
      %v1706 = vpop.f32.mrf.mxu0
      %v1707 = vadd.f32 %v1594, %v1706
      %1708 = vmatmul.f32.gmra.mxu0 %v1279
      %v1709 = vpop.f32.mrf.mxu0
      %v1710 = vadd.f32 %v1597, %v1709
      %1711 = vmatmul.f32.gmra.mxu0 %v1331
      %v1712 = vpop.f32.mrf.mxu0
      %v1713 = vadd.f32 %v1600, %v1712
      %1714 = vmatmul.f32.gmra.mxu0 %v1282
      %v1715 = vpop.f32.mrf.mxu0
      %v1716 = vadd.f32 %v1603, %v1715
      %1717 = vmatmul.f32.gmra.mxu0 %v1332
      %v1718 = vpop.f32.mrf.mxu0
      %v1719 = vadd.f32 %v1606, %v1718
      %1720 = vdwg.mxu0
      %v1721 = vadd.f32 %v981, %v1626
      %v1722 = vadd.f32 %v984, %v1629
      %v1723 = vadd.f32 %v987, %v1632
      %v1724 = vadd.f32 %v990, %v1635
      %v1725 = vadd.f32 %v993, %v1638
      %v1726 = vadd.f32 %v996, %v1641
      %v1727 = vadd.f32 %v999, %v1644
      %v1728 = vadd.f32 %v1002, %v1647
      %v1729 = vadd.f32 %v1005, %v1650
      %v1730 = vadd.f32 %v1008, %v1653
      %v1731 = vadd.f32 %v1011, %v1656
      %v1732 = vadd.f32 %v1014, %v1659
      %v1733 = vadd.f32 %v1017, %v1662
      %v1734 = vadd.f32 %v1020, %v1665
      %v1735 = vadd.f32 %v1023, %v1668
      %v1736 = vadd.f32 %v1026, %v1671
      %v1737 = vadd.f32 %v1029, %v1674
      %v1738 = vadd.f32 %v1032, %v1677
      %v1739 = vadd.f32 %v1035, %v1680
      %v1740 = vadd.f32 %v1038, %v1683
      %v1741 = vadd.f32 %v1041, %v1686
      %v1742 = vadd.f32 %v1044, %v1689
      %v1743 = vadd.f32 %v1047, %v1692
      %v1744 = vadd.f32 %v1050, %v1695
      %v1745 = vadd.f32 %v1053, %v1698
      %v1746 = vadd.f32 %v1056, %v1701
      %v1747 = vadd.f32 %v1059, %v1704
      %v1748 = vadd.f32 %v1062, %v1707
      %v1749 = vadd.f32 %v1065, %v1710
      %v1750 = vadd.f32 %v1068, %v1713
      %v1751 = vadd.f32 %v1071, %v1716
      %v1752 = vadd.f32 %v1074, %v1719
      %s1753 = scalar_lea.vmem %s3, 384
      %v1754 = vld [vmem:[%s1753] sm:$0xff]
      %v1755 = vld [vmem:[%s1753 + $0x8] sm:$0xff]
      %v1756 = vld [vmem:[%s1753 + $0x10] sm:$0xff]
      %v1757 = vld [vmem:[%s1753 + $0x18] sm:$0xff]
      %v1758 = vld [vmem:[%s1753 + $0x20] sm:$0xff]
      %v1759 = vld [vmem:[%s1753 + $0x28] sm:$0xff]
      %v1760 = vld [vmem:[%s1753 + $0x30] sm:$0xff]
      %v1761 = vld [vmem:[%s1753 + $0x38] sm:$0xff]
      %v1762 = vld [vmem:[%s1753 + $0x40] sm:$0xff]
      %v1763 = vld [vmem:[%s1753 + $0x48] sm:$0xff]
      %v1764 = vld [vmem:[%s1753 + $0x50] sm:$0xff]
      %v1765 = vld [vmem:[%s1753 + $0x58] sm:$0xff]
      %v1766 = vld [vmem:[%s1753 + $0x60] sm:$0xff]
      %v1767 = vld [vmem:[%s1753 + $0x68] sm:$0xff]
      %v1768 = vld [vmem:[%s1753 + $0x70] sm:$0xff]
      %v1769 = vld [vmem:[%s1753 + $0x78] sm:$0xff]
      %v1770 = vld [vmem:[%s1753 + $0x80] sm:$0xff]
      %v1771 = vld [vmem:[%s1753 + $0x88] sm:$0xff]
      %v1772 = vld [vmem:[%s1753 + $0x90] sm:$0xff]
      %v1773 = vld [vmem:[%s1753 + $0x98] sm:$0xff]
      %v1774 = vld [vmem:[%s1753 + $0xa0] sm:$0xff]
      %v1775 = vld [vmem:[%s1753 + $0xa8] sm:$0xff]
      %v1776 = vld [vmem:[%s1753 + $0xb0] sm:$0xff]
      %v1777 = vld [vmem:[%s1753 + $0xb8] sm:$0xff]
      %v1778 = vld [vmem:[%s1753 + $0xc0] sm:$0xff]
      %v1779 = vld [vmem:[%s1753 + $0xc8] sm:$0xff]
      %v1780 = vld [vmem:[%s1753 + $0xd0] sm:$0xff]
      %v1781 = vld [vmem:[%s1753 + $0xd8] sm:$0xff]
      %v1782 = vld [vmem:[%s1753 + $0xe0] sm:$0xff]
      %v1783 = vld [vmem:[%s1753 + $0xe8] sm:$0xff]
      %v1784 = vld [vmem:[%s1753 + $0xf0] sm:$0xff]
      %v1785 = vld [vmem:[%s1753 + $0xf8] sm:$0xff]
      %v1786 = vld [vmem:[%s1753 + $0x100] sm:$0xff]
      %v1787 = vld [vmem:[%s1753 + $0x108] sm:$0xff]
      %v1788 = vld [vmem:[%s1753 + $0x110] sm:$0xff]
      %v1789 = vld [vmem:[%s1753 + $0x118] sm:$0xff]
      %v1790 = vld [vmem:[%s1753 + $0x120] sm:$0xff]
      %v1791 = vld [vmem:[%s1753 + $0x128] sm:$0xff]
      %v1792 = vld [vmem:[%s1753 + $0x130] sm:$0xff]
      %v1793 = vld [vmem:[%s1753 + $0x138] sm:$0xff]
      %v1794 = vld [vmem:[%s1753 + $0x140] sm:$0xff]
      %v1795 = vld [vmem:[%s1753 + $0x148] sm:$0xff]
      %v1796 = vld [vmem:[%s1753 + $0x150] sm:$0xff]
      %v1797 = vld [vmem:[%s1753 + $0x158] sm:$0xff]
      %v1798 = vld [vmem:[%s1753 + $0x160] sm:$0xff]
      %v1799 = vld [vmem:[%s1753 + $0x168] sm:$0xff]
      %v1800 = vld [vmem:[%s1753 + $0x170] sm:$0xff]
      %v1801 = vld [vmem:[%s1753 + $0x178] sm:$0xff]
      %1802 = vmatpush.msra.mxu0 %v1769
      %1803 = vmatpush.msra.mxu0 %v1768
      %1804 = vmatpush.msra.mxu0 %v1767
      %1805 = vmatpush.msra.mxu0 %v1766
      %1806 = vmatpush.msra.mxu0 %v1765
      %1807 = vmatpush.msra.mxu0 %v1764
      %1808 = vmatpush.msra.mxu0 %v1763
      %1809 = vmatpush.msra.mxu0 %v1762
      %1810 = vmatpush.msra.mxu0 %v1761
      %1811 = vmatpush.msra.mxu0 %v1760
      %1812 = vmatpush.msra.mxu0 %v1759
      %1813 = vmatpush.msra.mxu0 %v1758
      %1814 = vmatpush.msra.mxu0 %v1757
      %1815 = vmatpush.msra.mxu0 %v1756
      %1816 = vmatpush.msra.mxu0 %v1755
      %1817 = vmatpush.msra.mxu0 %v1754
      %1818 = vmatmul.f32.gmra.mxu0 %v1221
      %v1819 = vpop.f32.mrf.mxu0
      %v1820 = vadd.f32 0.0, %v1819
      %1821 = vmatmul.f32.gmra.mxu0 %v1143
      %v1822 = vpop.f32.mrf.mxu0
      %v1823 = vadd.f32 0.0, %v1822
      %1824 = vmatmul.f32.gmra.mxu0 %v1222
      %v1825 = vpop.f32.mrf.mxu0
      %v1826 = vadd.f32 0.0, %v1825
      %1827 = vmatmul.f32.gmra.mxu0 %v1146
      %v1828 = vpop.f32.mrf.mxu0
      %v1829 = vadd.f32 0.0, %v1828
      %1830 = vmatmul.f32.gmra.mxu0 %v1223
      %v1831 = vpop.f32.mrf.mxu0
      %v1832 = vadd.f32 0.0, %v1831
      %1833 = vmatmul.f32.gmra.mxu0 %v1149
      %v1834 = vpop.f32.mrf.mxu0
      %v1835 = vadd.f32 0.0, %v1834
      %1836 = vmatmul.f32.gmra.mxu0 %v1224
      %v1837 = vpop.f32.mrf.mxu0
      %v1838 = vadd.f32 0.0, %v1837
      %1839 = vmatmul.f32.gmra.mxu0 %v1152
      %v1840 = vpop.f32.mrf.mxu0
      %v1841 = vadd.f32 0.0, %v1840
      %1842 = vmatmul.f32.gmra.mxu0 %v1225
      %v1843 = vpop.f32.mrf.mxu0
      %v1844 = vadd.f32 0.0, %v1843
      %1845 = vmatmul.f32.gmra.mxu0 %v1155
      %v1846 = vpop.f32.mrf.mxu0
      %v1847 = vadd.f32 0.0, %v1846
      %1848 = vmatmul.f32.gmra.mxu0 %v1226
      %v1849 = vpop.f32.mrf.mxu0
      %v1850 = vadd.f32 0.0, %v1849
      %1851 = vmatmul.f32.gmra.mxu0 %v1158
      %v1852 = vpop.f32.mrf.mxu0
      %v1853 = vadd.f32 0.0, %v1852
      %1854 = vmatmul.f32.gmra.mxu0 %v1227
      %v1855 = vpop.f32.mrf.mxu0
      %v1856 = vadd.f32 0.0, %v1855
      %1857 = vmatmul.f32.gmra.mxu0 %v1161
      %v1858 = vpop.f32.mrf.mxu0
      %v1859 = vadd.f32 0.0, %v1858
      %1860 = vmatmul.f32.gmra.mxu0 %v1228
      %v1861 = vpop.f32.mrf.mxu0
      %v1862 = vadd.f32 0.0, %v1861
      %1863 = vmatmul.f32.gmra.mxu0 %v1164
      %v1864 = vpop.f32.mrf.mxu0
      %v1865 = vadd.f32 0.0, %v1864
      %1866 = vmatmul.f32.gmra.mxu0 %v1229
      %v1867 = vpop.f32.mrf.mxu0
      %v1868 = vadd.f32 0.0, %v1867
      %1869 = vmatmul.f32.gmra.mxu0 %v1167
      %v1870 = vpop.f32.mrf.mxu0
      %v1871 = vadd.f32 0.0, %v1870
      %1872 = vmatmul.f32.gmra.mxu0 %v1230
      %v1873 = vpop.f32.mrf.mxu0
      %v1874 = vadd.f32 0.0, %v1873
      %1875 = vmatmul.f32.gmra.mxu0 %v1170
      %v1876 = vpop.f32.mrf.mxu0
      %v1877 = vadd.f32 0.0, %v1876
      %1878 = vmatmul.f32.gmra.mxu0 %v1231
      %v1879 = vpop.f32.mrf.mxu0
      %v1880 = vadd.f32 0.0, %v1879
      %1881 = vmatmul.f32.gmra.mxu0 %v1173
      %v1882 = vpop.f32.mrf.mxu0
      %v1883 = vadd.f32 0.0, %v1882
      %1884 = vmatmul.f32.gmra.mxu0 %v1232
      %v1885 = vpop.f32.mrf.mxu0
      %v1886 = vadd.f32 0.0, %v1885
      %1887 = vmatmul.f32.gmra.mxu0 %v1176
      %v1888 = vpop.f32.mrf.mxu0
      %v1889 = vadd.f32 0.0, %v1888
      %1890 = vmatmul.f32.gmra.mxu0 %v1233
      %v1891 = vpop.f32.mrf.mxu0
      %v1892 = vadd.f32 0.0, %v1891
      %1893 = vmatmul.f32.gmra.mxu0 %v1179
      %v1894 = vpop.f32.mrf.mxu0
      %v1895 = vadd.f32 0.0, %v1894
      %1896 = vmatmul.f32.gmra.mxu0 %v1234
      %v1897 = vpop.f32.mrf.mxu0
      %v1898 = vadd.f32 0.0, %v1897
      %1899 = vmatmul.f32.gmra.mxu0 %v1182
      %v1900 = vpop.f32.mrf.mxu0
      %v1901 = vadd.f32 0.0, %v1900
      %1902 = vmatmul.f32.gmra.mxu0 %v1235
      %v1903 = vpop.f32.mrf.mxu0
      %v1904 = vadd.f32 0.0, %v1903
      %1905 = vmatmul.f32.gmra.mxu0 %v1185
      %v1906 = vpop.f32.mrf.mxu0
      %v1907 = vadd.f32 0.0, %v1906
      %1908 = vmatmul.f32.gmra.mxu0 %v1236
      %v1909 = vpop.f32.mrf.mxu0
      %v1910 = vadd.f32 0.0, %v1909
      %1911 = vmatmul.f32.gmra.mxu0 %v1188
      %v1912 = vpop.f32.mrf.mxu0
      %v1913 = vadd.f32 0.0, %v1912
      %1914 = vdwg.mxu0
      %1915 = vmatpush.msra.mxu0 %v1785
      %1916 = vmatpush.msra.mxu0 %v1784
      %1917 = vmatpush.msra.mxu0 %v1783
      %1918 = vmatpush.msra.mxu0 %v1782
      %1919 = vmatpush.msra.mxu0 %v1781
      %1920 = vmatpush.msra.mxu0 %v1780
      %1921 = vmatpush.msra.mxu0 %v1779
      %1922 = vmatpush.msra.mxu0 %v1778
      %1923 = vmatpush.msra.mxu0 %v1777
      %1924 = vmatpush.msra.mxu0 %v1776
      %1925 = vmatpush.msra.mxu0 %v1775
      %1926 = vmatpush.msra.mxu0 %v1774
      %1927 = vmatpush.msra.mxu0 %v1773
      %1928 = vmatpush.msra.mxu0 %v1772
      %1929 = vmatpush.msra.mxu0 %v1771
      %1930 = vmatpush.msra.mxu0 %v1770
      %1931 = vmatmul.f32.gmra.mxu0 %v1076
      %v1932 = vpop.f32.mrf.mxu0
      %v1933 = vadd.f32 %v1820, %v1932
      %1934 = vmatmul.f32.gmra.mxu0 %v1077
      %v1935 = vpop.f32.mrf.mxu0
      %v1936 = vadd.f32 %v1823, %v1935
      %1937 = vmatmul.f32.gmra.mxu0 %v1078
      %v1938 = vpop.f32.mrf.mxu0
      %v1939 = vadd.f32 %v1826, %v1938
      %1940 = vmatmul.f32.gmra.mxu0 %v1079
      %v1941 = vpop.f32.mrf.mxu0
      %v1942 = vadd.f32 %v1829, %v1941
      %1943 = vmatmul.f32.gmra.mxu0 %v1080
      %v1944 = vpop.f32.mrf.mxu0
      %v1945 = vadd.f32 %v1832, %v1944
      %1946 = vmatmul.f32.gmra.mxu0 %v1081
      %v1947 = vpop.f32.mrf.mxu0
      %v1948 = vadd.f32 %v1835, %v1947
      %1949 = vmatmul.f32.gmra.mxu0 %v1082
      %v1950 = vpop.f32.mrf.mxu0
      %v1951 = vadd.f32 %v1838, %v1950
      %1952 = vmatmul.f32.gmra.mxu0 %v1083
      %v1953 = vpop.f32.mrf.mxu0
      %v1954 = vadd.f32 %v1841, %v1953
      %1955 = vmatmul.f32.gmra.mxu0 %v1084
      %v1956 = vpop.f32.mrf.mxu0
      %v1957 = vadd.f32 %v1844, %v1956
      %1958 = vmatmul.f32.gmra.mxu0 %v1085
      %v1959 = vpop.f32.mrf.mxu0
      %v1960 = vadd.f32 %v1847, %v1959
      %1961 = vmatmul.f32.gmra.mxu0 %v1086
      %v1962 = vpop.f32.mrf.mxu0
      %v1963 = vadd.f32 %v1850, %v1962
      %1964 = vmatmul.f32.gmra.mxu0 %v1087
      %v1965 = vpop.f32.mrf.mxu0
      %v1966 = vadd.f32 %v1853, %v1965
      %1967 = vmatmul.f32.gmra.mxu0 %v1088
      %v1968 = vpop.f32.mrf.mxu0
      %v1969 = vadd.f32 %v1856, %v1968
      %1970 = vmatmul.f32.gmra.mxu0 %v1089
      %v1971 = vpop.f32.mrf.mxu0
      %v1972 = vadd.f32 %v1859, %v1971
      %1973 = vmatmul.f32.gmra.mxu0 %v1090
      %v1974 = vpop.f32.mrf.mxu0
      %v1975 = vadd.f32 %v1862, %v1974
      %1976 = vmatmul.f32.gmra.mxu0 %v1091
      %v1977 = vpop.f32.mrf.mxu0
      %v1978 = vadd.f32 %v1865, %v1977
      %1979 = vmatmul.f32.gmra.mxu0 %v1092
      %v1980 = vpop.f32.mrf.mxu0
      %v1981 = vadd.f32 %v1868, %v1980
      %1982 = vmatmul.f32.gmra.mxu0 %v1093
      %v1983 = vpop.f32.mrf.mxu0
      %v1984 = vadd.f32 %v1871, %v1983
      %1985 = vmatmul.f32.gmra.mxu0 %v1094
      %v1986 = vpop.f32.mrf.mxu0
      %v1987 = vadd.f32 %v1874, %v1986
      %1988 = vmatmul.f32.gmra.mxu0 %v1095
      %v1989 = vpop.f32.mrf.mxu0
      %v1990 = vadd.f32 %v1877, %v1989
      %1991 = vmatmul.f32.gmra.mxu0 %v1096
      %v1992 = vpop.f32.mrf.mxu0
      %v1993 = vadd.f32 %v1880, %v1992
      %1994 = vmatmul.f32.gmra.mxu0 %v1097
      %v1995 = vpop.f32.mrf.mxu0
      %v1996 = vadd.f32 %v1883, %v1995
      %1997 = vmatmul.f32.gmra.mxu0 %v1098
      %v1998 = vpop.f32.mrf.mxu0
      %v1999 = vadd.f32 %v1886, %v1998
      %2000 = vmatmul.f32.gmra.mxu0 %v1099
      %v2001 = vpop.f32.mrf.mxu0
      %v2002 = vadd.f32 %v1889, %v2001
      %2003 = vmatmul.f32.gmra.mxu0 %v1100
      %v2004 = vpop.f32.mrf.mxu0
      %v2005 = vadd.f32 %v1892, %v2004
      %2006 = vmatmul.f32.gmra.mxu0 %v1101
      %v2007 = vpop.f32.mrf.mxu0
      %v2008 = vadd.f32 %v1895, %v2007
      %2009 = vmatmul.f32.gmra.mxu0 %v1102
      %v2010 = vpop.f32.mrf.mxu0
      %v2011 = vadd.f32 %v1898, %v2010
      %2012 = vmatmul.f32.gmra.mxu0 %v1103
      %v2013 = vpop.f32.mrf.mxu0
      %v2014 = vadd.f32 %v1901, %v2013
      %2015 = vmatmul.f32.gmra.mxu0 %v1104
      %v2016 = vpop.f32.mrf.mxu0
      %v2017 = vadd.f32 %v1904, %v2016
      %2018 = vmatmul.f32.gmra.mxu0 %v1105
      %v2019 = vpop.f32.mrf.mxu0
      %v2020 = vadd.f32 %v1907, %v2019
      %2021 = vmatmul.f32.gmra.mxu0 %v1106
      %v2022 = vpop.f32.mrf.mxu0
      %v2023 = vadd.f32 %v1910, %v2022
      %2024 = vmatmul.f32.gmra.mxu0 %v1107
      %v2025 = vpop.f32.mrf.mxu0
      %v2026 = vadd.f32 %v1913, %v2025
      %2027 = vdwg.mxu0
      %2028 = vmatpush.msra.mxu0 %v1801
      %2029 = vmatpush.msra.mxu0 %v1800
      %2030 = vmatpush.msra.mxu0 %v1799
      %2031 = vmatpush.msra.mxu0 %v1798
      %2032 = vmatpush.msra.mxu0 %v1797
      %2033 = vmatpush.msra.mxu0 %v1796
      %2034 = vmatpush.msra.mxu0 %v1795
      %2035 = vmatpush.msra.mxu0 %v1794
      %2036 = vmatpush.msra.mxu0 %v1793
      %2037 = vmatpush.msra.mxu0 %v1792
      %2038 = vmatpush.msra.mxu0 %v1791
      %2039 = vmatpush.msra.mxu0 %v1790
      %2040 = vmatpush.msra.mxu0 %v1789
      %2041 = vmatpush.msra.mxu0 %v1788
      %2042 = vmatpush.msra.mxu0 %v1787
      %2043 = vmatpush.msra.mxu0 %v1786
      %2044 = vmatmul.f32.gmra.mxu0 %v1240
      %v2045 = vpop.f32.mrf.mxu0
      %v2046 = vadd.f32 %v1933, %v2045
      %2047 = vmatmul.f32.gmra.mxu0 %v1318
      %v2048 = vpop.f32.mrf.mxu0
      %v2049 = vadd.f32 %v1936, %v2048
      %2050 = vmatmul.f32.gmra.mxu0 %v1243
      %v2051 = vpop.f32.mrf.mxu0
      %v2052 = vadd.f32 %v1939, %v2051
      %2053 = vmatmul.f32.gmra.mxu0 %v1319
      %v2054 = vpop.f32.mrf.mxu0
      %v2055 = vadd.f32 %v1942, %v2054
      %2056 = vmatmul.f32.gmra.mxu0 %v1246
      %v2057 = vpop.f32.mrf.mxu0
      %v2058 = vadd.f32 %v1945, %v2057
      %2059 = vmatmul.f32.gmra.mxu0 %v1320
      %v2060 = vpop.f32.mrf.mxu0
      %v2061 = vadd.f32 %v1948, %v2060
      %2062 = vmatmul.f32.gmra.mxu0 %v1249
      %v2063 = vpop.f32.mrf.mxu0
      %v2064 = vadd.f32 %v1951, %v2063
      %2065 = vmatmul.f32.gmra.mxu0 %v1321
      %v2066 = vpop.f32.mrf.mxu0
      %v2067 = vadd.f32 %v1954, %v2066
      %2068 = vmatmul.f32.gmra.mxu0 %v1252
      %v2069 = vpop.f32.mrf.mxu0
      %v2070 = vadd.f32 %v1957, %v2069
      %2071 = vmatmul.f32.gmra.mxu0 %v1322
      %v2072 = vpop.f32.mrf.mxu0
      %v2073 = vadd.f32 %v1960, %v2072
      %2074 = vmatmul.f32.gmra.mxu0 %v1255
      %v2075 = vpop.f32.mrf.mxu0
      %v2076 = vadd.f32 %v1963, %v2075
      %2077 = vmatmul.f32.gmra.mxu0 %v1323
      %v2078 = vpop.f32.mrf.mxu0
      %v2079 = vadd.f32 %v1966, %v2078
      %2080 = vmatmul.f32.gmra.mxu0 %v1258
      %v2081 = vpop.f32.mrf.mxu0
      %v2082 = vadd.f32 %v1969, %v2081
      %2083 = vmatmul.f32.gmra.mxu0 %v1324
      %v2084 = vpop.f32.mrf.mxu0
      %v2085 = vadd.f32 %v1972, %v2084
      %2086 = vmatmul.f32.gmra.mxu0 %v1261
      %v2087 = vpop.f32.mrf.mxu0
      %v2088 = vadd.f32 %v1975, %v2087
      %2089 = vmatmul.f32.gmra.mxu0 %v1325
      %v2090 = vpop.f32.mrf.mxu0
      %v2091 = vadd.f32 %v1978, %v2090
      %2092 = vmatmul.f32.gmra.mxu0 %v1264
      %v2093 = vpop.f32.mrf.mxu0
      %v2094 = vadd.f32 %v1981, %v2093
      %2095 = vmatmul.f32.gmra.mxu0 %v1326
      %v2096 = vpop.f32.mrf.mxu0
      %v2097 = vadd.f32 %v1984, %v2096
      %2098 = vmatmul.f32.gmra.mxu0 %v1267
      %v2099 = vpop.f32.mrf.mxu0
      %v2100 = vadd.f32 %v1987, %v2099
      %2101 = vmatmul.f32.gmra.mxu0 %v1327
      %v2102 = vpop.f32.mrf.mxu0
      %v2103 = vadd.f32 %v1990, %v2102
      %2104 = vmatmul.f32.gmra.mxu0 %v1270
      %v2105 = vpop.f32.mrf.mxu0
      %v2106 = vadd.f32 %v1993, %v2105
      %2107 = vmatmul.f32.gmra.mxu0 %v1328
      %v2108 = vpop.f32.mrf.mxu0
      %v2109 = vadd.f32 %v1996, %v2108
      %2110 = vmatmul.f32.gmra.mxu0 %v1273
      %v2111 = vpop.f32.mrf.mxu0
      %v2112 = vadd.f32 %v1999, %v2111
      %2113 = vmatmul.f32.gmra.mxu0 %v1329
      %v2114 = vpop.f32.mrf.mxu0
      %v2115 = vadd.f32 %v2002, %v2114
      %2116 = vmatmul.f32.gmra.mxu0 %v1276
      %v2117 = vpop.f32.mrf.mxu0
      %v2118 = vadd.f32 %v2005, %v2117
      %2119 = vmatmul.f32.gmra.mxu0 %v1330
      %v2120 = vpop.f32.mrf.mxu0
      %v2121 = vadd.f32 %v2008, %v2120
      %2122 = vmatmul.f32.gmra.mxu0 %v1279
      %v2123 = vpop.f32.mrf.mxu0
      %v2124 = vadd.f32 %v2011, %v2123
      %2125 = vmatmul.f32.gmra.mxu0 %v1331
      %v2126 = vpop.f32.mrf.mxu0
      %v2127 = vadd.f32 %v2014, %v2126
      %2128 = vmatmul.f32.gmra.mxu0 %v1282
      %v2129 = vpop.f32.mrf.mxu0
      %v2130 = vadd.f32 %v2017, %v2129
      %2131 = vmatmul.f32.gmra.mxu0 %v1332
      %v2132 = vpop.f32.mrf.mxu0
      %v2133 = vadd.f32 %v2020, %v2132
      %2134 = vmatmul.f32.gmra.mxu0 %v1285
      %v2135 = vpop.f32.mrf.mxu0
      %v2136 = vadd.f32 %v2023, %v2135
      %2137 = vmatmul.f32.gmra.mxu0 %v1333
      %v2138 = vpop.f32.mrf.mxu0
      %v2139 = vadd.f32 %v2026, %v2138
      %2140 = vdwg.mxu0
      %v2141 = vadd.f32 %v1721, %v2046
      %v2142 = vadd.f32 %v1722, %v2049
      %v2143 = vadd.f32 %v1723, %v2052
      %v2144 = vadd.f32 %v1724, %v2055
      %v2145 = vadd.f32 %v1725, %v2058
      %v2146 = vadd.f32 %v1726, %v2061
      %v2147 = vadd.f32 %v1727, %v2064
      %v2148 = vadd.f32 %v1728, %v2067
      %v2149 = vadd.f32 %v1729, %v2070
      %v2150 = vadd.f32 %v1730, %v2073
      %v2151 = vadd.f32 %v1731, %v2076
      %v2152 = vadd.f32 %v1732, %v2079
      %v2153 = vadd.f32 %v1733, %v2082
      %v2154 = vadd.f32 %v1734, %v2085
      %v2155 = vadd.f32 %v1735, %v2088
      %v2156 = vadd.f32 %v1736, %v2091
      %v2157 = vadd.f32 %v1737, %v2094
      %v2158 = vadd.f32 %v1738, %v2097
      %v2159 = vadd.f32 %v1739, %v2100
      %v2160 = vadd.f32 %v1740, %v2103
      %v2161 = vadd.f32 %v1741, %v2106
      %v2162 = vadd.f32 %v1742, %v2109
      %v2163 = vadd.f32 %v1743, %v2112
      %v2164 = vadd.f32 %v1744, %v2115
      %v2165 = vadd.f32 %v1745, %v2118
      %v2166 = vadd.f32 %v1746, %v2121
      %v2167 = vadd.f32 %v1747, %v2124
      %v2168 = vadd.f32 %v1748, %v2127
      %v2169 = vadd.f32 %v1749, %v2130
      %v2170 = vadd.f32 %v1750, %v2133
      %v2171 = vadd.f32 %v1751, %v2136
      %v2172 = vadd.f32 %v1752, %v2139
      %s2173 = scalar_lea.vmem %s3, 768
      %v2174 = vld [vmem:[%s2173] sm:$0xff]
      %v2175 = vld [vmem:[%s2173 + $0x8] sm:$0xff]
      %v2176 = vld [vmem:[%s2173 + $0x10] sm:$0xff]
      %v2177 = vld [vmem:[%s2173 + $0x18] sm:$0xff]
      %v2178 = vld [vmem:[%s2173 + $0x20] sm:$0xff]
      %v2179 = vld [vmem:[%s2173 + $0x28] sm:$0xff]
      %v2180 = vld [vmem:[%s2173 + $0x30] sm:$0xff]
      %v2181 = vld [vmem:[%s2173 + $0x38] sm:$0xff]
      %v2182 = vld [vmem:[%s2173 + $0x40] sm:$0xff]
      %v2183 = vld [vmem:[%s2173 + $0x48] sm:$0xff]
      %v2184 = vld [vmem:[%s2173 + $0x50] sm:$0xff]
      %v2185 = vld [vmem:[%s2173 + $0x58] sm:$0xff]
      %v2186 = vld [vmem:[%s2173 + $0x60] sm:$0xff]
      %v2187 = vld [vmem:[%s2173 + $0x68] sm:$0xff]
      %v2188 = vld [vmem:[%s2173 + $0x70] sm:$0xff]
      %v2189 = vld [vmem:[%s2173 + $0x78] sm:$0xff]
      %v2190 = vld [vmem:[%s2173 + $0x80] sm:$0xff]
      %v2191 = vld [vmem:[%s2173 + $0x88] sm:$0xff]
      %v2192 = vld [vmem:[%s2173 + $0x90] sm:$0xff]
      %v2193 = vld [vmem:[%s2173 + $0x98] sm:$0xff]
      %v2194 = vld [vmem:[%s2173 + $0xa0] sm:$0xff]
      %v2195 = vld [vmem:[%s2173 + $0xa8] sm:$0xff]
      %v2196 = vld [vmem:[%s2173 + $0xb0] sm:$0xff]
      %v2197 = vld [vmem:[%s2173 + $0xb8] sm:$0xff]
      %v2198 = vld [vmem:[%s2173 + $0xc0] sm:$0xff]
      %v2199 = vld [vmem:[%s2173 + $0xc8] sm:$0xff]
      %v2200 = vld [vmem:[%s2173 + $0xd0] sm:$0xff]
      %v2201 = vld [vmem:[%s2173 + $0xd8] sm:$0xff]
      %v2202 = vld [vmem:[%s2173 + $0xe0] sm:$0xff]
      %v2203 = vld [vmem:[%s2173 + $0xe8] sm:$0xff]
      %v2204 = vld [vmem:[%s2173 + $0xf0] sm:$0xff]
      %v2205 = vld [vmem:[%s2173 + $0xf8] sm:$0xff]
      %v2206 = vld [vmem:[%s2173 + $0x100] sm:$0xff]
      %v2207 = vld [vmem:[%s2173 + $0x108] sm:$0xff]
      %v2208 = vld [vmem:[%s2173 + $0x110] sm:$0xff]
      %v2209 = vld [vmem:[%s2173 + $0x118] sm:$0xff]
      %v2210 = vld [vmem:[%s2173 + $0x120] sm:$0xff]
      %v2211 = vld [vmem:[%s2173 + $0x128] sm:$0xff]
      %v2212 = vld [vmem:[%s2173 + $0x130] sm:$0xff]
      %v2213 = vld [vmem:[%s2173 + $0x138] sm:$0xff]
      %v2214 = vld [vmem:[%s2173 + $0x140] sm:$0xff]
      %v2215 = vld [vmem:[%s2173 + $0x148] sm:$0xff]
      %v2216 = vld [vmem:[%s2173 + $0x150] sm:$0xff]
      %v2217 = vld [vmem:[%s2173 + $0x158] sm:$0xff]
      %v2218 = vld [vmem:[%s2173 + $0x160] sm:$0xff]
      %v2219 = vld [vmem:[%s2173 + $0x168] sm:$0xff]
      %v2220 = vld [vmem:[%s2173 + $0x170] sm:$0xff]
      %v2221 = vld [vmem:[%s2173 + $0x178] sm:$0xff]
      %2222 = vmatpush.msra.mxu0 %v2189
      %2223 = vmatpush.msra.mxu0 %v2188
      %2224 = vmatpush.msra.mxu0 %v2187
      %2225 = vmatpush.msra.mxu0 %v2186
      %2226 = vmatpush.msra.mxu0 %v2185
      %2227 = vmatpush.msra.mxu0 %v2184
      %2228 = vmatpush.msra.mxu0 %v2183
      %2229 = vmatpush.msra.mxu0 %v2182
      %2230 = vmatpush.msra.mxu0 %v2181
      %2231 = vmatpush.msra.mxu0 %v2180
      %2232 = vmatpush.msra.mxu0 %v2179
      %2233 = vmatpush.msra.mxu0 %v2178
      %2234 = vmatpush.msra.mxu0 %v2177
      %2235 = vmatpush.msra.mxu0 %v2176
      %2236 = vmatpush.msra.mxu0 %v2175
      %2237 = vmatpush.msra.mxu0 %v2174
      %2238 = vmatmul.f32.gmra.mxu0 %v1222
      %v2239 = vpop.f32.mrf.mxu0
      %v2240 = vadd.f32 0.0, %v2239
      %2241 = vmatmul.f32.gmra.mxu0 %v1146
      %v2242 = vpop.f32.mrf.mxu0
      %v2243 = vadd.f32 0.0, %v2242
      %2244 = vmatmul.f32.gmra.mxu0 %v1223
      %v2245 = vpop.f32.mrf.mxu0
      %v2246 = vadd.f32 0.0, %v2245
      %2247 = vmatmul.f32.gmra.mxu0 %v1149
      %v2248 = vpop.f32.mrf.mxu0
      %v2249 = vadd.f32 0.0, %v2248
      %2250 = vmatmul.f32.gmra.mxu0 %v1224
      %v2251 = vpop.f32.mrf.mxu0
      %v2252 = vadd.f32 0.0, %v2251
      %2253 = vmatmul.f32.gmra.mxu0 %v1152
      %v2254 = vpop.f32.mrf.mxu0
      %v2255 = vadd.f32 0.0, %v2254
      %2256 = vmatmul.f32.gmra.mxu0 %v1225
      %v2257 = vpop.f32.mrf.mxu0
      %v2258 = vadd.f32 0.0, %v2257
      %2259 = vmatmul.f32.gmra.mxu0 %v1155
      %v2260 = vpop.f32.mrf.mxu0
      %v2261 = vadd.f32 0.0, %v2260
      %2262 = vmatmul.f32.gmra.mxu0 %v1226
      %v2263 = vpop.f32.mrf.mxu0
      %v2264 = vadd.f32 0.0, %v2263
      %2265 = vmatmul.f32.gmra.mxu0 %v1158
      %v2266 = vpop.f32.mrf.mxu0
      %v2267 = vadd.f32 0.0, %v2266
      %2268 = vmatmul.f32.gmra.mxu0 %v1227
      %v2269 = vpop.f32.mrf.mxu0
      %v2270 = vadd.f32 0.0, %v2269
      %2271 = vmatmul.f32.gmra.mxu0 %v1161
      %v2272 = vpop.f32.mrf.mxu0
      %v2273 = vadd.f32 0.0, %v2272
      %2274 = vmatmul.f32.gmra.mxu0 %v1228
      %v2275 = vpop.f32.mrf.mxu0
      %v2276 = vadd.f32 0.0, %v2275
      %2277 = vmatmul.f32.gmra.mxu0 %v1164
      %v2278 = vpop.f32.mrf.mxu0
      %v2279 = vadd.f32 0.0, %v2278
      %2280 = vmatmul.f32.gmra.mxu0 %v1229
      %v2281 = vpop.f32.mrf.mxu0
      %v2282 = vadd.f32 0.0, %v2281
      %2283 = vmatmul.f32.gmra.mxu0 %v1167
      %v2284 = vpop.f32.mrf.mxu0
      %v2285 = vadd.f32 0.0, %v2284
      %2286 = vmatmul.f32.gmra.mxu0 %v1230
      %v2287 = vpop.f32.mrf.mxu0
      %v2288 = vadd.f32 0.0, %v2287
      %2289 = vmatmul.f32.gmra.mxu0 %v1170
      %v2290 = vpop.f32.mrf.mxu0
      %v2291 = vadd.f32 0.0, %v2290
      %2292 = vmatmul.f32.gmra.mxu0 %v1231
      %v2293 = vpop.f32.mrf.mxu0
      %v2294 = vadd.f32 0.0, %v2293
      %2295 = vmatmul.f32.gmra.mxu0 %v1173
      %v2296 = vpop.f32.mrf.mxu0
      %v2297 = vadd.f32 0.0, %v2296
      %2298 = vmatmul.f32.gmra.mxu0 %v1232
      %v2299 = vpop.f32.mrf.mxu0
      %v2300 = vadd.f32 0.0, %v2299
      %2301 = vmatmul.f32.gmra.mxu0 %v1176
      %v2302 = vpop.f32.mrf.mxu0
      %v2303 = vadd.f32 0.0, %v2302
      %2304 = vmatmul.f32.gmra.mxu0 %v1233
      %v2305 = vpop.f32.mrf.mxu0
      %v2306 = vadd.f32 0.0, %v2305
      %2307 = vmatmul.f32.gmra.mxu0 %v1179
      %v2308 = vpop.f32.mrf.mxu0
      %v2309 = vadd.f32 0.0, %v2308
      %2310 = vmatmul.f32.gmra.mxu0 %v1234
      %v2311 = vpop.f32.mrf.mxu0
      %v2312 = vadd.f32 0.0, %v2311
      %2313 = vmatmul.f32.gmra.mxu0 %v1182
      %v2314 = vpop.f32.mrf.mxu0
      %v2315 = vadd.f32 0.0, %v2314
      %2316 = vmatmul.f32.gmra.mxu0 %v1235
      %v2317 = vpop.f32.mrf.mxu0
      %v2318 = vadd.f32 0.0, %v2317
      %2319 = vmatmul.f32.gmra.mxu0 %v1185
      %v2320 = vpop.f32.mrf.mxu0
      %v2321 = vadd.f32 0.0, %v2320
      %2322 = vmatmul.f32.gmra.mxu0 %v1236
      %v2323 = vpop.f32.mrf.mxu0
      %v2324 = vadd.f32 0.0, %v2323
      %2325 = vmatmul.f32.gmra.mxu0 %v1188
      %v2326 = vpop.f32.mrf.mxu0
      %v2327 = vadd.f32 0.0, %v2326
      %2328 = vmatmul.f32.gmra.mxu0 0.0
      %v2329 = vpop.f32.mrf.mxu0
      %v2330 = vadd.f32 0.0, %v2329
      %2331 = vmatmul.f32.gmra.mxu0 0.0
      %v2332 = vpop.f32.mrf.mxu0
      %v2333 = vadd.f32 0.0, %v2332
      %2334 = vdwg.mxu0
      %2335 = vmatpush.msra.mxu0 %v2205
      %2336 = vmatpush.msra.mxu0 %v2204
      %2337 = vmatpush.msra.mxu0 %v2203
      %2338 = vmatpush.msra.mxu0 %v2202
      %2339 = vmatpush.msra.mxu0 %v2201
      %2340 = vmatpush.msra.mxu0 %v2200
      %2341 = vmatpush.msra.mxu0 %v2199
      %2342 = vmatpush.msra.mxu0 %v2198
      %2343 = vmatpush.msra.mxu0 %v2197
      %2344 = vmatpush.msra.mxu0 %v2196
      %2345 = vmatpush.msra.mxu0 %v2195
      %2346 = vmatpush.msra.mxu0 %v2194
      %2347 = vmatpush.msra.mxu0 %v2193
      %2348 = vmatpush.msra.mxu0 %v2192
      %2349 = vmatpush.msra.mxu0 %v2191
      %2350 = vmatpush.msra.mxu0 %v2190
      %2351 = vmatmul.f32.gmra.mxu0 %v1078
      %v2352 = vpop.f32.mrf.mxu0
      %v2353 = vadd.f32 %v2240, %v2352
      %2354 = vmatmul.f32.gmra.mxu0 %v1079
      %v2355 = vpop.f32.mrf.mxu0
      %v2356 = vadd.f32 %v2243, %v2355
      %2357 = vmatmul.f32.gmra.mxu0 %v1080
      %v2358 = vpop.f32.mrf.mxu0
      %v2359 = vadd.f32 %v2246, %v2358
      %2360 = vmatmul.f32.gmra.mxu0 %v1081
      %v2361 = vpop.f32.mrf.mxu0
      %v2362 = vadd.f32 %v2249, %v2361
      %2363 = vmatmul.f32.gmra.mxu0 %v1082
      %v2364 = vpop.f32.mrf.mxu0
      %v2365 = vadd.f32 %v2252, %v2364
      %2366 = vmatmul.f32.gmra.mxu0 %v1083
      %v2367 = vpop.f32.mrf.mxu0
      %v2368 = vadd.f32 %v2255, %v2367
      %2369 = vmatmul.f32.gmra.mxu0 %v1084
      %v2370 = vpop.f32.mrf.mxu0
      %v2371 = vadd.f32 %v2258, %v2370
      %2372 = vmatmul.f32.gmra.mxu0 %v1085
      %v2373 = vpop.f32.mrf.mxu0
      %v2374 = vadd.f32 %v2261, %v2373
      %2375 = vmatmul.f32.gmra.mxu0 %v1086
      %v2376 = vpop.f32.mrf.mxu0
      %v2377 = vadd.f32 %v2264, %v2376
      %2378 = vmatmul.f32.gmra.mxu0 %v1087
      %v2379 = vpop.f32.mrf.mxu0
      %v2380 = vadd.f32 %v2267, %v2379
      %2381 = vmatmul.f32.gmra.mxu0 %v1088
      %v2382 = vpop.f32.mrf.mxu0
      %v2383 = vadd.f32 %v2270, %v2382
      %2384 = vmatmul.f32.gmra.mxu0 %v1089
      %v2385 = vpop.f32.mrf.mxu0
      %v2386 = vadd.f32 %v2273, %v2385
      %2387 = vmatmul.f32.gmra.mxu0 %v1090
      %v2388 = vpop.f32.mrf.mxu0
      %v2389 = vadd.f32 %v2276, %v2388
      %2390 = vmatmul.f32.gmra.mxu0 %v1091
      %v2391 = vpop.f32.mrf.mxu0
      %v2392 = vadd.f32 %v2279, %v2391
      %2393 = vmatmul.f32.gmra.mxu0 %v1092
      %v2394 = vpop.f32.mrf.mxu0
      %v2395 = vadd.f32 %v2282, %v2394
      %2396 = vmatmul.f32.gmra.mxu0 %v1093
      %v2397 = vpop.f32.mrf.mxu0
      %v2398 = vadd.f32 %v2285, %v2397
      %2399 = vmatmul.f32.gmra.mxu0 %v1094
      %v2400 = vpop.f32.mrf.mxu0
      %v2401 = vadd.f32 %v2288, %v2400
      %2402 = vmatmul.f32.gmra.mxu0 %v1095
      %v2403 = vpop.f32.mrf.mxu0
      %v2404 = vadd.f32 %v2291, %v2403
      %2405 = vmatmul.f32.gmra.mxu0 %v1096
      %v2406 = vpop.f32.mrf.mxu0
      %v2407 = vadd.f32 %v2294, %v2406
      %2408 = vmatmul.f32.gmra.mxu0 %v1097
      %v2409 = vpop.f32.mrf.mxu0
      %v2410 = vadd.f32 %v2297, %v2409
      %2411 = vmatmul.f32.gmra.mxu0 %v1098
      %v2412 = vpop.f32.mrf.mxu0
      %v2413 = vadd.f32 %v2300, %v2412
      %2414 = vmatmul.f32.gmra.mxu0 %v1099
      %v2415 = vpop.f32.mrf.mxu0
      %v2416 = vadd.f32 %v2303, %v2415
      %2417 = vmatmul.f32.gmra.mxu0 %v1100
      %v2418 = vpop.f32.mrf.mxu0
      %v2419 = vadd.f32 %v2306, %v2418
      %2420 = vmatmul.f32.gmra.mxu0 %v1101
      %v2421 = vpop.f32.mrf.mxu0
      %v2422 = vadd.f32 %v2309, %v2421
      %2423 = vmatmul.f32.gmra.mxu0 %v1102
      %v2424 = vpop.f32.mrf.mxu0
      %v2425 = vadd.f32 %v2312, %v2424
      %2426 = vmatmul.f32.gmra.mxu0 %v1103
      %v2427 = vpop.f32.mrf.mxu0
      %v2428 = vadd.f32 %v2315, %v2427
      %2429 = vmatmul.f32.gmra.mxu0 %v1104
      %v2430 = vpop.f32.mrf.mxu0
      %v2431 = vadd.f32 %v2318, %v2430
      %2432 = vmatmul.f32.gmra.mxu0 %v1105
      %v2433 = vpop.f32.mrf.mxu0
      %v2434 = vadd.f32 %v2321, %v2433
      %2435 = vmatmul.f32.gmra.mxu0 %v1106
      %v2436 = vpop.f32.mrf.mxu0
      %v2437 = vadd.f32 %v2324, %v2436
      %2438 = vmatmul.f32.gmra.mxu0 %v1107
      %v2439 = vpop.f32.mrf.mxu0
      %v2440 = vadd.f32 %v2327, %v2439
      %2441 = vmatmul.f32.gmra.mxu0 0.0
      %v2442 = vpop.f32.mrf.mxu0
      %v2443 = vadd.f32 %v2330, %v2442
      %2444 = vmatmul.f32.gmra.mxu0 0.0
      %v2445 = vpop.f32.mrf.mxu0
      %v2446 = vadd.f32 %v2333, %v2445
      %2447 = vdwg.mxu0
      %2448 = vmatpush.msra.mxu0 %v2221
      %2449 = vmatpush.msra.mxu0 %v2220
      %2450 = vmatpush.msra.mxu0 %v2219
      %2451 = vmatpush.msra.mxu0 %v2218
      %2452 = vmatpush.msra.mxu0 %v2217
      %2453 = vmatpush.msra.mxu0 %v2216
      %2454 = vmatpush.msra.mxu0 %v2215
      %2455 = vmatpush.msra.mxu0 %v2214
      %2456 = vmatpush.msra.mxu0 %v2213
      %2457 = vmatpush.msra.mxu0 %v2212
      %2458 = vmatpush.msra.mxu0 %v2211
      %2459 = vmatpush.msra.mxu0 %v2210
      %2460 = vmatpush.msra.mxu0 %v2209
      %2461 = vmatpush.msra.mxu0 %v2208
      %2462 = vmatpush.msra.mxu0 %v2207
      %2463 = vmatpush.msra.mxu0 %v2206
      %2464 = vmatmul.f32.gmra.mxu0 %v1243
      %v2465 = vpop.f32.mrf.mxu0
      %v2466 = vadd.f32 %v2353, %v2465
      %2467 = vmatmul.f32.gmra.mxu0 %v1319
      %v2468 = vpop.f32.mrf.mxu0
      %v2469 = vadd.f32 %v2356, %v2468
      %2470 = vmatmul.f32.gmra.mxu0 %v1246
      %v2471 = vpop.f32.mrf.mxu0
      %v2472 = vadd.f32 %v2359, %v2471
      %2473 = vmatmul.f32.gmra.mxu0 %v1320
      %v2474 = vpop.f32.mrf.mxu0
      %v2475 = vadd.f32 %v2362, %v2474
      %2476 = vmatmul.f32.gmra.mxu0 %v1249
      %v2477 = vpop.f32.mrf.mxu0
      %v2478 = vadd.f32 %v2365, %v2477
      %2479 = vmatmul.f32.gmra.mxu0 %v1321
      %v2480 = vpop.f32.mrf.mxu0
      %v2481 = vadd.f32 %v2368, %v2480
      %2482 = vmatmul.f32.gmra.mxu0 %v1252
      %v2483 = vpop.f32.mrf.mxu0
      %v2484 = vadd.f32 %v2371, %v2483
      %2485 = vmatmul.f32.gmra.mxu0 %v1322
      %v2486 = vpop.f32.mrf.mxu0
      %v2487 = vadd.f32 %v2374, %v2486
      %2488 = vmatmul.f32.gmra.mxu0 %v1255
      %v2489 = vpop.f32.mrf.mxu0
      %v2490 = vadd.f32 %v2377, %v2489
      %2491 = vmatmul.f32.gmra.mxu0 %v1323
      %v2492 = vpop.f32.mrf.mxu0
      %v2493 = vadd.f32 %v2380, %v2492
      %2494 = vmatmul.f32.gmra.mxu0 %v1258
      %v2495 = vpop.f32.mrf.mxu0
      %v2496 = vadd.f32 %v2383, %v2495
      %2497 = vmatmul.f32.gmra.mxu0 %v1324
      %v2498 = vpop.f32.mrf.mxu0
      %v2499 = vadd.f32 %v2386, %v2498
      %2500 = vmatmul.f32.gmra.mxu0 %v1261
      %v2501 = vpop.f32.mrf.mxu0
      %v2502 = vadd.f32 %v2389, %v2501
      %2503 = vmatmul.f32.gmra.mxu0 %v1325
      %v2504 = vpop.f32.mrf.mxu0
      %v2505 = vadd.f32 %v2392, %v2504
      %2506 = vmatmul.f32.gmra.mxu0 %v1264
      %v2507 = vpop.f32.mrf.mxu0
      %v2508 = vadd.f32 %v2395, %v2507
      %2509 = vmatmul.f32.gmra.mxu0 %v1326
      %v2510 = vpop.f32.mrf.mxu0
      %v2511 = vadd.f32 %v2398, %v2510
      %2512 = vmatmul.f32.gmra.mxu0 %v1267
      %v2513 = vpop.f32.mrf.mxu0
      %v2514 = vadd.f32 %v2401, %v2513
      %2515 = vmatmul.f32.gmra.mxu0 %v1327
      %v2516 = vpop.f32.mrf.mxu0
      %v2517 = vadd.f32 %v2404, %v2516
      %2518 = vmatmul.f32.gmra.mxu0 %v1270
      %v2519 = vpop.f32.mrf.mxu0
      %v2520 = vadd.f32 %v2407, %v2519
      %2521 = vmatmul.f32.gmra.mxu0 %v1328
      %v2522 = vpop.f32.mrf.mxu0
      %v2523 = vadd.f32 %v2410, %v2522
      %2524 = vmatmul.f32.gmra.mxu0 %v1273
      %v2525 = vpop.f32.mrf.mxu0
      %v2526 = vadd.f32 %v2413, %v2525
      %2527 = vmatmul.f32.gmra.mxu0 %v1329
      %v2528 = vpop.f32.mrf.mxu0
      %v2529 = vadd.f32 %v2416, %v2528
      %2530 = vmatmul.f32.gmra.mxu0 %v1276
      %v2531 = vpop.f32.mrf.mxu0
      %v2532 = vadd.f32 %v2419, %v2531
      %2533 = vmatmul.f32.gmra.mxu0 %v1330
      %v2534 = vpop.f32.mrf.mxu0
      %v2535 = vadd.f32 %v2422, %v2534
      %2536 = vmatmul.f32.gmra.mxu0 %v1279
      %v2537 = vpop.f32.mrf.mxu0
      %v2538 = vadd.f32 %v2425, %v2537
      %2539 = vmatmul.f32.gmra.mxu0 %v1331
      %v2540 = vpop.f32.mrf.mxu0
      %v2541 = vadd.f32 %v2428, %v2540
      %2542 = vmatmul.f32.gmra.mxu0 %v1282
      %v2543 = vpop.f32.mrf.mxu0
      %v2544 = vadd.f32 %v2431, %v2543
      %2545 = vmatmul.f32.gmra.mxu0 %v1332
      %v2546 = vpop.f32.mrf.mxu0
      %v2547 = vadd.f32 %v2434, %v2546
      %2548 = vmatmul.f32.gmra.mxu0 %v1285
      %v2549 = vpop.f32.mrf.mxu0
      %v2550 = vadd.f32 %v2437, %v2549
      %2551 = vmatmul.f32.gmra.mxu0 %v1333
      %v2552 = vpop.f32.mrf.mxu0
      %v2553 = vadd.f32 %v2440, %v2552
      %2554 = vmatmul.f32.gmra.mxu0 0.0
      %v2555 = vpop.f32.mrf.mxu0
      %v2556 = vadd.f32 %v2443, %v2555
      %2557 = vmatmul.f32.gmra.mxu0 0.0
      %v2558 = vpop.f32.mrf.mxu0
      %v2559 = vadd.f32 %v2446, %v2558
      %2560 = vdwg.mxu0
      %v2561 = vadd.f32 %v2141, %v2466
      %v2562 = vadd.f32 %v2142, %v2469
      %v2563 = vadd.f32 %v2143, %v2472
      %v2564 = vadd.f32 %v2144, %v2475
      %v2565 = vadd.f32 %v2145, %v2478
      %v2566 = vadd.f32 %v2146, %v2481
      %v2567 = vadd.f32 %v2147, %v2484
      %v2568 = vadd.f32 %v2148, %v2487
      %v2569 = vadd.f32 %v2149, %v2490
      %v2570 = vadd.f32 %v2150, %v2493
      %v2571 = vadd.f32 %v2151, %v2496
      %v2572 = vadd.f32 %v2152, %v2499
      %v2573 = vadd.f32 %v2153, %v2502
      %v2574 = vadd.f32 %v2154, %v2505
      %v2575 = vadd.f32 %v2155, %v2508
      %v2576 = vadd.f32 %v2156, %v2511
      %v2577 = vadd.f32 %v2157, %v2514
      %v2578 = vadd.f32 %v2158, %v2517
      %v2579 = vadd.f32 %v2159, %v2520
      %v2580 = vadd.f32 %v2160, %v2523
      %v2581 = vadd.f32 %v2161, %v2526
      %v2582 = vadd.f32 %v2162, %v2529
      %v2583 = vadd.f32 %v2163, %v2532
      %v2584 = vadd.f32 %v2164, %v2535
      %v2585 = vadd.f32 %v2165, %v2538
      %v2586 = vadd.f32 %v2166, %v2541
      %v2587 = vadd.f32 %v2167, %v2544
      %v2588 = vadd.f32 %v2168, %v2547
      %v2589 = vadd.f32 %v2169, %v2550
      %v2590 = vadd.f32 %v2170, %v2553
      %v2591 = vadd.f32 %v2171, %v2556
      %v2592 = vadd.f32 %v2172, %v2559
      %v2593 = vmax.f32 %v2561, 0.0
      %v2594 = vmax.f32 %v2562, 0.0
      %v2595 = vmax.f32 %v2563, 0.0
      %v2596 = vmax.f32 %v2564, 0.0
      %v2597 = vmax.f32 %v2565, 0.0
      %v2598 = vmax.f32 %v2566, 0.0
      %v2599 = vmax.f32 %v2567, 0.0
      %v2600 = vmax.f32 %v2568, 0.0
      %v2601 = vmax.f32 %v2569, 0.0
      %v2602 = vmax.f32 %v2570, 0.0
      %v2603 = vmax.f32 %v2571, 0.0
      %v2604 = vmax.f32 %v2572, 0.0
      %v2605 = vmax.f32 %v2573, 0.0
      %v2606 = vmax.f32 %v2574, 0.0
      %v2607 = vmax.f32 %v2575, 0.0
      %v2608 = vmax.f32 %v2576, 0.0
      %v2609 = vmax.f32 %v2577, 0.0
      %v2610 = vmax.f32 %v2578, 0.0
      %v2611 = vmax.f32 %v2579, 0.0
      %v2612 = vmax.f32 %v2580, 0.0
      %v2613 = vmax.f32 %v2581, 0.0
      %v2614 = vmax.f32 %v2582, 0.0
      %v2615 = vmax.f32 %v2583, 0.0
      %v2616 = vmax.f32 %v2584, 0.0
      %v2617 = vmax.f32 %v2585, 0.0
      %v2618 = vmax.f32 %v2586, 0.0
      %v2619 = vmax.f32 %v2587, 0.0
      %v2620 = vmax.f32 %v2588, 0.0
      %v2621 = vmax.f32 %v2589, 0.0
      %v2622 = vmax.f32 %v2590, 0.0
      %v2623 = vmax.f32 %v2591, 0.0
      %v2624 = vmax.f32 %v2592, 0.0
      %2625 = vst [vmem:[%s197] sm:$0xff] %v2593
      %2626 = vst [vmem:[%s197 + $0x8] sm:$0xff] %v2594
      %2627 = vst [vmem:[%s197 + $0x10] sm:$0xff] %v2595
      %2628 = vst [vmem:[%s197 + $0x18] sm:$0xff] %v2596
      %2629 = vst [vmem:[%s197 + $0x20] sm:$0xff] %v2597
      %2630 = vst [vmem:[%s197 + $0x28] sm:$0xff] %v2598
      %2631 = vst [vmem:[%s197 + $0x30] sm:$0xff] %v2599
      %2632 = vst [vmem:[%s197 + $0x38] sm:$0xff] %v2600
      %2633 = vst [vmem:[%s197 + $0x40] sm:$0xff] %v2601
      %2634 = vst [vmem:[%s197 + $0x48] sm:$0xff] %v2602
      %2635 = vst [vmem:[%s197 + $0x50] sm:$0xff] %v2603
      %2636 = vst [vmem:[%s197 + $0x58] sm:$0xff] %v2604
      %2637 = vst [vmem:[%s197 + $0x60] sm:$0xff] %v2605
      %2638 = vst [vmem:[%s197 + $0x68] sm:$0xff] %v2606
      %2639 = vst [vmem:[%s197 + $0x70] sm:$0xff] %v2607
      %2640 = vst [vmem:[%s197 + $0x78] sm:$0xff] %v2608
      %2641 = vst [vmem:[%s197 + $0x80] sm:$0xff] %v2609
      %2642 = vst [vmem:[%s197 + $0x88] sm:$0xff] %v2610
      %2643 = vst [vmem:[%s197 + $0x90] sm:$0xff] %v2611
      %2644 = vst [vmem:[%s197 + $0x98] sm:$0xff] %v2612
      %2645 = vst [vmem:[%s197 + $0xa0] sm:$0xff] %v2613
      %2646 = vst [vmem:[%s197 + $0xa8] sm:$0xff] %v2614
      %2647 = vst [vmem:[%s197 + $0xb0] sm:$0xff] %v2615
      %2648 = vst [vmem:[%s197 + $0xb8] sm:$0xff] %v2616
      %2649 = vst [vmem:[%s197 + $0xc0] sm:$0xff] %v2617
      %2650 = vst [vmem:[%s197 + $0xc8] sm:$0xff] %v2618
      %2651 = vst [vmem:[%s197 + $0xd0] sm:$0xff] %v2619
      %2652 = vst [vmem:[%s197 + $0xd8] sm:$0xff] %v2620
      %2653 = vst [vmem:[%s197 + $0xe0] sm:$0xff] %v2621
      %2654 = vst [vmem:[%s197 + $0xe8] sm:$0xff] %v2622
      %2655 = vst [vmem:[%s197 + $0xf0] sm:$0xff] %v2623
      %2656 = vst [vmem:[%s197 + $0xf8] sm:$0xff] %v2624
      %p2657 = scmp.lt.s32.totalorder %s15, 1
      %s2658 = scalar_select %p2657, %s15, 1
      %s2659 = smul.addr %s2658, 32
      %s2660 = smul.addr %s2659, 8
      %s2661 = scalar_lea.vmem %s4, %s2660
      // Predicated region
      $region37: #{run.2} parent=35 // pred_check
        %p2662 = pneg %p122
      $region38: #{run.2} parent=35 // pred_check_branch
        %2664 = sbr.rel (%p2662) target = $region40
      $region39: #{run.2} parent=35 // pred_region
        _
      $region40: #{run.2} parent=35 // pred_fallthru
        _
    $region36: #{run.2} parent=5 // pred_fallthru
      _
    %p2665 = scmp.le.s32.totalorder 2, %s10
    // Predicated region
    $region41: #{run.2} parent=5 // pred_check
      %p2666 = pneg %p2665
    $region42: #{run.2} parent=5 // pred_check_branch
      %2668 = sbr.rel (%p2666) target = $region44
    $region43: #{run.2} parent=5 // pred_region
      %s2669 = ssub.s32 %s10, 2
      // Predicated region
      $region45: #{run.2} parent=43 // pred_check
        %p2670 = pneg %p128
      $region46: #{run.2} parent=43 // pred_check_branch
        %2672 = sbr.rel (%p2670) target = $region48
      $region47: #{run.2} parent=43 // pred_region
        %p2673 = scmp.lt.s32.totalorder %s16, 1
        %s2674 = scalar_select %p2673, %s16, 1
        %s2675 = smul.addr %s2674, 32
        %s2676 = smul.addr %s2675, 8
        %s2677 = scalar_lea.vmem %s4, %s2676
      $region48: #{run.2} parent=43 // pred_fallthru
        _
    $region44: #{run.2} parent=5 // pred_fallthru
      _
  $region6: #{run.2} parent=0 // loop_footer
    %s14 = sadd.s32 1, %s10
  $region7: #{run.2} parent=0 // loop_footer_branch
    %9 = sbr.rel target = $region3
  $region8: #{run.2} parent=0 // loop_exit
    _

// kernel: run.3
$region0: #{run.3}
  #allocation0 [shape = 'u32[]', space=smem, size = 0x4, offset = 0x4, fixed_abs, tag = 'smem constant byte address 0x4 - core index']
  #allocation1 [shape = 'u32[72,128]{1,0:T(1,128)}', space=vmem, size = 0x9000, scoped, tag = 'internal scratch']
  %s0 = inlined_call_operand.vmem [shape: f32[2,2,9,8,128], index: 0, kind: input, shape index: {}]
  %s1 = inlined_call_operand.vmem [shape: f32[384,256], index: 1, kind: input, shape index: {}]
  %s2 = inlined_call_operand.vmem [shape: f32[1,256], index: 2, kind: input, shape index: {}]
  %s3 = inlined_call_operand.vmem [shape: f32[3,384,128], index: 3, kind: input, shape index: {}]
  %s4 = inlined_call_operand.vmem [shape: f32[2,8,8,128], index: 4, kind: output, shape index: {}]
  %s5 = sld [smem:[#allocation0]]
  $region49: #{run.3} parent=0
    _
  %s7 = ssub.s32 1, %s5
  %s8 = scalar_select 0, %s7, %s5
  loop: start=0, step=1, limit=4
  $region2: #{run.3} parent=0 // loop_pre_header
    _
  $region3: #{run.3} parent=0 // loop_header
    %s10 = sphi 0, %s14
    %p11 = scmp.ge.s32.totalorder %s10, 4
    %s20 = sphi 0, %s22
    %s23 = sphi 0, %s20
    %s24 = sphi 0, %s23
    %s40 = sphi 0, %s24
    %s44 = sphi 0, %s44
    %s46 = sphi 0, %s44
    %s47 = sphi 0, %s46
    %s61 = sphi 0, %s47
    %s65 = sphi 0, %s65
    %s67 = sphi 0, %s65
    %s68 = sphi 0, %s67
    %s82 = sphi 0, %s68
    %s86 = sphi 0, %s86
    %s88 = sphi 0, %s86
    %s89 = sphi 0, %s88
    %s103 = sphi 0, %s89
    %s109 = sphi 0, %s111
    %s112 = sphi 0, %s109
    %s113 = sphi 0, %s112
    %s129 = sphi 0, %s113
  $region4: #{run.3} parent=0 // loop_header_branch
    %13 = sbr.rel (%p11) target = $region8
  $region5: #{run.3} parent=0 // loop_body
    %s15 = ssub.s32 %s10, 1
    %s16 = ssub.s32 %s10, 2
    %s17 = sadd.s32 %s10, 1
    %s18 = ssub.s32 %s10, %s17
    %p19 = scmp.eq.s32.totalorder %s18, 0
    %s21 = sadd.s32 %s20, 1
    %s22 = scalar_select %p19, %s20, %s21
    %p25 = pneg %p19
    %p26 = scmp.eq.s32.totalorder %s10, 1
    %p27 = por %p25, %p26
    %p28 = scmp.ne.s32.totalorder %s20, %s23
    %p29 = scmp.eq.s32.totalorder %s10, 0
    %p30 = por %p28, %p29
    %p31 = scmp.ne.s32.totalorder %s20, %s23
    %p32 = scmp.eq.s32.totalorder %s15, 1
    %p33 = por %p31, %p32
    %p34 = scmp.ne.s32.totalorder %s23, %s24
    %p35 = scmp.eq.s32.totalorder %s15, 0
    %p36 = por %p34, %p35
    %p37 = scmp.ne.s32.totalorder %s23, %s24
    %p38 = scmp.eq.s32.totalorder %s16, 1
    %p39 = por %p37, %p38
    %p41 = scmp.ne.s32.totalorder %s24, %s40
    %p42 = scmp.eq.s32.totalorder %s16, 0
    %p43 = por %p41, %p42
    %s45 = sadd.s32 %s44, 1
    %p48 = scmp.eq.s32.totalorder %s10, 1
    %p49 = scmp.ne.s32.totalorder %s44, %s46
    %p50 = scmp.eq.s32.totalorder %s10, 0
    %p51 = por %p49, %p50
    %p52 = scmp.ne.s32.totalorder %s44, %s46
    %p53 = scmp.eq.s32.totalorder %s15, 1
    %p54 = por %p52, %p53
    %p55 = scmp.ne.s32.totalorder %s46, %s47
    %p56 = scmp.eq.s32.totalorder %s15, 0
    %p57 = por %p55, %p56
    %p58 = scmp.ne.s32.totalorder %s46, %s47
    %p59 = scmp.eq.s32.totalorder %s16, 1
    %p60 = por %p58, %p59
    %p62 = scmp.ne.s32.totalorder %s47, %s61
    %p63 = scmp.eq.s32.totalorder %s16, 0
    %p64 = por %p62, %p63
    %s66 = sadd.s32 %s65, 1
    %p69 = scmp.eq.s32.totalorder %s10, 1
    %p70 = scmp.ne.s32.totalorder %s65, %s67
    %p71 = scmp.eq.s32.totalorder %s10, 0
    %p72 = por %p70, %p71
    %p73 = scmp.ne.s32.totalorder %s65, %s67
    %p74 = scmp.eq.s32.totalorder %s15, 1
    %p75 = por %p73, %p74
    %p76 = scmp.ne.s32.totalorder %s67, %s68
    %p77 = scmp.eq.s32.totalorder %s15, 0
    %p78 = por %p76, %p77
    %p79 = scmp.ne.s32.totalorder %s67, %s68
    %p80 = scmp.eq.s32.totalorder %s16, 1
    %p81 = por %p79, %p80
    %p83 = scmp.ne.s32.totalorder %s68, %s82
    %p84 = scmp.eq.s32.totalorder %s16, 0
    %p85 = por %p83, %p84
    %s87 = sadd.s32 %s86, 1
    %p90 = scmp.eq.s32.totalorder %s10, 1
    %p91 = scmp.ne.s32.totalorder %s86, %s88
    %p92 = scmp.eq.s32.totalorder %s10, 0
    %p93 = por %p91, %p92
    %p94 = scmp.ne.s32.totalorder %s86, %s88
    %p95 = scmp.eq.s32.totalorder %s15, 1
    %p96 = por %p94, %p95
    %p97 = scmp.ne.s32.totalorder %s88, %s89
    %p98 = scmp.eq.s32.totalorder %s15, 0
    %p99 = por %p97, %p98
    %p100 = scmp.ne.s32.totalorder %s88, %s89
    %p101 = scmp.eq.s32.totalorder %s16, 1
    %p102 = por %p100, %p101
    %p104 = scmp.ne.s32.totalorder %s89, %s103
    %p105 = scmp.eq.s32.totalorder %s16, 0
    %p106 = por %p104, %p105
    %s107 = ssub.s32 %s10, %s17
    %p108 = scmp.eq.s32.totalorder %s107, 0
    %s110 = sadd.s32 %s109, 1
    %s111 = scalar_select %p108, %s109, %s110
    %p114 = pneg %p108
    %p115 = scmp.eq.s32.totalorder %s10, 1
    %p116 = por %p114, %p115
    %p117 = scmp.ne.s32.totalorder %s109, %s112
    %p118 = scmp.eq.s32.totalorder %s10, 0
    %p119 = por %p117, %p118
    %p120 = scmp.ne.s32.totalorder %s109, %s112
    %p121 = scmp.eq.s32.totalorder %s15, 1
    %p122 = por %p120, %p121
    %p123 = scmp.ne.s32.totalorder %s112, %s113
    %p124 = scmp.eq.s32.totalorder %s15, 0
    %p125 = por %p123, %p124
    %p126 = scmp.ne.s32.totalorder %s112, %s113
    %p127 = scmp.eq.s32.totalorder %s16, 1
    %p128 = por %p126, %p127
    %p130 = scmp.ne.s32.totalorder %s113, %s129
    %p131 = scmp.eq.s32.totalorder %s16, 0
    %p132 = por %p130, %p131
    %p133 = scmp.le.s32.totalorder 1, %s10
    %p134 = scmp.lt.s32.totalorder %s10, 3
    %p135 = pnand %p133, %p134
    %p136 = pneg %p135
    // Predicated region
    $region9: #{run.3} parent=5 // pred_check
      _
    $region10: #{run.3} parent=5 // pred_check_branch
      %138 = sbr.rel (%p135) target = $region12
    $region11: #{run.3} parent=5 // pred_region
      %s139 = ssub.s32 %s10, 1
      // Predicated region
      $region13: #{run.3} parent=11 // pred_check
        %p140 = pneg %p57
      $region14: #{run.3} parent=11 // pred_check_branch
        %142 = sbr.rel (%p140) target = $region16
      $region15: #{run.3} parent=11 // pred_region
        _
      $region16: #{run.3} parent=11 // pred_fallthru
        _
      // Predicated region
      $region17: #{run.3} parent=11 // pred_check
        %p143 = pneg %p78
      $region18: #{run.3} parent=11 // pred_check_branch
        %145 = sbr.rel (%p143) target = $region20
      $region19: #{run.3} parent=11 // pred_region
        _
      $region20: #{run.3} parent=11 // pred_fallthru
        _
      // Predicated region
      $region21: #{run.3} parent=11 // pred_check
        %p146 = pneg %p99
      $region22: #{run.3} parent=11 // pred_check_branch
        %148 = sbr.rel (%p146) target = $region24
      $region23: #{run.3} parent=11 // pred_region
        _
      $region24: #{run.3} parent=11 // pred_fallthru
        _
    $region12: #{run.3} parent=5 // pred_fallthru
      _
    %p149 = scmp.lt.s32.totalorder %s10, 2
    // Predicated region
    $region25: #{run.3} parent=5 // pred_check
      %p150 = pneg %p149
    $region26: #{run.3} parent=5 // pred_check_branch
      %152 = sbr.rel (%p150) target = $region28
    $region27: #{run.3} parent=5 // pred_region
      // Predicated region
      $region29: #{run.3} parent=27 // pred_check
        %p153 = pneg %p30
      $region30: #{run.3} parent=27 // pred_check_branch
        %155 = sbr.rel (%p153) target = $region32
      $region31: #{run.3} parent=27 // pred_region
        %p156 = scmp.lt.s32.totalorder %s10, 1
        %s157 = scalar_select %p156, %s10, 1
        %s158 = smul.addr %s157, 18
        %s159 = smul.addr %s158, 8
        %s160 = scalar_lea.vmem %s0, %s159
      $region32: #{run.3} parent=27 // pred_fallthru
        _
    $region28: #{run.3} parent=5 // pred_fallthru
      _
    %p161 = scmp.le.s32.totalorder 1, %s10
    %p162 = scmp.lt.s32.totalorder %s10, 3
    %p163 = pnand %p161, %p162
    %p164 = pneg %p163
    // Predicated region
    $region33: #{run.3} parent=5 // pred_check
      _
    $region34: #{run.3} parent=5 // pred_check_branch
      %166 = sbr.rel (%p163) target = $region36
    $region35: #{run.3} parent=5 // pred_region
      %s167 = ssub.s32 %s10, 1
      %p168 = scmp.lt.s32.totalorder %s15, 1
      %s169 = scalar_select %p168, %s15, 1
      %s170 = smul.addr %s169, 18
      %s171 = smul.addr %s170, 8
      %s172 = scalar_lea.vmem %s0, %s171
      %p173 = pneg %p36
      %p174 = pneg %p33
      %p175 = pneg %p57
      %p176 = pneg %p54
      %p177 = pneg %p78
      %p178 = pneg %p75
      %p179 = pneg %p99
      %p180 = pneg %p96
      %p181 = pneg %p125
      %p182 = pneg %p122
      %p183 = scmp.lt.s32.totalorder %s15, 1
      %s184 = scalar_select %p183, %s15, 1
      %s185 = smul.addr %s184, 8
      %s186 = smul.addr %s185, 8
      %s187 = scalar_lea.vmem %s4, %s186
      %p188 = scmp.lt.s32.totalorder %s15, 1
      %s189 = scalar_select %p188, %s15, 1
      %s190 = smul.addr %s189, 18
      %s191 = smul.addr %s190, 8
      %s192 = scalar_lea.vmem %s0, %s191
      %p193 = scmp.lt.s32.totalorder %s15, 1
      %s194 = scalar_select %p193, %s15, 1
      %s195 = smul.addr %s194, 8
      %s196 = smul.addr %s195, 8
      %s197 = scalar_lea.vmem %s4, %s196
      %v198 = vld [vmem:[%s192] sm:$0xff]
      %v199 = vld [vmem:[%s192 + $0x8] sm:$0xff]
      %v200 = vld [vmem:[%s192 + $0x10] sm:$0xff]
      %v201 = vld [vmem:[%s192 + $0x18] sm:$0xff]
      %v202 = vld [vmem:[%s192 + $0x20] sm:$0xff]
      %v203 = vld [vmem:[%s192 + $0x28] sm:$0xff]
      %v204 = vld [vmem:[%s192 + $0x30] sm:$0xff]
      %v205 = vld [vmem:[%s192 + $0x38] sm:$0xff]
      %s206 = scalar_lea.vmem %s192, 72
      %v207 = vld [vmem:[%s206] sm:$0xff]
      %v208 = vld [vmem:[%s206 + $0x8] sm:$0xff]
      %v209 = vld [vmem:[%s206 + $0x10] sm:$0xff]
      %v210 = vld [vmem:[%s206 + $0x18] sm:$0xff]
      %v211 = vld [vmem:[%s206 + $0x20] sm:$0xff]
      %v212 = vld [vmem:[%s206 + $0x28] sm:$0xff]
      %v213 = vld [vmem:[%s206 + $0x30] sm:$0xff]
      %v214 = vld [vmem:[%s206 + $0x38] sm:$0xff]
      %s215 = scalar_lea.vmem %s192, 8
      %v216 = vld [vmem:[%s215] sm:$0xff]
      %v217 = vld [vmem:[%s215 + $0x8] sm:$0xff]
      %v218 = vld [vmem:[%s215 + $0x10] sm:$0xff]
      %v219 = vld [vmem:[%s215 + $0x18] sm:$0xff]
      %v220 = vld [vmem:[%s215 + $0x20] sm:$0xff]
      %v221 = vld [vmem:[%s215 + $0x28] sm:$0xff]
      %v222 = vld [vmem:[%s215 + $0x30] sm:$0xff]
      %v223 = vld [vmem:[%s215 + $0x38] sm:$0xff]
      %v224 = vld [vmem:[%s1] sm:$0xff]
      %v225 = vld [vmem:[%s1 + $0x8] sm:$0xff]
      %v226 = vld [vmem:[%s1 + $0x10] sm:$0xff]
      %v227 = vld [vmem:[%s1 + $0x18] sm:$0xff]
      %v228 = vld [vmem:[%s1 + $0x20] sm:$0xff]
      %v229 = vld [vmem:[%s1 + $0x28] sm:$0xff]
      %v230 = vld [vmem:[%s1 + $0x30] sm:$0xff]
      %v231 = vld [vmem:[%s1 + $0x38] sm:$0xff]
      %v232 = vld [vmem:[%s1 + $0x40] sm:$0xff]
      %v233 = vld [vmem:[%s1 + $0x48] sm:$0xff]
      %v234 = vld [vmem:[%s1 + $0x50] sm:$0xff]
      %v235 = vld [vmem:[%s1 + $0x58] sm:$0xff]
      %v236 = vld [vmem:[%s1 + $0x60] sm:$0xff]
      %v237 = vld [vmem:[%s1 + $0x68] sm:$0xff]
      %v238 = vld [vmem:[%s1 + $0x70] sm:$0xff]
      %v239 = vld [vmem:[%s1 + $0x78] sm:$0xff]
      %v240 = vld [vmem:[%s1 + $0x80] sm:$0xff]
      %v241 = vld [vmem:[%s1 + $0x88] sm:$0xff]
      %v242 = vld [vmem:[%s1 + $0x90] sm:$0xff]
      %v243 = vld [vmem:[%s1 + $0x98] sm:$0xff]
      %v244 = vld [vmem:[%s1 + $0xa0] sm:$0xff]
      %v245 = vld [vmem:[%s1 + $0xa8] sm:$0xff]
      %v246 = vld [vmem:[%s1 + $0xb0] sm:$0xff]
      %v247 = vld [vmem:[%s1 + $0xb8] sm:$0xff]
      %v248 = vld [vmem:[%s1 + $0xc0] sm:$0xff]
      %v249 = vld [vmem:[%s1 + $0xc8] sm:$0xff]
      %v250 = vld [vmem:[%s1 + $0xd0] sm:$0xff]
      %v251 = vld [vmem:[%s1 + $0xd8] sm:$0xff]
      %v252 = vld [vmem:[%s1 + $0xe0] sm:$0xff]
      %v253 = vld [vmem:[%s1 + $0xe8] sm:$0xff]
      %v254 = vld [vmem:[%s1 + $0xf0] sm:$0xff]
      %v255 = vld [vmem:[%s1 + $0xf8] sm:$0xff]
      %v256 = vld [vmem:[%s1 + $0x100] sm:$0xff]
      %v257 = vld [vmem:[%s1 + $0x108] sm:$0xff]
      %v258 = vld [vmem:[%s1 + $0x110] sm:$0xff]
      %v259 = vld [vmem:[%s1 + $0x118] sm:$0xff]
      %v260 = vld [vmem:[%s1 + $0x120] sm:$0xff]
      %v261 = vld [vmem:[%s1 + $0x128] sm:$0xff]
      %v262 = vld [vmem:[%s1 + $0x130] sm:$0xff]
      %v263 = vld [vmem:[%s1 + $0x138] sm:$0xff]
      %v264 = vld [vmem:[%s1 + $0x140] sm:$0xff]
      %v265 = vld [vmem:[%s1 + $0x148] sm:$0xff]
      %v266 = vld [vmem:[%s1 + $0x150] sm:$0xff]
      %v267 = vld [vmem:[%s1 + $0x158] sm:$0xff]
      %v268 = vld [vmem:[%s1 + $0x160] sm:$0xff]
      %v269 = vld [vmem:[%s1 + $0x168] sm:$0xff]
      %v270 = vld [vmem:[%s1 + $0x170] sm:$0xff]
      %v271 = vld [vmem:[%s1 + $0x178] sm:$0xff]
      %v272 = vld [vmem:[%s1 + $0x180] sm:$0xff]
      %v273 = vld [vmem:[%s1 + $0x188] sm:$0xff]
      %v274 = vld [vmem:[%s1 + $0x190] sm:$0xff]
      %v275 = vld [vmem:[%s1 + $0x198] sm:$0xff]
      %v276 = vld [vmem:[%s1 + $0x1a0] sm:$0xff]
      %v277 = vld [vmem:[%s1 + $0x1a8] sm:$0xff]
      %v278 = vld [vmem:[%s1 + $0x1b0] sm:$0xff]
      %v279 = vld [vmem:[%s1 + $0x1b8] sm:$0xff]
      %v280 = vld [vmem:[%s1 + $0x1c0] sm:$0xff]
      %v281 = vld [vmem:[%s1 + $0x1c8] sm:$0xff]
      %v282 = vld [vmem:[%s1 + $0x1d0] sm:$0xff]
      %v283 = vld [vmem:[%s1 + $0x1d8] sm:$0xff]
      %v284 = vld [vmem:[%s1 + $0x1e0] sm:$0xff]
      %v285 = vld [vmem:[%s1 + $0x1e8] sm:$0xff]
      %v286 = vld [vmem:[%s1 + $0x1f0] sm:$0xff]
      %v287 = vld [vmem:[%s1 + $0x1f8] sm:$0xff]
      %v288 = vld [vmem:[%s1 + $0x200] sm:$0xff]
      %v289 = vld [vmem:[%s1 + $0x208] sm:$0xff]
      %v290 = vld [vmem:[%s1 + $0x210] sm:$0xff]
      %v291 = vld [vmem:[%s1 + $0x218] sm:$0xff]
      %v292 = vld [vmem:[%s1 + $0x220] sm:$0xff]
      %v293 = vld [vmem:[%s1 + $0x228] sm:$0xff]
      %v294 = vld [vmem:[%s1 + $0x230] sm:$0xff]
      %v295 = vld [vmem:[%s1 + $0x238] sm:$0xff]
      %v296 = vld [vmem:[%s1 + $0x240] sm:$0xff]
      %v297 = vld [vmem:[%s1 + $0x248] sm:$0xff]
      %v298 = vld [vmem:[%s1 + $0x250] sm:$0xff]
      %v299 = vld [vmem:[%s1 + $0x258] sm:$0xff]
      %v300 = vld [vmem:[%s1 + $0x260] sm:$0xff]
      %v301 = vld [vmem:[%s1 + $0x268] sm:$0xff]
      %v302 = vld [vmem:[%s1 + $0x270] sm:$0xff]
      %v303 = vld [vmem:[%s1 + $0x278] sm:$0xff]
      %v304 = vld [vmem:[%s1 + $0x280] sm:$0xff]
      %v305 = vld [vmem:[%s1 + $0x288] sm:$0xff]
      %v306 = vld [vmem:[%s1 + $0x290] sm:$0xff]
      %v307 = vld [vmem:[%s1 + $0x298] sm:$0xff]
      %v308 = vld [vmem:[%s1 + $0x2a0] sm:$0xff]
      %v309 = vld [vmem:[%s1 + $0x2a8] sm:$0xff]
      %v310 = vld [vmem:[%s1 + $0x2b0] sm:$0xff]
      %v311 = vld [vmem:[%s1 + $0x2b8] sm:$0xff]
      %v312 = vld [vmem:[%s1 + $0x2c0] sm:$0xff]
      %v313 = vld [vmem:[%s1 + $0x2c8] sm:$0xff]
      %v314 = vld [vmem:[%s1 + $0x2d0] sm:$0xff]
      %v315 = vld [vmem:[%s1 + $0x2d8] sm:$0xff]
      %v316 = vld [vmem:[%s1 + $0x2e0] sm:$0xff]
      %v317 = vld [vmem:[%s1 + $0x2e8] sm:$0xff]
      %v318 = vld [vmem:[%s1 + $0x2f0] sm:$0xff]
      %v319 = vld [vmem:[%s1 + $0x2f8] sm:$0xff]
      %v320 = vld [vmem:[%s2] sm:$0x3]
      %v322 = vperm.slane %v320, 0
      %v323 = vperm.slane %v320, 1
      %326 = vmatpush.msra.mxu0 %v254
      %327 = vmatpush.msra.mxu0 %v252
      %328 = vmatpush.msra.mxu0 %v250
      %329 = vmatpush.msra.mxu0 %v248
      %330 = vmatpush.msra.mxu0 %v246
      %331 = vmatpush.msra.mxu0 %v244
      %332 = vmatpush.msra.mxu0 %v242
      %333 = vmatpush.msra.mxu0 %v240
      %334 = vmatpush.msra.mxu0 %v238
      %335 = vmatpush.msra.mxu0 %v236
      %336 = vmatpush.msra.mxu0 %v234
      %337 = vmatpush.msra.mxu0 %v232
      %338 = vmatpush.msra.mxu0 %v230
      %339 = vmatpush.msra.mxu0 %v228
      %340 = vmatpush.msra.mxu0 %v226
      %341 = vmatpush.msra.mxu0 %v224
      %342 = vmatmul.f32.gmra.mxu0 %v198
      %v343 = vpop.f32.mrf.mxu0
      %v344 = vadd.f32 %v322, %v343
      %345 = vmatmul.f32.gmra.mxu0 %v199
      %v346 = vpop.f32.mrf.mxu0
      %v347 = vadd.f32 %v322, %v346
      %348 = vmatmul.f32.gmra.mxu0 %v200
      %v349 = vpop.f32.mrf.mxu0
      %v350 = vadd.f32 %v322, %v349
      %351 = vmatmul.f32.gmra.mxu0 %v201
      %v352 = vpop.f32.mrf.mxu0
      %v353 = vadd.f32 %v322, %v352
      %354 = vmatmul.f32.gmra.mxu0 %v202
      %v355 = vpop.f32.mrf.mxu0
      %v356 = vadd.f32 %v322, %v355
      %357 = vmatmul.f32.gmra.mxu0 %v203
      %v358 = vpop.f32.mrf.mxu0
      %v359 = vadd.f32 %v322, %v358
      %360 = vmatmul.f32.gmra.mxu0 %v204
      %v361 = vpop.f32.mrf.mxu0
      %v362 = vadd.f32 %v322, %v361
      %363 = vmatmul.f32.gmra.mxu0 %v205
      %v364 = vpop.f32.mrf.mxu0
      %v365 = vadd.f32 %v322, %v364
      %366 = vdwg.mxu0
      %367 = vmatpush.msra.mxu0 %v286
      %368 = vmatpush.msra.mxu0 %v284
      %369 = vmatpush.msra.mxu0 %v282
      %370 = vmatpush.msra.mxu0 %v280
      %371 = vmatpush.msra.mxu0 %v278
      %372 = vmatpush.msra.mxu0 %v276
      %373 = vmatpush.msra.mxu0 %v274
      %374 = vmatpush.msra.mxu0 %v272
      %375 = vmatpush.msra.mxu0 %v270
      %376 = vmatpush.msra.mxu0 %v268
      %377 = vmatpush.msra.mxu0 %v266
      %378 = vmatpush.msra.mxu0 %v264
      %379 = vmatpush.msra.mxu0 %v262
      %380 = vmatpush.msra.mxu0 %v260
      %381 = vmatpush.msra.mxu0 %v258
      %382 = vmatpush.msra.mxu0 %v256
      %383 = vmatmul.f32.gmra.mxu0 %v207
      %v384 = vpop.f32.mrf.mxu0
      %v385 = vadd.f32 %v344, %v384
      %386 = vmatmul.f32.gmra.mxu0 %v208
      %v387 = vpop.f32.mrf.mxu0
      %v388 = vadd.f32 %v347, %v387
      %389 = vmatmul.f32.gmra.mxu0 %v209
      %v390 = vpop.f32.mrf.mxu0
      %v391 = vadd.f32 %v350, %v390
      %392 = vmatmul.f32.gmra.mxu0 %v210
      %v393 = vpop.f32.mrf.mxu0
      %v394 = vadd.f32 %v353, %v393
      %395 = vmatmul.f32.gmra.mxu0 %v211
      %v396 = vpop.f32.mrf.mxu0
      %v397 = vadd.f32 %v356, %v396
      %398 = vmatmul.f32.gmra.mxu0 %v212
      %v399 = vpop.f32.mrf.mxu0
      %v400 = vadd.f32 %v359, %v399
      %401 = vmatmul.f32.gmra.mxu0 %v213
      %v402 = vpop.f32.mrf.mxu0
      %v403 = vadd.f32 %v362, %v402
      %404 = vmatmul.f32.gmra.mxu0 %v214
      %v405 = vpop.f32.mrf.mxu0
      %v406 = vadd.f32 %v365, %v405
      %407 = vdwg.mxu0
      %408 = vmatpush.msra.mxu0 %v318
      %409 = vmatpush.msra.mxu0 %v316
      %410 = vmatpush.msra.mxu0 %v314
      %411 = vmatpush.msra.mxu0 %v312
      %412 = vmatpush.msra.mxu0 %v310
      %413 = vmatpush.msra.mxu0 %v308
      %414 = vmatpush.msra.mxu0 %v306
      %415 = vmatpush.msra.mxu0 %v304
      %416 = vmatpush.msra.mxu0 %v302
      %417 = vmatpush.msra.mxu0 %v300
      %418 = vmatpush.msra.mxu0 %v298
      %419 = vmatpush.msra.mxu0 %v296
      %420 = vmatpush.msra.mxu0 %v294
      %421 = vmatpush.msra.mxu0 %v292
      %422 = vmatpush.msra.mxu0 %v290
      %423 = vmatpush.msra.mxu0 %v288
      %424 = vmatmul.f32.gmra.mxu0 %v216
      %v425 = vpop.f32.mrf.mxu0
      %v426 = vadd.f32 %v385, %v425
      %427 = vmatmul.f32.gmra.mxu0 %v217
      %v428 = vpop.f32.mrf.mxu0
      %v429 = vadd.f32 %v388, %v428
      %430 = vmatmul.f32.gmra.mxu0 %v218
      %v431 = vpop.f32.mrf.mxu0
      %v432 = vadd.f32 %v391, %v431
      %433 = vmatmul.f32.gmra.mxu0 %v219
      %v434 = vpop.f32.mrf.mxu0
      %v435 = vadd.f32 %v394, %v434
      %436 = vmatmul.f32.gmra.mxu0 %v220
      %v437 = vpop.f32.mrf.mxu0
      %v438 = vadd.f32 %v397, %v437
      %439 = vmatmul.f32.gmra.mxu0 %v221
      %v440 = vpop.f32.mrf.mxu0
      %v441 = vadd.f32 %v400, %v440
      %442 = vmatmul.f32.gmra.mxu0 %v222
      %v443 = vpop.f32.mrf.mxu0
      %v444 = vadd.f32 %v403, %v443
      %445 = vmatmul.f32.gmra.mxu0 %v223
      %v446 = vpop.f32.mrf.mxu0
      %v447 = vadd.f32 %v406, %v446
      %448 = vdwg.mxu0
      %449 = vmatpush.msra.mxu0 %v255
      %450 = vmatpush.msra.mxu0 %v253
      %451 = vmatpush.msra.mxu0 %v251
      %452 = vmatpush.msra.mxu0 %v249
      %453 = vmatpush.msra.mxu0 %v247
      %454 = vmatpush.msra.mxu0 %v245
      %455 = vmatpush.msra.mxu0 %v243
      %456 = vmatpush.msra.mxu0 %v241
      %457 = vmatpush.msra.mxu0 %v239
      %458 = vmatpush.msra.mxu0 %v237
      %459 = vmatpush.msra.mxu0 %v235
      %460 = vmatpush.msra.mxu0 %v233
      %461 = vmatpush.msra.mxu0 %v231
      %462 = vmatpush.msra.mxu0 %v229
      %463 = vmatpush.msra.mxu0 %v227
      %464 = vmatpush.msra.mxu0 %v225
      %465 = vmatmul.f32.gmra.mxu0 %v198
      %v466 = vpop.f32.mrf.mxu0
      %v467 = vadd.f32 %v323, %v466
      %468 = vmatmul.f32.gmra.mxu0 %v199
      %v469 = vpop.f32.mrf.mxu0
      %v470 = vadd.f32 %v323, %v469
      %471 = vmatmul.f32.gmra.mxu0 %v200
      %v472 = vpop.f32.mrf.mxu0
      %v473 = vadd.f32 %v323, %v472
      %474 = vmatmul.f32.gmra.mxu0 %v201
      %v475 = vpop.f32.mrf.mxu0
      %v476 = vadd.f32 %v323, %v475
      %477 = vmatmul.f32.gmra.mxu0 %v202
      %v478 = vpop.f32.mrf.mxu0
      %v479 = vadd.f32 %v323, %v478
      %480 = vmatmul.f32.gmra.mxu0 %v203
      %v481 = vpop.f32.mrf.mxu0
      %v482 = vadd.f32 %v323, %v481
      %483 = vmatmul.f32.gmra.mxu0 %v204
      %v484 = vpop.f32.mrf.mxu0
      %v485 = vadd.f32 %v323, %v484
      %486 = vmatmul.f32.gmra.mxu0 %v205
      %v487 = vpop.f32.mrf.mxu0
      %v488 = vadd.f32 %v323, %v487
      %489 = vdwg.mxu0
      %490 = vmatpush.msra.mxu0 %v287
      %491 = vmatpush.msra.mxu0 %v285
      %492 = vmatpush.msra.mxu0 %v283
      %493 = vmatpush.msra.mxu0 %v281
      %494 = vmatpush.msra.mxu0 %v279
      %495 = vmatpush.msra.mxu0 %v277
      %496 = vmatpush.msra.mxu0 %v275
      %497 = vmatpush.msra.mxu0 %v273
      %498 = vmatpush.msra.mxu0 %v271
      %499 = vmatpush.msra.mxu0 %v269
      %500 = vmatpush.msra.mxu0 %v267
      %501 = vmatpush.msra.mxu0 %v265
      %502 = vmatpush.msra.mxu0 %v263
      %503 = vmatpush.msra.mxu0 %v261
      %504 = vmatpush.msra.mxu0 %v259
      %505 = vmatpush.msra.mxu0 %v257
      %506 = vmatmul.f32.gmra.mxu0 %v207
      %v507 = vpop.f32.mrf.mxu0
      %v508 = vadd.f32 %v467, %v507
      %509 = vmatmul.f32.gmra.mxu0 %v208
      %v510 = vpop.f32.mrf.mxu0
      %v511 = vadd.f32 %v470, %v510
      %512 = vmatmul.f32.gmra.mxu0 %v209
      %v513 = vpop.f32.mrf.mxu0
      %v514 = vadd.f32 %v473, %v513
      %515 = vmatmul.f32.gmra.mxu0 %v210
      %v516 = vpop.f32.mrf.mxu0
      %v517 = vadd.f32 %v476, %v516
      %518 = vmatmul.f32.gmra.mxu0 %v211
      %v519 = vpop.f32.mrf.mxu0
      %v520 = vadd.f32 %v479, %v519
      %521 = vmatmul.f32.gmra.mxu0 %v212
      %v522 = vpop.f32.mrf.mxu0
      %v523 = vadd.f32 %v482, %v522
      %524 = vmatmul.f32.gmra.mxu0 %v213
      %v525 = vpop.f32.mrf.mxu0
      %v526 = vadd.f32 %v485, %v525
      %527 = vmatmul.f32.gmra.mxu0 %v214
      %v528 = vpop.f32.mrf.mxu0
      %v529 = vadd.f32 %v488, %v528
      %530 = vdwg.mxu0
      %531 = vmatpush.msra.mxu0 %v319
      %532 = vmatpush.msra.mxu0 %v317
      %533 = vmatpush.msra.mxu0 %v315
      %534 = vmatpush.msra.mxu0 %v313
      %535 = vmatpush.msra.mxu0 %v311
      %536 = vmatpush.msra.mxu0 %v309
      %537 = vmatpush.msra.mxu0 %v307
      %538 = vmatpush.msra.mxu0 %v305
      %539 = vmatpush.msra.mxu0 %v303
      %540 = vmatpush.msra.mxu0 %v301
      %541 = vmatpush.msra.mxu0 %v299
      %542 = vmatpush.msra.mxu0 %v297
      %543 = vmatpush.msra.mxu0 %v295
      %544 = vmatpush.msra.mxu0 %v293
      %545 = vmatpush.msra.mxu0 %v291
      %546 = vmatpush.msra.mxu0 %v289
      %547 = vmatmul.f32.gmra.mxu0 %v216
      %v548 = vpop.f32.mrf.mxu0
      %v549 = vadd.f32 %v508, %v548
      %550 = vmatmul.f32.gmra.mxu0 %v217
      %v551 = vpop.f32.mrf.mxu0
      %v552 = vadd.f32 %v511, %v551
      %553 = vmatmul.f32.gmra.mxu0 %v218
      %v554 = vpop.f32.mrf.mxu0
      %v555 = vadd.f32 %v514, %v554
      %556 = vmatmul.f32.gmra.mxu0 %v219
      %v557 = vpop.f32.mrf.mxu0
      %v558 = vadd.f32 %v517, %v557
      %559 = vmatmul.f32.gmra.mxu0 %v220
      %v560 = vpop.f32.mrf.mxu0
      %v561 = vadd.f32 %v520, %v560
      %562 = vmatmul.f32.gmra.mxu0 %v221
      %v563 = vpop.f32.mrf.mxu0
      %v564 = vadd.f32 %v523, %v563
      %565 = vmatmul.f32.gmra.mxu0 %v222
      %v566 = vpop.f32.mrf.mxu0
      %v567 = vadd.f32 %v526, %v566
      %568 = vmatmul.f32.gmra.mxu0 %v223
      %v569 = vpop.f32.mrf.mxu0
      %v570 = vadd.f32 %v529, %v569
      %571 = vdwg.mxu0
      %v572 = vmax.f32 %v426, 0.0
      %v573 = vmax.f32 %v429, 0.0
      %v574 = vmax.f32 %v432, 0.0
      %v575 = vmax.f32 %v435, 0.0
      %v576 = vmax.f32 %v438, 0.0
      %v577 = vmax.f32 %v441, 0.0
      %v578 = vmax.f32 %v444, 0.0
      %v579 = vmax.f32 %v447, 0.0
      %v588 = vrot.slane %v572, 7
      %v589 = vrot.slane %v573, 7
      %v590 = vrot.slane %v574, 7
      %v591 = vrot.slane %v575, 7
      %v592 = vrot.slane %v576, 7
      %v593 = vrot.slane %v577, 7
      %v594 = vrot.slane %v578, 7
      %v595 = vrot.slane %v579, 7
      %vm604 = vcmask 1040384
      %v605 = vsel %vm604, 0.0, %v588
      %v606 = vsel %vm604, 0.0, %v589
      %v607 = vsel %vm604, 0.0, %v590
      %v608 = vsel %vm604, 0.0, %v591
      %v609 = vsel %vm604, 0.0, %v592
      %v610 = vsel %vm604, 0.0, %v593
      %v611 = vsel %vm604, 0.0, %v594
      %v612 = vsel %vm604, 0.0, %v595
      %v613 = vrot.slane %v572, 1
      %v614 = vrot.slane %v573, 1
      %v615 = vrot.slane %v574, 1
      %v616 = vrot.slane %v575, 1
      %v617 = vrot.slane %v576, 1
      %v618 = vrot.slane %v577, 1
      %v619 = vrot.slane %v578, 1
      %v620 = vrot.slane %v579, 1
      %vm629 = vcmask 1046528
      %v630 = vsel %vm629, %v613, 0.0
      %v631 = vsel %vm629, %v614, 0.0
      %v632 = vsel %vm629, %v615, 0.0
      %v633 = vsel %vm629, %v616, 0.0
      %v634 = vsel %vm629, %v617, 0.0
      %v635 = vsel %vm629, %v618, 0.0
      %v636 = vsel %vm629, %v619, 0.0
      %v637 = vsel %vm629, %v620, 0.0
      %v638 = vld [vmem:[%s3] sm:$0xff]
      %v639 = vld [vmem:[%s3 + $0x8] sm:$0xff]
      %v640 = vld [vmem:[%s3 + $0x10] sm:$0xff]
      %v641 = vld [vmem:[%s3 + $0x18] sm:$0xff]
      %v642 = vld [vmem:[%s3 + $0x20] sm:$0xff]
      %v643 = vld [vmem:[%s3 + $0x28] sm:$0xff]
      %v644 = vld [vmem:[%s3 + $0x30] sm:$0xff]
      %v645 = vld [vmem:[%s3 + $0x38] sm:$0xff]
      %v646 = vld [vmem:[%s3 + $0x40] sm:$0xff]
      %v647 = vld [vmem:[%s3 + $0x48] sm:$0xff]
      %v648 = vld [vmem:[%s3 + $0x50] sm:$0xff]
      %v649 = vld [vmem:[%s3 + $0x58] sm:$0xff]
      %v650 = vld [vmem:[%s3 + $0x60] sm:$0xff]
      %v651 = vld [vmem:[%s3 + $0x68] sm:$0xff]
      %v652 = vld [vmem:[%s3 + $0x70] sm:$0xff]
      %v653 = vld [vmem:[%s3 + $0x78] sm:$0xff]
      %v654 = vld [vmem:[%s3 + $0x80] sm:$0xff]
      %v655 = vld [vmem:[%s3 + $0x88] sm:$0xff]
      %v656 = vld [vmem:[%s3 + $0x90] sm:$0xff]
      %v657 = vld [vmem:[%s3 + $0x98] sm:$0xff]
      %v658 = vld [vmem:[%s3 + $0xa0] sm:$0xff]
      %v659 = vld [vmem:[%s3 + $0xa8] sm:$0xff]
      %v660 = vld [vmem:[%s3 + $0xb0] sm:$0xff]
      %v661 = vld [vmem:[%s3 + $0xb8] sm:$0xff]
      %v662 = vld [vmem:[%s3 + $0xc0] sm:$0xff]
      %v663 = vld [vmem:[%s3 + $0xc8] sm:$0xff]
      %v664 = vld [vmem:[%s3 + $0xd0] sm:$0xff]
      %v665 = vld [vmem:[%s3 + $0xd8] sm:$0xff]
      %v666 = vld [vmem:[%s3 + $0xe0] sm:$0xff]
      %v667 = vld [vmem:[%s3 + $0xe8] sm:$0xff]
      %v668 = vld [vmem:[%s3 + $0xf0] sm:$0xff]
      %v669 = vld [vmem:[%s3 + $0xf8] sm:$0xff]
      %v670 = vld [vmem:[%s3 + $0x100] sm:$0xff]
      %v671 = vld [vmem:[%s3 + $0x108] sm:$0xff]
      %v672 = vld [vmem:[%s3 + $0x110] sm:$0xff]
      %v673 = vld [vmem:[%s3 + $0x118] sm:$0xff]
      %v674 = vld [vmem:[%s3 + $0x120] sm:$0xff]
      %v675 = vld [vmem:[%s3 + $0x128] sm:$0xff]
      %v676 = vld [vmem:[%s3 + $0x130] sm:$0xff]
      %v677 = vld [vmem:[%s3 + $0x138] sm:$0xff]
      %v678 = vld [vmem:[%s3 + $0x140] sm:$0xff]
      %v679 = vld [vmem:[%s3 + $0x148] sm:$0xff]
      %v680 = vld [vmem:[%s3 + $0x150] sm:$0xff]
      %v681 = vld [vmem:[%s3 + $0x158] sm:$0xff]
      %v682 = vld [vmem:[%s3 + $0x160] sm:$0xff]
      %v683 = vld [vmem:[%s3 + $0x168] sm:$0xff]
      %v684 = vld [vmem:[%s3 + $0x170] sm:$0xff]
      %v685 = vld [vmem:[%s3 + $0x178] sm:$0xff]
      %686 = vmatpush.msra.mxu0 %v653
      %687 = vmatpush.msra.mxu0 %v652
      %688 = vmatpush.msra.mxu0 %v651
      %689 = vmatpush.msra.mxu0 %v650
      %690 = vmatpush.msra.mxu0 %v649
      %691 = vmatpush.msra.mxu0 %v648
      %692 = vmatpush.msra.mxu0 %v647
      %693 = vmatpush.msra.mxu0 %v646
      %694 = vmatpush.msra.mxu0 %v645
      %695 = vmatpush.msra.mxu0 %v644
      %696 = vmatpush.msra.mxu0 %v643
      %697 = vmatpush.msra.mxu0 %v642
      %698 = vmatpush.msra.mxu0 %v641
      %699 = vmatpush.msra.mxu0 %v640
      %700 = vmatpush.msra.mxu0 %v639
      %701 = vmatpush.msra.mxu0 %v638
      %702 = vmatmul.f32.gmra.mxu0 0.0
      %v703 = vpop.f32.mrf.mxu0
      %v704 = vadd.f32 0.0, %v703
      %705 = vmatmul.f32.gmra.mxu0 %v605
      %v706 = vpop.f32.mrf.mxu0
      %v707 = vadd.f32 0.0, %v706
      %708 = vmatmul.f32.gmra.mxu0 %v606
      %v709 = vpop.f32.mrf.mxu0
      %v710 = vadd.f32 0.0, %v709
      %711 = vmatmul.f32.gmra.mxu0 %v607
      %v712 = vpop.f32.mrf.mxu0
      %v713 = vadd.f32 0.0, %v712
      %714 = vmatmul.f32.gmra.mxu0 %v608
      %v715 = vpop.f32.mrf.mxu0
      %v716 = vadd.f32 0.0, %v715
      %717 = vmatmul.f32.gmra.mxu0 %v609
      %v718 = vpop.f32.mrf.mxu0
      %v719 = vadd.f32 0.0, %v718
      %720 = vmatmul.f32.gmra.mxu0 %v610
      %v721 = vpop.f32.mrf.mxu0
      %v722 = vadd.f32 0.0, %v721
      %723 = vmatmul.f32.gmra.mxu0 %v611
      %v724 = vpop.f32.mrf.mxu0
      %v725 = vadd.f32 0.0, %v724
      %726 = vdwg.mxu0
      %727 = vmatpush.msra.mxu0 %v669
      %728 = vmatpush.msra.mxu0 %v668
      %729 = vmatpush.msra.mxu0 %v667
      %730 = vmatpush.msra.mxu0 %v666
      %731 = vmatpush.msra.mxu0 %v665
      %732 = vmatpush.msra.mxu0 %v664
      %733 = vmatpush.msra.mxu0 %v663
      %734 = vmatpush.msra.mxu0 %v662
      %735 = vmatpush.msra.mxu0 %v661
      %736 = vmatpush.msra.mxu0 %v660
      %737 = vmatpush.msra.mxu0 %v659
      %738 = vmatpush.msra.mxu0 %v658
      %739 = vmatpush.msra.mxu0 %v657
      %740 = vmatpush.msra.mxu0 %v656
      %741 = vmatpush.msra.mxu0 %v655
      %742 = vmatpush.msra.mxu0 %v654
      %743 = vmatmul.f32.gmra.mxu0 0.0
      %v744 = vpop.f32.mrf.mxu0
      %v745 = vadd.f32 %v704, %v744
      %746 = vmatmul.f32.gmra.mxu0 %v572
      %v747 = vpop.f32.mrf.mxu0
      %v748 = vadd.f32 %v707, %v747
      %749 = vmatmul.f32.gmra.mxu0 %v573
      %v750 = vpop.f32.mrf.mxu0
      %v751 = vadd.f32 %v710, %v750
      %752 = vmatmul.f32.gmra.mxu0 %v574
      %v753 = vpop.f32.mrf.mxu0
      %v754 = vadd.f32 %v713, %v753
      %755 = vmatmul.f32.gmra.mxu0 %v575
      %v756 = vpop.f32.mrf.mxu0
      %v757 = vadd.f32 %v716, %v756
      %758 = vmatmul.f32.gmra.mxu0 %v576
      %v759 = vpop.f32.mrf.mxu0
      %v760 = vadd.f32 %v719, %v759
      %761 = vmatmul.f32.gmra.mxu0 %v577
      %v762 = vpop.f32.mrf.mxu0
      %v763 = vadd.f32 %v722, %v762
      %764 = vmatmul.f32.gmra.mxu0 %v578
      %v765 = vpop.f32.mrf.mxu0
      %v766 = vadd.f32 %v725, %v765
      %767 = vdwg.mxu0
      %768 = vmatpush.msra.mxu0 %v685
      %769 = vmatpush.msra.mxu0 %v684
      %770 = vmatpush.msra.mxu0 %v683
      %771 = vmatpush.msra.mxu0 %v682
      %772 = vmatpush.msra.mxu0 %v681
      %773 = vmatpush.msra.mxu0 %v680
      %774 = vmatpush.msra.mxu0 %v679
      %775 = vmatpush.msra.mxu0 %v678
      %776 = vmatpush.msra.mxu0 %v677
      %777 = vmatpush.msra.mxu0 %v676
      %778 = vmatpush.msra.mxu0 %v675
      %779 = vmatpush.msra.mxu0 %v674
      %780 = vmatpush.msra.mxu0 %v673
      %781 = vmatpush.msra.mxu0 %v672
      %782 = vmatpush.msra.mxu0 %v671
      %783 = vmatpush.msra.mxu0 %v670
      %784 = vmatmul.f32.gmra.mxu0 0.0
      %v785 = vpop.f32.mrf.mxu0
      %v786 = vadd.f32 %v745, %v785
      %787 = vmatmul.f32.gmra.mxu0 %v630
      %v788 = vpop.f32.mrf.mxu0
      %v789 = vadd.f32 %v748, %v788
      %790 = vmatmul.f32.gmra.mxu0 %v631
      %v791 = vpop.f32.mrf.mxu0
      %v792 = vadd.f32 %v751, %v791
      %793 = vmatmul.f32.gmra.mxu0 %v632
      %v794 = vpop.f32.mrf.mxu0
      %v795 = vadd.f32 %v754, %v794
      %796 = vmatmul.f32.gmra.mxu0 %v633
      %v797 = vpop.f32.mrf.mxu0
      %v798 = vadd.f32 %v757, %v797
      %799 = vmatmul.f32.gmra.mxu0 %v634
      %v800 = vpop.f32.mrf.mxu0
      %v801 = vadd.f32 %v760, %v800
      %802 = vmatmul.f32.gmra.mxu0 %v635
      %v803 = vpop.f32.mrf.mxu0
      %v804 = vadd.f32 %v763, %v803
      %805 = vmatmul.f32.gmra.mxu0 %v636
      %v806 = vpop.f32.mrf.mxu0
      %v807 = vadd.f32 %v766, %v806
      %808 = vdwg.mxu0
      %v809 = vadd.f32 %v549, %v786
      %v810 = vadd.f32 %v552, %v789
      %v811 = vadd.f32 %v555, %v792
      %v812 = vadd.f32 %v558, %v795
      %v813 = vadd.f32 %v561, %v798
      %v814 = vadd.f32 %v564, %v801
      %v815 = vadd.f32 %v567, %v804
      %v816 = vadd.f32 %v570, %v807
      %s817 = scalar_lea.vmem %s3, 384
      %v818 = vld [vmem:[%s817] sm:$0xff]
      %v819 = vld [vmem:[%s817 + $0x8] sm:$0xff]
      %v820 = vld [vmem:[%s817 + $0x10] sm:$0xff]
      %v821 = vld [vmem:[%s817 + $0x18] sm:$0xff]
      %v822 = vld [vmem:[%s817 + $0x20] sm:$0xff]
      %v823 = vld [vmem:[%s817 + $0x28] sm:$0xff]
      %v824 = vld [vmem:[%s817 + $0x30] sm:$0xff]
      %v825 = vld [vmem:[%s817 + $0x38] sm:$0xff]
      %v826 = vld [vmem:[%s817 + $0x40] sm:$0xff]
      %v827 = vld [vmem:[%s817 + $0x48] sm:$0xff]
      %v828 = vld [vmem:[%s817 + $0x50] sm:$0xff]
      %v829 = vld [vmem:[%s817 + $0x58] sm:$0xff]
      %v830 = vld [vmem:[%s817 + $0x60] sm:$0xff]
      %v831 = vld [vmem:[%s817 + $0x68] sm:$0xff]
      %v832 = vld [vmem:[%s817 + $0x70] sm:$0xff]
      %v833 = vld [vmem:[%s817 + $0x78] sm:$0xff]
      %v834 = vld [vmem:[%s817 + $0x80] sm:$0xff]
      %v835 = vld [vmem:[%s817 + $0x88] sm:$0xff]
      %v836 = vld [vmem:[%s817 + $0x90] sm:$0xff]
      %v837 = vld [vmem:[%s817 + $0x98] sm:$0xff]
      %v838 = vld [vmem:[%s817 + $0xa0] sm:$0xff]
      %v839 = vld [vmem:[%s817 + $0xa8] sm:$0xff]
      %v840 = vld [vmem:[%s817 + $0xb0] sm:$0xff]
      %v841 = vld [vmem:[%s817 + $0xb8] sm:$0xff]
      %v842 = vld [vmem:[%s817 + $0xc0] sm:$0xff]
      %v843 = vld [vmem:[%s817 + $0xc8] sm:$0xff]
      %v844 = vld [vmem:[%s817 + $0xd0] sm:$0xff]
      %v845 = vld [vmem:[%s817 + $0xd8] sm:$0xff]
      %v846 = vld [vmem:[%s817 + $0xe0] sm:$0xff]
      %v847 = vld [vmem:[%s817 + $0xe8] sm:$0xff]
      %v848 = vld [vmem:[%s817 + $0xf0] sm:$0xff]
      %v849 = vld [vmem:[%s817 + $0xf8] sm:$0xff]
      %v850 = vld [vmem:[%s817 + $0x100] sm:$0xff]
      %v851 = vld [vmem:[%s817 + $0x108] sm:$0xff]
      %v852 = vld [vmem:[%s817 + $0x110] sm:$0xff]
      %v853 = vld [vmem:[%s817 + $0x118] sm:$0xff]
      %v854 = vld [vmem:[%s817 + $0x120] sm:$0xff]
      %v855 = vld [vmem:[%s817 + $0x128] sm:$0xff]
      %v856 = vld [vmem:[%s817 + $0x130] sm:$0xff]
      %v857 = vld [vmem:[%s817 + $0x138] sm:$0xff]
      %v858 = vld [vmem:[%s817 + $0x140] sm:$0xff]
      %v859 = vld [vmem:[%s817 + $0x148] sm:$0xff]
      %v860 = vld [vmem:[%s817 + $0x150] sm:$0xff]
      %v861 = vld [vmem:[%s817 + $0x158] sm:$0xff]
      %v862 = vld [vmem:[%s817 + $0x160] sm:$0xff]
      %v863 = vld [vmem:[%s817 + $0x168] sm:$0xff]
      %v864 = vld [vmem:[%s817 + $0x170] sm:$0xff]
      %v865 = vld [vmem:[%s817 + $0x178] sm:$0xff]
      %866 = vmatpush.msra.mxu0 %v833
      %867 = vmatpush.msra.mxu0 %v832
      %868 = vmatpush.msra.mxu0 %v831
      %869 = vmatpush.msra.mxu0 %v830
      %870 = vmatpush.msra.mxu0 %v829
      %871 = vmatpush.msra.mxu0 %v828
      %872 = vmatpush.msra.mxu0 %v827
      %873 = vmatpush.msra.mxu0 %v826
      %874 = vmatpush.msra.mxu0 %v825
      %875 = vmatpush.msra.mxu0 %v824
      %876 = vmatpush.msra.mxu0 %v823
      %877 = vmatpush.msra.mxu0 %v822
      %878 = vmatpush.msra.mxu0 %v821
      %879 = vmatpush.msra.mxu0 %v820
      %880 = vmatpush.msra.mxu0 %v819
      %881 = vmatpush.msra.mxu0 %v818
      %882 = vmatmul.f32.gmra.mxu0 %v605
      %v883 = vpop.f32.mrf.mxu0
      %v884 = vadd.f32 0.0, %v883
      %885 = vmatmul.f32.gmra.mxu0 %v606
      %v886 = vpop.f32.mrf.mxu0
      %v887 = vadd.f32 0.0, %v886
      %888 = vmatmul.f32.gmra.mxu0 %v607
      %v889 = vpop.f32.mrf.mxu0
      %v890 = vadd.f32 0.0, %v889
      %891 = vmatmul.f32.gmra.mxu0 %v608
      %v892 = vpop.f32.mrf.mxu0
      %v893 = vadd.f32 0.0, %v892
      %894 = vmatmul.f32.gmra.mxu0 %v609
      %v895 = vpop.f32.mrf.mxu0
      %v896 = vadd.f32 0.0, %v895
      %897 = vmatmul.f32.gmra.mxu0 %v610
      %v898 = vpop.f32.mrf.mxu0
      %v899 = vadd.f32 0.0, %v898
      %900 = vmatmul.f32.gmra.mxu0 %v611
      %v901 = vpop.f32.mrf.mxu0
      %v902 = vadd.f32 0.0, %v901
      %903 = vmatmul.f32.gmra.mxu0 %v612
      %v904 = vpop.f32.mrf.mxu0
      %v905 = vadd.f32 0.0, %v904
      %906 = vdwg.mxu0
      %907 = vmatpush.msra.mxu0 %v849
      %908 = vmatpush.msra.mxu0 %v848
      %909 = vmatpush.msra.mxu0 %v847
      %910 = vmatpush.msra.mxu0 %v846
      %911 = vmatpush.msra.mxu0 %v845
      %912 = vmatpush.msra.mxu0 %v844
      %913 = vmatpush.msra.mxu0 %v843
      %914 = vmatpush.msra.mxu0 %v842
      %915 = vmatpush.msra.mxu0 %v841
      %916 = vmatpush.msra.mxu0 %v840
      %917 = vmatpush.msra.mxu0 %v839
      %918 = vmatpush.msra.mxu0 %v838
      %919 = vmatpush.msra.mxu0 %v837
      %920 = vmatpush.msra.mxu0 %v836
      %921 = vmatpush.msra.mxu0 %v835
      %922 = vmatpush.msra.mxu0 %v834
      %923 = vmatmul.f32.gmra.mxu0 %v572
      %v924 = vpop.f32.mrf.mxu0
      %v925 = vadd.f32 %v884, %v924
      %926 = vmatmul.f32.gmra.mxu0 %v573
      %v927 = vpop.f32.mrf.mxu0
      %v928 = vadd.f32 %v887, %v927
      %929 = vmatmul.f32.gmra.mxu0 %v574
      %v930 = vpop.f32.mrf.mxu0
      %v931 = vadd.f32 %v890, %v930
      %932 = vmatmul.f32.gmra.mxu0 %v575
      %v933 = vpop.f32.mrf.mxu0
      %v934 = vadd.f32 %v893, %v933
      %935 = vmatmul.f32.gmra.mxu0 %v576
      %v936 = vpop.f32.mrf.mxu0
      %v937 = vadd.f32 %v896, %v936
      %938 = vmatmul.f32.gmra.mxu0 %v577
      %v939 = vpop.f32.mrf.mxu0
      %v940 = vadd.f32 %v899, %v939
      %941 = vmatmul.f32.gmra.mxu0 %v578
      %v942 = vpop.f32.mrf.mxu0
      %v943 = vadd.f32 %v902, %v942
      %944 = vmatmul.f32.gmra.mxu0 %v579
      %v945 = vpop.f32.mrf.mxu0
      %v946 = vadd.f32 %v905, %v945
      %947 = vdwg.mxu0
      %948 = vmatpush.msra.mxu0 %v865
      %949 = vmatpush.msra.mxu0 %v864
      %950 = vmatpush.msra.mxu0 %v863
      %951 = vmatpush.msra.mxu0 %v862
      %952 = vmatpush.msra.mxu0 %v861
      %953 = vmatpush.msra.mxu0 %v860
      %954 = vmatpush.msra.mxu0 %v859
      %955 = vmatpush.msra.mxu0 %v858
      %956 = vmatpush.msra.mxu0 %v857
      %957 = vmatpush.msra.mxu0 %v856
      %958 = vmatpush.msra.mxu0 %v855
      %959 = vmatpush.msra.mxu0 %v854
      %960 = vmatpush.msra.mxu0 %v853
      %961 = vmatpush.msra.mxu0 %v852
      %962 = vmatpush.msra.mxu0 %v851
      %963 = vmatpush.msra.mxu0 %v850
      %964 = vmatmul.f32.gmra.mxu0 %v630
      %v965 = vpop.f32.mrf.mxu0
      %v966 = vadd.f32 %v925, %v965
      %967 = vmatmul.f32.gmra.mxu0 %v631
      %v968 = vpop.f32.mrf.mxu0
      %v969 = vadd.f32 %v928, %v968
      %970 = vmatmul.f32.gmra.mxu0 %v632
      %v971 = vpop.f32.mrf.mxu0
      %v972 = vadd.f32 %v931, %v971
      %973 = vmatmul.f32.gmra.mxu0 %v633
      %v974 = vpop.f32.mrf.mxu0
      %v975 = vadd.f32 %v934, %v974
      %976 = vmatmul.f32.gmra.mxu0 %v634
      %v977 = vpop.f32.mrf.mxu0
      %v978 = vadd.f32 %v937, %v977
      %979 = vmatmul.f32.gmra.mxu0 %v635
      %v980 = vpop.f32.mrf.mxu0
      %v981 = vadd.f32 %v940, %v980
      %982 = vmatmul.f32.gmra.mxu0 %v636
      %v983 = vpop.f32.mrf.mxu0
      %v984 = vadd.f32 %v943, %v983
      %985 = vmatmul.f32.gmra.mxu0 %v637
      %v986 = vpop.f32.mrf.mxu0
      %v987 = vadd.f32 %v946, %v986
      %988 = vdwg.mxu0
      %v989 = vadd.f32 %v809, %v966
      %v990 = vadd.f32 %v810, %v969
      %v991 = vadd.f32 %v811, %v972
      %v992 = vadd.f32 %v812, %v975
      %v993 = vadd.f32 %v813, %v978
      %v994 = vadd.f32 %v814, %v981
      %v995 = vadd.f32 %v815, %v984
      %v996 = vadd.f32 %v816, %v987
      %s997 = scalar_lea.vmem %s3, 768
      %v998 = vld [vmem:[%s997] sm:$0xff]
      %v999 = vld [vmem:[%s997 + $0x8] sm:$0xff]
      %v1000 = vld [vmem:[%s997 + $0x10] sm:$0xff]
      %v1001 = vld [vmem:[%s997 + $0x18] sm:$0xff]
      %v1002 = vld [vmem:[%s997 + $0x20] sm:$0xff]
      %v1003 = vld [vmem:[%s997 + $0x28] sm:$0xff]
      %v1004 = vld [vmem:[%s997 + $0x30] sm:$0xff]
      %v1005 = vld [vmem:[%s997 + $0x38] sm:$0xff]
      %v1006 = vld [vmem:[%s997 + $0x40] sm:$0xff]
      %v1007 = vld [vmem:[%s997 + $0x48] sm:$0xff]
      %v1008 = vld [vmem:[%s997 + $0x50] sm:$0xff]
      %v1009 = vld [vmem:[%s997 + $0x58] sm:$0xff]
      %v1010 = vld [vmem:[%s997 + $0x60] sm:$0xff]
      %v1011 = vld [vmem:[%s997 + $0x68] sm:$0xff]
      %v1012 = vld [vmem:[%s997 + $0x70] sm:$0xff]
      %v1013 = vld [vmem:[%s997 + $0x78] sm:$0xff]
      %v1014 = vld [vmem:[%s997 + $0x80] sm:$0xff]
      %v1015 = vld [vmem:[%s997 + $0x88] sm:$0xff]
      %v1016 = vld [vmem:[%s997 + $0x90] sm:$0xff]
      %v1017 = vld [vmem:[%s997 + $0x98] sm:$0xff]
      %v1018 = vld [vmem:[%s997 + $0xa0] sm:$0xff]
      %v1019 = vld [vmem:[%s997 + $0xa8] sm:$0xff]
      %v1020 = vld [vmem:[%s997 + $0xb0] sm:$0xff]
      %v1021 = vld [vmem:[%s997 + $0xb8] sm:$0xff]
      %v1022 = vld [vmem:[%s997 + $0xc0] sm:$0xff]
      %v1023 = vld [vmem:[%s997 + $0xc8] sm:$0xff]
      %v1024 = vld [vmem:[%s997 + $0xd0] sm:$0xff]
      %v1025 = vld [vmem:[%s997 + $0xd8] sm:$0xff]
      %v1026 = vld [vmem:[%s997 + $0xe0] sm:$0xff]
      %v1027 = vld [vmem:[%s997 + $0xe8] sm:$0xff]
      %v1028 = vld [vmem:[%s997 + $0xf0] sm:$0xff]
      %v1029 = vld [vmem:[%s997 + $0xf8] sm:$0xff]
      %v1030 = vld [vmem:[%s997 + $0x100] sm:$0xff]
      %v1031 = vld [vmem:[%s997 + $0x108] sm:$0xff]
      %v1032 = vld [vmem:[%s997 + $0x110] sm:$0xff]
      %v1033 = vld [vmem:[%s997 + $0x118] sm:$0xff]
      %v1034 = vld [vmem:[%s997 + $0x120] sm:$0xff]
      %v1035 = vld [vmem:[%s997 + $0x128] sm:$0xff]
      %v1036 = vld [vmem:[%s997 + $0x130] sm:$0xff]
      %v1037 = vld [vmem:[%s997 + $0x138] sm:$0xff]
      %v1038 = vld [vmem:[%s997 + $0x140] sm:$0xff]
      %v1039 = vld [vmem:[%s997 + $0x148] sm:$0xff]
      %v1040 = vld [vmem:[%s997 + $0x150] sm:$0xff]
      %v1041 = vld [vmem:[%s997 + $0x158] sm:$0xff]
      %v1042 = vld [vmem:[%s997 + $0x160] sm:$0xff]
      %v1043 = vld [vmem:[%s997 + $0x168] sm:$0xff]
      %v1044 = vld [vmem:[%s997 + $0x170] sm:$0xff]
      %v1045 = vld [vmem:[%s997 + $0x178] sm:$0xff]
      %1046 = vmatpush.msra.mxu0 %v1013
      %1047 = vmatpush.msra.mxu0 %v1012
      %1048 = vmatpush.msra.mxu0 %v1011
      %1049 = vmatpush.msra.mxu0 %v1010
      %1050 = vmatpush.msra.mxu0 %v1009
      %1051 = vmatpush.msra.mxu0 %v1008
      %1052 = vmatpush.msra.mxu0 %v1007
      %1053 = vmatpush.msra.mxu0 %v1006
      %1054 = vmatpush.msra.mxu0 %v1005
      %1055 = vmatpush.msra.mxu0 %v1004
      %1056 = vmatpush.msra.mxu0 %v1003
      %1057 = vmatpush.msra.mxu0 %v1002
      %1058 = vmatpush.msra.mxu0 %v1001
      %1059 = vmatpush.msra.mxu0 %v1000
      %1060 = vmatpush.msra.mxu0 %v999
      %1061 = vmatpush.msra.mxu0 %v998
      %1062 = vmatmul.f32.gmra.mxu0 %v606
      %v1063 = vpop.f32.mrf.mxu0
      %v1064 = vadd.f32 0.0, %v1063
      %1065 = vmatmul.f32.gmra.mxu0 %v607
      %v1066 = vpop.f32.mrf.mxu0
      %v1067 = vadd.f32 0.0, %v1066
      %1068 = vmatmul.f32.gmra.mxu0 %v608
      %v1069 = vpop.f32.mrf.mxu0
      %v1070 = vadd.f32 0.0, %v1069
      %1071 = vmatmul.f32.gmra.mxu0 %v609
      %v1072 = vpop.f32.mrf.mxu0
      %v1073 = vadd.f32 0.0, %v1072
      %1074 = vmatmul.f32.gmra.mxu0 %v610
      %v1075 = vpop.f32.mrf.mxu0
      %v1076 = vadd.f32 0.0, %v1075
      %1077 = vmatmul.f32.gmra.mxu0 %v611
      %v1078 = vpop.f32.mrf.mxu0
      %v1079 = vadd.f32 0.0, %v1078
      %1080 = vmatmul.f32.gmra.mxu0 %v612
      %v1081 = vpop.f32.mrf.mxu0
      %v1082 = vadd.f32 0.0, %v1081
      %1083 = vmatmul.f32.gmra.mxu0 0.0
      %v1084 = vpop.f32.mrf.mxu0
      %v1085 = vadd.f32 0.0, %v1084
      %1086 = vdwg.mxu0
      %1087 = vmatpush.msra.mxu0 %v1029
      %1088 = vmatpush.msra.mxu0 %v1028
      %1089 = vmatpush.msra.mxu0 %v1027
      %1090 = vmatpush.msra.mxu0 %v1026
      %1091 = vmatpush.msra.mxu0 %v1025
      %1092 = vmatpush.msra.mxu0 %v1024
      %1093 = vmatpush.msra.mxu0 %v1023
      %1094 = vmatpush.msra.mxu0 %v1022
      %1095 = vmatpush.msra.mxu0 %v1021
      %1096 = vmatpush.msra.mxu0 %v1020
      %1097 = vmatpush.msra.mxu0 %v1019
      %1098 = vmatpush.msra.mxu0 %v1018
      %1099 = vmatpush.msra.mxu0 %v1017
      %1100 = vmatpush.msra.mxu0 %v1016
      %1101 = vmatpush.msra.mxu0 %v1015
      %1102 = vmatpush.msra.mxu0 %v1014
      %1103 = vmatmul.f32.gmra.mxu0 %v573
      %v1104 = vpop.f32.mrf.mxu0
      %v1105 = vadd.f32 %v1064, %v1104
      %1106 = vmatmul.f32.gmra.mxu0 %v574
      %v1107 = vpop.f32.mrf.mxu0
      %v1108 = vadd.f32 %v1067, %v1107
      %1109 = vmatmul.f32.gmra.mxu0 %v575
      %v1110 = vpop.f32.mrf.mxu0
      %v1111 = vadd.f32 %v1070, %v1110
      %1112 = vmatmul.f32.gmra.mxu0 %v576
      %v1113 = vpop.f32.mrf.mxu0
      %v1114 = vadd.f32 %v1073, %v1113
      %1115 = vmatmul.f32.gmra.mxu0 %v577
      %v1116 = vpop.f32.mrf.mxu0
      %v1117 = vadd.f32 %v1076, %v1116
      %1118 = vmatmul.f32.gmra.mxu0 %v578
      %v1119 = vpop.f32.mrf.mxu0
      %v1120 = vadd.f32 %v1079, %v1119
      %1121 = vmatmul.f32.gmra.mxu0 %v579
      %v1122 = vpop.f32.mrf.mxu0
      %v1123 = vadd.f32 %v1082, %v1122
      %1124 = vmatmul.f32.gmra.mxu0 0.0
      %v1125 = vpop.f32.mrf.mxu0
      %v1126 = vadd.f32 %v1085, %v1125
      %1127 = vdwg.mxu0
      %1128 = vmatpush.msra.mxu0 %v1045
      %1129 = vmatpush.msra.mxu0 %v1044
      %1130 = vmatpush.msra.mxu0 %v1043
      %1131 = vmatpush.msra.mxu0 %v1042
      %1132 = vmatpush.msra.mxu0 %v1041
      %1133 = vmatpush.msra.mxu0 %v1040
      %1134 = vmatpush.msra.mxu0 %v1039
      %1135 = vmatpush.msra.mxu0 %v1038
      %1136 = vmatpush.msra.mxu0 %v1037
      %1137 = vmatpush.msra.mxu0 %v1036
      %1138 = vmatpush.msra.mxu0 %v1035
      %1139 = vmatpush.msra.mxu0 %v1034
      %1140 = vmatpush.msra.mxu0 %v1033
      %1141 = vmatpush.msra.mxu0 %v1032
      %1142 = vmatpush.msra.mxu0 %v1031
      %1143 = vmatpush.msra.mxu0 %v1030
      %1144 = vmatmul.f32.gmra.mxu0 %v631
      %v1145 = vpop.f32.mrf.mxu0
      %v1146 = vadd.f32 %v1105, %v1145
      %1147 = vmatmul.f32.gmra.mxu0 %v632
      %v1148 = vpop.f32.mrf.mxu0
      %v1149 = vadd.f32 %v1108, %v1148
      %1150 = vmatmul.f32.gmra.mxu0 %v633
      %v1151 = vpop.f32.mrf.mxu0
      %v1152 = vadd.f32 %v1111, %v1151
      %1153 = vmatmul.f32.gmra.mxu0 %v634
      %v1154 = vpop.f32.mrf.mxu0
      %v1155 = vadd.f32 %v1114, %v1154
      %1156 = vmatmul.f32.gmra.mxu0 %v635
      %v1157 = vpop.f32.mrf.mxu0
      %v1158 = vadd.f32 %v1117, %v1157
      %1159 = vmatmul.f32.gmra.mxu0 %v636
      %v1160 = vpop.f32.mrf.mxu0
      %v1161 = vadd.f32 %v1120, %v1160
      %1162 = vmatmul.f32.gmra.mxu0 %v637
      %v1163 = vpop.f32.mrf.mxu0
      %v1164 = vadd.f32 %v1123, %v1163
      %1165 = vmatmul.f32.gmra.mxu0 0.0
      %v1166 = vpop.f32.mrf.mxu0
      %v1167 = vadd.f32 %v1126, %v1166
      %1168 = vdwg.mxu0
      %v1169 = vadd.f32 %v989, %v1146
      %v1170 = vadd.f32 %v990, %v1149
      %v1171 = vadd.f32 %v991, %v1152
      %v1172 = vadd.f32 %v992, %v1155
      %v1173 = vadd.f32 %v993, %v1158
      %v1174 = vadd.f32 %v994, %v1161
      %v1175 = vadd.f32 %v995, %v1164
      %v1176 = vadd.f32 %v996, %v1167
      %v1177 = vmax.f32 %v1169, 0.0
      %v1178 = vmax.f32 %v1170, 0.0
      %v1179 = vmax.f32 %v1171, 0.0
      %v1180 = vmax.f32 %v1172, 0.0
      %v1181 = vmax.f32 %v1173, 0.0
      %v1182 = vmax.f32 %v1174, 0.0
      %v1183 = vmax.f32 %v1175, 0.0
      %v1184 = vmax.f32 %v1176, 0.0
      %1185 = vst [vmem:[%s197] sm:$0xff] %v1177
      %1186 = vst [vmem:[%s197 + $0x8] sm:$0xff] %v1178
      %1187 = vst [vmem:[%s197 + $0x10] sm:$0xff] %v1179
      %1188 = vst [vmem:[%s197 + $0x18] sm:$0xff] %v1180
      %1189 = vst [vmem:[%s197 + $0x20] sm:$0xff] %v1181
      %1190 = vst [vmem:[%s197 + $0x28] sm:$0xff] %v1182
      %1191 = vst [vmem:[%s197 + $0x30] sm:$0xff] %v1183
      %1192 = vst [vmem:[%s197 + $0x38] sm:$0xff] %v1184
      %p1193 = scmp.lt.s32.totalorder %s15, 1
      %s1194 = scalar_select %p1193, %s15, 1
      %s1195 = smul.addr %s1194, 8
      %s1196 = smul.addr %s1195, 8
      %s1197 = scalar_lea.vmem %s4, %s1196
      // Predicated region
      $region37: #{run.3} parent=35 // pred_check
        %p1198 = pneg %p122
      $region38: #{run.3} parent=35 // pred_check_branch
        %1200 = sbr.rel (%p1198) target = $region40
      $region39: #{run.3} parent=35 // pred_region
        _
      $region40: #{run.3} parent=35 // pred_fallthru
        _
    $region36: #{run.3} parent=5 // pred_fallthru
      _
    %p1201 = scmp.le.s32.totalorder 2, %s10
    // Predicated region
    $region41: #{run.3} parent=5 // pred_check
      %p1202 = pneg %p1201
    $region42: #{run.3} parent=5 // pred_check_branch
      %1204 = sbr.rel (%p1202) target = $region44
    $region43: #{run.3} parent=5 // pred_region
      %s1205 = ssub.s32 %s10, 2
      // Predicated region
      $region45: #{run.3} parent=43 // pred_check
        %p1206 = pneg %p128
      $region46: #{run.3} parent=43 // pred_check_branch
        %1208 = sbr.rel (%p1206) target = $region48
      $region47: #{run.3} parent=43 // pred_region
        %p1209 = scmp.lt.s32.totalorder %s16, 1
        %s1210 = scalar_select %p1209, %s16, 1
        %s1211 = smul.addr %s1210, 8
        %s1212 = smul.addr %s1211, 8
        %s1213 = scalar_lea.vmem %s4, %s1212
      $region48: #{run.3} parent=43 // pred_fallthru
        _
    $region44: #{run.3} parent=5 // pred_fallthru
      _
  $region6: #{run.3} parent=0 // loop_footer
    %s14 = sadd.s32 1, %s10
  $region7: #{run.3} parent=0 // loop_footer_branch
    %9 = sbr.rel target = $region3
  $region8: #{run.3} parent=0 // loop_exit
    _

</llo_original>
